<compile_context>
chip_gen: v7x
topology: tpu7x:2x2x1
jax: 0.10.0
libtpu: 0.0.40
codegen_flags: <defaults>
</compile_context>

<pallas_src>
import jax
import jax.numpy as jnp
from jax.experimental import pallas as pl
from jax.experimental.pallas import tpu as pltpu

# ---------------------------------------------------------------------------
# Problem sizes (small, consistent with the module)
# ---------------------------------------------------------------------------
B = 2            # batch
C_IN = 4         # input image channels
H = W = 16       # spatial
HW = H * W
IN_FEATURES = 512    # backbone.fc.in_features (ResNet18-like)
HIDDEN = 1024        # embedding head hidden width
EMB = 256            # embedding_size
TN = 256             # HIDDEN tile streamed per grid step
NT = HIDDEN // TN    # grid size (reduction axis)
BN_EPS = 1e-5
L2_EPS = 1e-12       # F.normalize clamp


# ---------------------------------------------------------------------------
# Fused kernel: backbone stand-in + embedding head + L2 normalize
# ---------------------------------------------------------------------------
def fused_kernel(alpha_ref,   # SMEM (1, 1)           PReLU scalar
                 x_ref,       # VMEM (B, C_IN, HW)    f32 (lane-dense, HW=256)
                 bbw_ref,     # VMEM (C_IN, F)        f32 backbone 1x1 conv weight
                 bbb_ref,     # VMEM (1, F)           f32 backbone bias
                 w1_ref,      # VMEM (F, TN)          int8 Linear1 tile (BN folded)
                 s1_ref,      # VMEM (1, TN)          f32 per-col dequant scale
                 b1_ref,      # VMEM (1, TN)          f32 Linear1 bias (BN folded)
                 w2_ref,      # VMEM (TN, EMB)        int8 Linear2 tile
                 s2_ref,      # VMEM (1, EMB)         f32 per-col dequant scale
                 b2_ref,      # VMEM (1, EMB)         f32 Linear2 bias
                 out_ref,     # VMEM (B, EMB)         f32
                 feats_ref,   # VMEM scratch (B, F)   f32
                 acc_ref):    # VMEM scratch (B, EMB) f32
    j = pl.program_id(0)

    # ---- step 0: backbone stand-in (1x1 conv -> ReLU -> global avg pool) --
    @pl.when(j == 0)
    def _():
        x = x_ref[...]                                    # (B, C_IN, HW)
        bbw = bbw_ref[...]                                # (C_IN, F)
        h = jnp.zeros((B, HW, IN_FEATURES), jnp.float32)
        for c in range(C_IN):                             # 4 VPU broadcast-FMAs
            h = h + x[:, c, :][:, :, None] * bbw[c, :][None, None, :]
        h = jnp.maximum(h + bbb_ref[...], 0.0)            # conv bias + ReLU
        feats_ref[...] = jnp.sum(h, axis=1) * (1.0 / HW)  # GAP -> (B, F)
        acc_ref[...] = jnp.zeros_like(acc_ref)

    # ---- every step: one HIDDEN tile of the embedding head ---------------
    feats16 = feats_ref[...].astype(jnp.bfloat16)
    w1 = w1_ref[...].astype(jnp.float32).astype(jnp.bfloat16)   # int8 -> bf16 (VPU)
    h1 = jnp.dot(feats16, w1, preferred_element_type=jnp.float32)
    h1 = h1 * s1_ref[...] + b1_ref[...]                   # dequant + (BN-folded) bias
    alpha = alpha_ref[0, 0]                               # PReLU (single param)
    h1 = jnp.where(h1 > 0, h1, alpha * h1)
    # Dropout(p=0.3): identity at inference.
    w2 = w2_ref[...].astype(jnp.float32).astype(jnp.bfloat16)
    acc_ref[...] += jnp.dot(h1.astype(jnp.bfloat16), w2,
                            preferred_element_type=jnp.float32)

    # ---- last step: dequant Linear2, add bias, L2 normalize ---------------
    @pl.when(j == pl.num_programs(0) - 1)
    def _():
        e = acc_ref[...] * s2_ref[...] + b2_ref[...]      # per-col w2 scale + bias
        sumsq = jnp.sum(e * e, axis=1, keepdims=True)
        inv = jax.lax.rsqrt(jnp.maximum(sumsq, L2_EPS * L2_EPS))   # EUP
        out_ref[...] = e * inv


# Advisory cost estimate (helps XLA schedule around this DMA-bound call).
_FLOPS = (2 * B * HW * C_IN * IN_FEATURES
          + 2 * B * IN_FEATURES * HIDDEN
          + 2 * B * HIDDEN * EMB)
_BYTES = (B * C_IN * HW * 4 + C_IN * IN_FEATURES * 4 + IN_FEATURES * 4
          + IN_FEATURES * HIDDEN * 1 + HIDDEN * 8      # int8 w1 + f32 s1/b1
          + HIDDEN * EMB * 1 + EMB * 8 + EMB * 4       # int8 w2 + f32 s2/b2
          + B * EMB * 4 + 4)


def face_verification_forward(x_nchw, folded):
    # NCHW -> (B, C, H*W): free reshape; last dim 256 is lane-dense.
    x3 = x_nchw.reshape(B, C_IN, HW)
    smem = pltpu.MemorySpace.SMEM
    grid_spec = pltpu.PrefetchScalarGridSpec(
        num_scalar_prefetch=0,
        grid=(NT,),
        in_specs=[
            pl.BlockSpec((1, 1), lambda j: (0, 0), memory_space=smem),  # prelu alpha
            pl.BlockSpec((B, C_IN, HW), lambda j: (0, 0, 0)),           # x
            pl.BlockSpec((C_IN, IN_FEATURES), lambda j: (0, 0)),        # bb_w
            pl.BlockSpec((1, IN_FEATURES), lambda j: (0, 0)),           # bb_b
            pl.BlockSpec((IN_FEATURES, TN), lambda j: (0, j)),          # w1 tile (i8)
            pl.BlockSpec((1, TN), lambda j: (0, j)),                    # s1 tile
            pl.BlockSpec((1, TN), lambda j: (0, j)),                    # b1 tile
            pl.BlockSpec((TN, EMB), lambda j: (j, 0)),                  # w2 tile (i8)
            pl.BlockSpec((1, EMB), lambda j: (0, 0)),                   # s2
            pl.BlockSpec((1, EMB), lambda j: (0, 0)),                   # b2
        ],
        out_specs=pl.BlockSpec((B, EMB), lambda j: (0, 0)),
        scratch_shapes=[
            pltpu.VMEM((B, IN_FEATURES), jnp.float32),   # feats (resident)
            pltpu.VMEM((B, EMB), jnp.float32),           # Linear2 f32 accumulator
        ],
    )
    return pl.pallas_call(
        fused_kernel,
        out_shape=jax.ShapeDtypeStruct((B, EMB), jnp.float32),
        grid_spec=grid_spec,
        compiler_params=pltpu.CompilerParams(
            dimension_semantics=("arbitrary",)),          # reduction over HIDDEN tiles
        cost_estimate=pl.CostEstimate(flops=_FLOPS, transcendentals=B,
                                      bytes_accessed=_BYTES),
    )(folded["prelu_a"], x3,
      folded["bb_w"], folded["bb_b"],
      folded["w1_q"], folded["s1"], folded["b1"],
      folded["w2_q"], folded["s2"], folded["b2"])


# ---------------------------------------------------------------------------
# Parameters (PyTorch-like) and host-side folding / quantization
# ---------------------------------------------------------------------------
def init_params(key):
    ks = jax.random.split(key, 10)
    return {
        # backbone stand-in (1x1 conv)
        "bb_w": 0.1 * jax.random.normal(ks[0], (C_IN, IN_FEATURES), jnp.float32),
        "bb_b": 0.1 * jax.random.normal(ks[1], (1, IN_FEATURES), jnp.float32),
        # embedding head
        "w1": 0.05 * jax.random.normal(ks[2], (IN_FEATURES, HIDDEN), jnp.float32),
        "b1": 0.05 * jax.random.normal(ks[3], (1, HIDDEN), jnp.float32),
        "bn_gamma": 1.0 + 0.1 * jax.random.normal(ks[4], (1, HIDDEN), jnp.float32),
        "bn_beta": 0.1 * jax.random.normal(ks[5], (1, HIDDEN), jnp.float32),
        "bn_mean": 0.1 * jax.random.normal(ks[6], (1, HIDDEN), jnp.float32),
        "bn_var": 0.5 + jax.random.uniform(ks[7], (1, HIDDEN), jnp.float32),
        "prelu_a": jnp.full((1, 1), 0.25, jnp.float32),  # PyTorch PReLU default init
        "w2": 0.05 * jax.random.normal(ks[8], (HIDDEN, EMB), jnp.float32),
        "b2": 0.05 * jax.random.normal(ks[9], (1, EMB), jnp.float32),
    }


def _quantize_int8_per_col(w):
    """Symmetric per-output-channel int8 quantization; dequant in f32 epilogue."""
    s = jnp.max(jnp.abs(w), axis=0, keepdims=True) / 127.0
    s = jnp.maximum(s, 1e-8)
    q = jnp.clip(jnp.round(w / s), -127.0, 127.0).astype(jnp.int8)
    return q, s.astype(jnp.float32)


def fold_params(p):
    """One-time host prep: fold eval-mode BN into w1/b1, quantize the two big
    weight matrices to int8 with per-output-channel scales."""
    bn_scale = p["bn_gamma"] / jnp.sqrt(p["bn_var"] + BN_EPS)         # (1, HIDDEN)
    w1_folded = p["w1"] * bn_scale                                    # cols scaled
    b1_folded = (p["b1"] - p["bn_mean"]) * bn_scale + p["bn_beta"]    # f32
    w1_q, s1 = _quantize_int8_per_col(w1_folded)
    w2_q, s2 = _quantize_int8_per_col(p["w2"])
    return {
        "prelu_a": p["prelu_a"],
        "bb_w": p["bb_w"],
        "bb_b": p["bb_b"],
        "w1_q": w1_q, "s1": s1, "b1": b1_folded,
        "w2_q": w2_q, "s2": s2, "b2": p["b2"],
    }


if __name__ == "__main__":
    key = jax.random.PRNGKey(0)
    k_x, k_p = jax.random.split(key)
    x = jax.random.normal(k_x, (B, C_IN, H, W), jnp.float32)   # NCHW like PyTorch
    params = init_params(k_p)
    folded = fold_params(params)   # host-side, one-time

    fwd = jax.jit(face_verification_forward)
    out = jax.block_until_ready(fwd(x, folded))

    assert out.shape == (B, EMB), out.shape
    # embeddings must be unit-norm along dim=1
    norms = jnp.linalg.norm(out, axis=1)
    assert bool(jnp.all(jnp.abs(norms - 1.0) < 1e-3)), norms

    print("KERNEL_OK")
</pallas_src>

<mosaic_0001>
module attributes {stable_mosaic.version = 11 : i64} {
  func.func @fused_kernel(%arg0: i32, %arg1: memref<1x1xf32, #tpu.memory_space<smem>>, %arg2: memref<2x4x256xf32, #tpu.memory_space<vmem>>, %arg3: memref<4x512xf32, #tpu.memory_space<vmem>>, %arg4: memref<1x512xf32, #tpu.memory_space<vmem>>, %arg5: memref<512x256xi8, #tpu.memory_space<vmem>>, %arg6: memref<1x256xf32, #tpu.memory_space<vmem>>, %arg7: memref<1x256xf32, #tpu.memory_space<vmem>>, %arg8: memref<256x256xi8, #tpu.memory_space<vmem>>, %arg9: memref<1x256xf32, #tpu.memory_space<vmem>>, %arg10: memref<1x256xf32, #tpu.memory_space<vmem>>, %arg11: memref<2x256xf32, #tpu.memory_space<vmem>>, %arg12: memref<2x512xf32, #tpu.memory_space<vmem>>, %arg13: memref<2x256xf32, #tpu.memory_space<vmem>>) attributes {dimension_semantics = [#tpu.dimension_semantics<arbitrary>], iteration_bounds = array<i64: 4>, scalar_prefetch = 0 : i64, scratch_operands = 2 : i64, tpu.core_type = #tpu.core_type<tc>, window_params = [{transform_indices = @transform_0, window_bounds = array<i64: 1, 1>}, {pipeline_mode = #tpu.pipeline_mode<synchronous>, transform_indices = @transform_1, window_bounds = array<i64: 2, 4, 256>}, {pipeline_mode = #tpu.pipeline_mode<synchronous>, transform_indices = @transform_2, window_bounds = array<i64: 4, 512>}, {pipeline_mode = #tpu.pipeline_mode<synchronous>, transform_indices = @transform_3, window_bounds = array<i64: 1, 512>}, {transform_indices = @transform_4, window_bounds = array<i64: 512, 256>}, {transform_indices = @transform_5, window_bounds = array<i64: 1, 256>}, {transform_indices = @transform_6, window_bounds = array<i64: 1, 256>}, {transform_indices = @transform_7, window_bounds = array<i64: 256, 256>}, {pipeline_mode = #tpu.pipeline_mode<synchronous>, transform_indices = @transform_8, window_bounds = array<i64: 1, 256>}, {pipeline_mode = #tpu.pipeline_mode<synchronous>, transform_indices = @transform_9, window_bounds = array<i64: 1, 256>}, {pipeline_mode = #tpu.pipeline_mode<synchronous>, transform_indices = @transform_10, window_bounds = array<i64: 2, 256>}]} {
    %c0_i32 = arith.constant 0 : i32
    %0 = arith.cmpi eq, %arg0, %c0_i32 : i32
    %1 = arith.extui %0 : i1 to i32
    %c0_i32_0 = arith.constant 0 : i32
    %2 = arith.cmpi ne, %1, %c0_i32_0 : i32
    scf.if %2 {
      %c0_19 = arith.constant 0 : index
      %c0_20 = arith.constant 0 : index
      %c0_21 = arith.constant 0 : index
      %32 = vector.load %arg2[%c0_19, %c0_20, %c0_21] : memref<2x4x256xf32, #tpu.memory_space<vmem>>, vector<2x4x256xf32>
      %c0_22 = arith.constant 0 : index
      %c0_23 = arith.constant 0 : index
      %33 = vector.load %arg3[%c0_22, %c0_23] : memref<4x512xf32, #tpu.memory_space<vmem>>, vector<4x512xf32>
      %cst_24 = arith.constant 0.000000e+00 : f32
      %34 = vector.broadcast %cst_24 : f32 to vector<2x256x512xf32>
      %35 = vector.extract_strided_slice %32 {offsets = [0, 0, 0], sizes = [2, 1, 256], strides = [1, 1, 1]} : vector<2x4x256xf32> to vector<2x1x256xf32>
      %36 = vector.shape_cast %35 : vector<2x1x256xf32> to vector<2x256xf32>
      %37 = vector.shape_cast %36 : vector<2x256xf32> to vector<2x256x1xf32>
      %38 = vector.extract_strided_slice %33 {offsets = [0, 0], sizes = [1, 512], strides = [1, 1]} : vector<4x512xf32> to vector<1x512xf32>
      %39 = vector.shape_cast %38 : vector<1x512xf32> to vector<512xf32>
      %40 = vector.shape_cast %39 : vector<512xf32> to vector<1x1x512xf32>
      %41 = vector.broadcast %37 : vector<2x256x1xf32> to vector<2x256x512xf32>
      %42 = vector.broadcast %40 : vector<1x1x512xf32> to vector<2x256x512xf32>
      %43 = arith.mulf %41, %42 : vector<2x256x512xf32>
      %44 = arith.addf %34, %43 : vector<2x256x512xf32>
      %45 = vector.extract_strided_slice %32 {offsets = [0, 1, 0], sizes = [2, 1, 256], strides = [1, 1, 1]} : vector<2x4x256xf32> to vector<2x1x256xf32>
      %46 = vector.shape_cast %45 : vector<2x1x256xf32> to vector<2x256xf32>
      %47 = vector.shape_cast %46 : vector<2x256xf32> to vector<2x256x1xf32>
      %48 = vector.extract_strided_slice %33 {offsets = [1, 0], sizes = [1, 512], strides = [1, 1]} : vector<4x512xf32> to vector<1x512xf32>
      %49 = vector.shape_cast %48 : vector<1x512xf32> to vector<512xf32>
      %50 = vector.shape_cast %49 : vector<512xf32> to vector<1x1x512xf32>
      %51 = vector.broadcast %47 : vector<2x256x1xf32> to vector<2x256x512xf32>
      %52 = vector.broadcast %50 : vector<1x1x512xf32> to vector<2x256x512xf32>
      %53 = arith.mulf %51, %52 : vector<2x256x512xf32>
      %54 = arith.addf %44, %53 : vector<2x256x512xf32>
      %55 = vector.extract_strided_slice %32 {offsets = [0, 2, 0], sizes = [2, 1, 256], strides = [1, 1, 1]} : vector<2x4x256xf32> to vector<2x1x256xf32>
      %56 = vector.shape_cast %55 : vector<2x1x256xf32> to vector<2x256xf32>
      %57 = vector.shape_cast %56 : vector<2x256xf32> to vector<2x256x1xf32>
      %58 = vector.extract_strided_slice %33 {offsets = [2, 0], sizes = [1, 512], strides = [1, 1]} : vector<4x512xf32> to vector<1x512xf32>
      %59 = vector.shape_cast %58 : vector<1x512xf32> to vector<512xf32>
      %60 = vector.shape_cast %59 : vector<512xf32> to vector<1x1x512xf32>
      %61 = vector.broadcast %57 : vector<2x256x1xf32> to vector<2x256x512xf32>
      %62 = vector.broadcast %60 : vector<1x1x512xf32> to vector<2x256x512xf32>
      %63 = arith.mulf %61, %62 : vector<2x256x512xf32>
      %64 = arith.addf %54, %63 : vector<2x256x512xf32>
      %65 = vector.extract_strided_slice %32 {offsets = [0, 3, 0], sizes = [2, 1, 256], strides = [1, 1, 1]} : vector<2x4x256xf32> to vector<2x1x256xf32>
      %66 = vector.shape_cast %65 : vector<2x1x256xf32> to vector<2x256xf32>
      %67 = vector.shape_cast %66 : vector<2x256xf32> to vector<2x256x1xf32>
      %68 = vector.extract_strided_slice %33 {offsets = [3, 0], sizes = [1, 512], strides = [1, 1]} : vector<4x512xf32> to vector<1x512xf32>
      %69 = vector.shape_cast %68 : vector<1x512xf32> to vector<512xf32>
      %70 = vector.shape_cast %69 : vector<512xf32> to vector<1x1x512xf32>
      %71 = vector.broadcast %67 : vector<2x256x1xf32> to vector<2x256x512xf32>
      %72 = vector.broadcast %70 : vector<1x1x512xf32> to vector<2x256x512xf32>
      %73 = arith.mulf %71, %72 : vector<2x256x512xf32>
      %74 = arith.addf %64, %73 : vector<2x256x512xf32>
      %c0_25 = arith.constant 0 : index
      %c0_26 = arith.constant 0 : index
      %75 = vector.load %arg4[%c0_25, %c0_26] : memref<1x512xf32, #tpu.memory_space<vmem>>, vector<1x512xf32>
      %76 = vector.shape_cast %75 : vector<1x512xf32> to vector<1x1x512xf32>
      %77 = vector.broadcast %76 : vector<1x1x512xf32> to vector<2x256x512xf32>
      %78 = arith.addf %74, %77 : vector<2x256x512xf32>
      %cst_27 = arith.constant 0.000000e+00 : f32
      %79 = vector.broadcast %cst_27 : f32 to vector<2x256x512xf32>
      %80 = arith.maximumf %78, %79 : vector<2x256x512xf32>
      %cst_28 = arith.constant dense<0.000000e+00> : vector<2x512xf32>
      %81 = vector.multi_reduction <add>, %80, %cst_28 [1] : vector<2x256x512xf32> to vector<2x512xf32>
      %cst_29 = arith.constant 3.906250e-03 : f32
      %82 = vector.broadcast %cst_29 : f32 to vector<2x512xf32>
      %83 = arith.mulf %81, %82 : vector<2x512xf32>
      %c0_30 = arith.constant 0 : index
      %c0_31 = arith.constant 0 : index
      %84 = vector.load %arg12[%c0_30, %c0_31] : memref<2x512xf32, #tpu.memory_space<vmem>>, vector<2x512xf32>
      tpu.vector_store %arg12[%c0_30, %c0_31], %83 {strides = array<i32>} : memref<2x512xf32, #tpu.memory_space<vmem>>, vector<2x512xf32>,
      %cst_32 = arith.constant 0.000000e+00 : f32
      %85 = vector.broadcast %cst_32 : f32 to vector<2x256xf32>
      %c0_33 = arith.constant 0 : index
      %c0_34 = arith.constant 0 : index
      %86 = vector.load %arg13[%c0_33, %c0_34] : memref<2x256xf32, #tpu.memory_space<vmem>>, vector<2x256xf32>
      tpu.vector_store %arg13[%c0_33, %c0_34], %85 {strides = array<i32>} : memref<2x256xf32, #tpu.memory_space<vmem>>, vector<2x256xf32>,
    } else {
    }
    %c0 = arith.constant 0 : index
    %c0_1 = arith.constant 0 : index
    %3 = vector.load %arg12[%c0, %c0_1] : memref<2x512xf32, #tpu.memory_space<vmem>>, vector<2x512xf32>
    %4 = arith.truncf %3 : vector<2x512xf32> to vector<2x512xbf16>
    %c0_2 = arith.constant 0 : index
    %c0_3 = arith.constant 0 : index
    %5 = vector.load %arg5[%c0_2, %c0_3] : memref<512x256xi8, #tpu.memory_space<vmem>>, vector<512x256xi8>
    %6 = arith.sitofp %5 : vector<512x256xi8> to vector<512x256xf32>
    %7 = arith.truncf %6 : vector<512x256xf32> to vector<512x256xbf16>
    %cst = arith.constant dense<0.000000e+00> : vector<2x256xf32>
    %8 = tpu.matmul %4, %7, %cst {dimension_numbers = #tpu.dot_dimension_numbers<[1], [0], [0], [1], [0, 0, 1, 1], [], []>} : vector<2x512xbf16>, vector<512x256xbf16>, vector<2x256xf32> -> vector<2x256xf32>
    %c0_4 = arith.constant 0 : index
    %c0_5 = arith.constant 0 : index
    %9 = vector.load %arg6[%c0_4, %c0_5] : memref<1x256xf32, #tpu.memory_space<vmem>>, vector<1x256xf32>
    %10 = vector.broadcast %9 : vector<1x256xf32> to vector<2x256xf32>
    %11 = arith.mulf %8, %10 : vector<2x256xf32>
    %c0_6 = arith.constant 0 : index
    %c0_7 = arith.constant 0 : index
    %12 = vector.load %arg7[%c0_6, %c0_7] : memref<1x256xf32, #tpu.memory_space<vmem>>, vector<1x256xf32>
    %13 = vector.broadcast %12 : vector<1x256xf32> to vector<2x256xf32>
    %14 = arith.addf %11, %13 : vector<2x256xf32>
    %c0_8 = arith.constant 0 : index
    %c0_9 = arith.constant 0 : index
    %15 = memref.load %arg1[%c0_8, %c0_9] : memref<1x1xf32, #tpu.memory_space<smem>>
    %cst_10 = arith.constant 0.000000e+00 : f32
    %16 = vector.broadcast %cst_10 : f32 to vector<2x256xf32>
    %17 = arith.cmpf ogt, %14, %16 : vector<2x256xf32>
    %18 = vector.broadcast %15 : f32 to vector<2x256xf32>
    %19 = arith.mulf %18, %14 : vector<2x256xf32>
    %20 = arith.select %17, %14, %19 : vector<2x256xi1>, vector<2x256xf32>
    %c0_11 = arith.constant 0 : index
    %c0_12 = arith.constant 0 : index
    %21 = vector.load %arg8[%c0_11, %c0_12] : memref<256x256xi8, #tpu.memory_space<vmem>>, vector<256x256xi8>
    %22 = arith.sitofp %21 : vector<256x256xi8> to vector<256x256xf32>
    %23 = arith.truncf %22 : vector<256x256xf32> to vector<256x256xbf16>
    %c0_13 = arith.constant 0 : index
    %c0_14 = arith.constant 0 : index
    %24 = vector.load %arg13[%c0_13, %c0_14] : memref<2x256xf32, #tpu.memory_space<vmem>>, vector<2x256xf32>
    %25 = arith.truncf %20 : vector<2x256xf32> to vector<2x256xbf16>
    %cst_15 = arith.constant dense<0.000000e+00> : vector<2x256xf32>
    %26 = tpu.matmul %25, %23, %cst_15 {dimension_numbers = #tpu.dot_dimension_numbers<[1], [0], [0], [1], [0, 0, 1, 1], [], []>} : vector<2x256xbf16>, vector<256x256xbf16>, vector<2x256xf32> -> vector<2x256xf32>
    %27 = arith.addf %24, %26 : vector<2x256xf32>
    %c0_16 = arith.constant 0 : index
    %c0_17 = arith.constant 0 : index
    %28 = vector.load %arg13[%c0_16, %c0_17] : memref<2x256xf32, #tpu.memory_space<vmem>>, vector<2x256xf32>
    tpu.vector_store %arg13[%c0_16, %c0_17], %27 {strides = array<i32>} : memref<2x256xf32, #tpu.memory_space<vmem>>, vector<2x256xf32>,
    %c3_i32 = arith.constant 3 : i32
    %29 = arith.cmpi eq, %arg0, %c3_i32 : i32
    %30 = arith.extui %29 : i1 to i32
    %c0_i32_18 = arith.constant 0 : i32
    %31 = arith.cmpi ne, %30, %c0_i32_18 : i32
    scf.if %31 {
      %c0_19 = arith.constant 0 : index
      %c0_20 = arith.constant 0 : index
      %32 = vector.load %arg13[%c0_19, %c0_20] : memref<2x256xf32, #tpu.memory_space<vmem>>, vector<2x256xf32>
      %c0_21 = arith.constant 0 : index
      %c0_22 = arith.constant 0 : index
      %33 = vector.load %arg9[%c0_21, %c0_22] : memref<1x256xf32, #tpu.memory_space<vmem>>, vector<1x256xf32>
      %34 = vector.broadcast %33 : vector<1x256xf32> to vector<2x256xf32>
      %35 = arith.mulf %32, %34 : vector<2x256xf32>
      %c0_23 = arith.constant 0 : index
      %c0_24 = arith.constant 0 : index
      %36 = vector.load %arg10[%c0_23, %c0_24] : memref<1x256xf32, #tpu.memory_space<vmem>>, vector<1x256xf32>
      %37 = vector.broadcast %36 : vector<1x256xf32> to vector<2x256xf32>
      %38 = arith.addf %35, %37 : vector<2x256xf32>
      %39 = arith.mulf %38, %38 : vector<2x256xf32>
      %cst_25 = arith.constant dense<0.000000e+00> : vector<2xf32>
      %40 = vector.multi_reduction <add>, %39, %cst_25 [1] : vector<2x256xf32> to vector<2xf32>
      %41 = vector.shape_cast %40 : vector<2xf32> to vector<2x1xf32>
      %cst_26 = arith.constant 1.000000e-24 : f32
      %42 = vector.broadcast %cst_26 : f32 to vector<2x1xf32>
      %43 = arith.maximumf %41, %42 : vector<2x1xf32>
      %44 = math.rsqrt %43 : vector<2x1xf32>
      %45 = vector.broadcast %44 : vector<2x1xf32> to vector<2x256xf32>
      %46 = arith.mulf %38, %45 : vector<2x256xf32>
      %c0_27 = arith.constant 0 : index
      %c0_28 = arith.constant 0 : index
      %47 = vector.load %arg11[%c0_27, %c0_28] : memref<2x256xf32, #tpu.memory_space<vmem>>, vector<2x256xf32>
      tpu.vector_store %arg11[%c0_27, %c0_28], %46 {strides = array<i32>} : memref<2x256xf32, #tpu.memory_space<vmem>>, vector<2x256xf32>,
    } else {
    }
    return
  }
  func.func @transform_0(%arg0: i32) -> (i32, i32) {
    %c0_i32 = arith.constant 0 : i32
    %c0_i32_0 = arith.constant 0 : i32
    %c0_i32_1 = arith.constant 0 : i32
    return %c0_i32, %c0_i32_0 : i32, i32
  }
  func.func @transform_1(%arg0: i32) -> (i32, i32, i32) {
    %c0_i32 = arith.constant 0 : i32
    %c0_i32_0 = arith.constant 0 : i32
    %c0_i32_1 = arith.constant 0 : i32
    %c0_i32_2 = arith.constant 0 : i32
    return %c0_i32, %c0_i32_0, %c0_i32_1 : i32, i32, i32
  }
  func.func @transform_2(%arg0: i32) -> (i32, i32) {
    %c0_i32 = arith.constant 0 : i32
    %c0_i32_0 = arith.constant 0 : i32
    %c0_i32_1 = arith.constant 0 : i32
    return %c0_i32, %c0_i32_0 : i32, i32
  }
  func.func @transform_3(%arg0: i32) -> (i32, i32) {
    %c0_i32 = arith.constant 0 : i32
    %c0_i32_0 = arith.constant 0 : i32
    %c0_i32_1 = arith.constant 0 : i32
    return %c0_i32, %c0_i32_0 : i32, i32
  }
  func.func @transform_4(%arg0: i32) -> (i32, i32) {
    %c0_i32 = arith.constant 0 : i32
    %c0_i32_0 = arith.constant 0 : i32
    return %c0_i32, %arg0 : i32, i32
  }
  func.func @transform_5(%arg0: i32) -> (i32, i32) {
    %c0_i32 = arith.constant 0 : i32
    %c0_i32_0 = arith.constant 0 : i32
    return %c0_i32, %arg0 : i32, i32
  }
  func.func @transform_6(%arg0: i32) -> (i32, i32) {
    %c0_i32 = arith.constant 0 : i32
    %c0_i32_0 = arith.constant 0 : i32
    return %c0_i32, %arg0 : i32, i32
  }
  func.func @transform_7(%arg0: i32) -> (i32, i32) {
    %c0_i32 = arith.constant 0 : i32
    %c0_i32_0 = arith.constant 0 : i32
    return %arg0, %c0_i32 : i32, i32
  }
  func.func @transform_8(%arg0: i32) -> (i32, i32) {
    %c0_i32 = arith.constant 0 : i32
    %c0_i32_0 = arith.constant 0 : i32
    %c0_i32_1 = arith.constant 0 : i32
    return %c0_i32, %c0_i32_0 : i32, i32
  }
  func.func @transform_9(%arg0: i32) -> (i32, i32) {
    %c0_i32 = arith.constant 0 : i32
    %c0_i32_0 = arith.constant 0 : i32
    %c0_i32_1 = arith.constant 0 : i32
    return %c0_i32, %c0_i32_0 : i32, i32
  }
  func.func @transform_10(%arg0: i32) -> (i32, i32) {
    %c0_i32 = arith.constant 0 : i32
    %c0_i32_0 = arith.constant 0 : i32
    %c0_i32_1 = arith.constant 0 : i32
    return %c0_i32, %c0_i32_0 : i32, i32
  }
}

</mosaic_0001>

<llo_original>
// kernel: face_verification_forward.1
$region0: #{face_verification_forward.1}
  #allocation0 [shape = 'u32[]', space=smem, size = 0x4, offset = 0x4, fixed_abs, tag = 'smem constant byte address 0x4 - core index']
  #allocation1 [shape = 'u32[144,128]{1,0:T(1,128)}', space=vmem, size = 0x12000, scoped, tag = 'internal scratch']
  #allocation2 [shape = 'f32[2,512]{1,0:T(2,128)}', space=vmem, size = 0x1000, scoped, tag = 'scratch operand']
  #allocation3 [shape = 'f32[2,256]{1,0:T(2,128)}', space=vmem, size = 0x800, scoped, tag = 'scratch operand']
  #allocation4 [shape = 'f32[1,1]{1,0:T(1,128)S(6)}', space=smem, size = 0x200, scoped, tag = 'scoped memory for face_verification_forward.1']
  %s0 = inlined_call_operand.<no memory space> [shape: f32[1,1], index: 0, kind: input, shape index: {}]
  %s1 = inlined_call_operand.vmem [shape: f32[2,4,256], index: 1, kind: input, shape index: {}]
  %s2 = inlined_call_operand.vmem [shape: f32[4,512], index: 2, kind: input, shape index: {}]
  %s3 = inlined_call_operand.vmem [shape: f32[1,512], index: 3, kind: input, shape index: {}]
  %s4 = inlined_call_operand.hbm [shape: s8[512,1024], index: 4, kind: input, shape index: {}]
  %s5 = inlined_call_operand.vmem [shape: f32[1,1024], index: 5, kind: input, shape index: {}]
  %s6 = inlined_call_operand.vmem [shape: f32[1,1024], index: 6, kind: input, shape index: {}]
  %s7 = inlined_call_operand.hbm [shape: s8[1024,256], index: 7, kind: input, shape index: {}]
  %s8 = inlined_call_operand.vmem [shape: f32[1,256], index: 8, kind: input, shape index: {}]
  %s9 = inlined_call_operand.vmem [shape: f32[1,256], index: 9, kind: input, shape index: {}]
  %s10 = inlined_call_operand.hbm [shape: f32[2,256], index: 10, kind: output, shape index: {}]
  %s11 = sld [smem:[#allocation0]]
  $region89: #{face_verification_forward.1} parent=0
    _
  %s13 = ssub.s32 1, %s11
  %s14 = scalar_select 0, %s13, %s11
  %15 = sst [smem:[#allocation4]] %s0
  $region1: #{face_verification_forward.1} parent=0
    #allocation5 [shape = 'u8[262144]{0}', space=vmem, size = 0x40000, scoped, tag = 'input window, operand 4']
    #allocation6 [shape = 's32[2]{0}', space=sflag, size = 0x8, scoped, tag = 'scoped memory for face_verification_forward.1']
    #allocation7 [shape = 's32[2]{0}', space=sflag, size = 0x8, scoped, tag = 'scoped memory for face_verification_forward.1']
    #allocation8 [shape = 'u8[131072]{0}', space=vmem, size = 0x20000, scoped, tag = 'input window, operand 7']
    #allocation9 [shape = 's32[2]{0}', space=sflag, size = 0x8, scoped, tag = 'scoped memory for face_verification_forward.1']
    #allocation10 [shape = 'u8[2048]{0}', space=vmem, size = 0x800, scoped, tag = 'output window, operand 0, single buffered']
    %16 = vsyncpa [#allocation6], 0
    %s17 = scalar_lea.sflag [#allocation6], 1
    %18 = vsyncpa %s17, 0
    %19 = vsyncpa [#allocation9], 0
    %s20 = scalar_lea.sflag [#allocation9], 1
    %21 = vsyncpa %s20, 0
    %22 = vsyncpa [#allocation7], 0
    loop: start=0, step=1, limit=6
    $region2: #{face_verification_forward.1} parent=1 // loop_pre_header
      _
    $region3: #{face_verification_forward.1} parent=1 // loop_header
      %s24 = sphi 0, %s28
      %p25 = scmp.ge.s32.totalorder %s24, 6
      %s32 = sphi 0, %s32
      %s34 = sphi 0, %s32
      %s35 = sphi 0, %s34
      %s49 = sphi 0, %s35
      %s53 = sphi 0, %s53
      %s55 = sphi 0, %s53
      %s56 = sphi 0, %s55
      %s70 = sphi 0, %s56
      %s74 = sphi 0, %s74
      %s76 = sphi 0, %s74
      %s77 = sphi 0, %s76
      %s91 = sphi 0, %s77
      %s95 = sphi 0, %s95
      %s97 = sphi 0, %s95
      %s98 = sphi 0, %s97
      %s112 = sphi 0, %s98
      %s118 = sphi 0, %s120
      %s121 = sphi 0, %s118
      %s122 = sphi 0, %s121
      %s138 = sphi 0, %s122
      %s144 = sphi 0, %s146
      %s147 = sphi 0, %s144
      %s148 = sphi 0, %s147
      %s164 = sphi 0, %s148
      %s170 = sphi 0, %s172
      %s173 = sphi 0, %s170
      %s174 = sphi 0, %s173
      %s190 = sphi 0, %s174
      %s196 = sphi 0, %s198
      %s199 = sphi 0, %s196
      %s200 = sphi 0, %s199
      %s216 = sphi 0, %s200
      %s220 = sphi 0, %s220
      %s222 = sphi 0, %s220
      %s223 = sphi 0, %s222
      %s237 = sphi 0, %s223
      %s241 = sphi 0, %s241
      %s243 = sphi 0, %s241
      %s244 = sphi 0, %s243
      %s258 = sphi 0, %s244
      %s262 = sphi 0, %s262
      %s264 = sphi 0, %s262
      %s265 = sphi 0, %s264
      %s279 = sphi 0, %s265
    $region4: #{face_verification_forward.1} parent=1 // loop_header_branch
      %27 = sbr.rel (%p25) target = $region8
    $region5: #{face_verification_forward.1} parent=1 // loop_body
      %s29 = ssub.s32 %s24, 1
      %s30 = ssub.s32 %s24, 2
      %s31 = sadd.s32 %s24, 1
      %s33 = sadd.s32 %s32, 1
      %p36 = scmp.eq.s32.totalorder %s24, 3
      %p37 = scmp.ne.s32.totalorder %s32, %s34
      %p38 = scmp.eq.s32.totalorder %s24, 0
      %p39 = por %p37, %p38
      %p40 = scmp.ne.s32.totalorder %s32, %s34
      %p41 = scmp.eq.s32.totalorder %s29, 3
      %p42 = por %p40, %p41
      %p43 = scmp.ne.s32.totalorder %s34, %s35
      %p44 = scmp.eq.s32.totalorder %s29, 0
      %p45 = por %p43, %p44
      %p46 = scmp.ne.s32.totalorder %s34, %s35
      %p47 = scmp.eq.s32.totalorder %s30, 3
      %p48 = por %p46, %p47
      %p50 = scmp.ne.s32.totalorder %s35, %s49
      %p51 = scmp.eq.s32.totalorder %s30, 0
      %p52 = por %p50, %p51
      %s54 = sadd.s32 %s53, 1
      %p57 = scmp.eq.s32.totalorder %s24, 3
      %p58 = scmp.ne.s32.totalorder %s53, %s55
      %p59 = scmp.eq.s32.totalorder %s24, 0
      %p60 = por %p58, %p59
      %p61 = scmp.ne.s32.totalorder %s53, %s55
      %p62 = scmp.eq.s32.totalorder %s29, 3
      %p63 = por %p61, %p62
      %p64 = scmp.ne.s32.totalorder %s55, %s56
      %p65 = scmp.eq.s32.totalorder %s29, 0
      %p66 = por %p64, %p65
      %p67 = scmp.ne.s32.totalorder %s55, %s56
      %p68 = scmp.eq.s32.totalorder %s30, 3
      %p69 = por %p67, %p68
      %p71 = scmp.ne.s32.totalorder %s56, %s70
      %p72 = scmp.eq.s32.totalorder %s30, 0
      %p73 = por %p71, %p72
      %s75 = sadd.s32 %s74, 1
      %p78 = scmp.eq.s32.totalorder %s24, 3
      %p79 = scmp.ne.s32.totalorder %s74, %s76
      %p80 = scmp.eq.s32.totalorder %s24, 0
      %p81 = por %p79, %p80
      %p82 = scmp.ne.s32.totalorder %s74, %s76
      %p83 = scmp.eq.s32.totalorder %s29, 3
      %p84 = por %p82, %p83
      %p85 = scmp.ne.s32.totalorder %s76, %s77
      %p86 = scmp.eq.s32.totalorder %s29, 0
      %p87 = por %p85, %p86
      %p88 = scmp.ne.s32.totalorder %s76, %s77
      %p89 = scmp.eq.s32.totalorder %s30, 3
      %p90 = por %p88, %p89
      %p92 = scmp.ne.s32.totalorder %s77, %s91
      %p93 = scmp.eq.s32.totalorder %s30, 0
      %p94 = por %p92, %p93
      %s96 = sadd.s32 %s95, 1
      %p99 = scmp.eq.s32.totalorder %s24, 3
      %p100 = scmp.ne.s32.totalorder %s95, %s97
      %p101 = scmp.eq.s32.totalorder %s24, 0
      %p102 = por %p100, %p101
      %p103 = scmp.ne.s32.totalorder %s95, %s97
      %p104 = scmp.eq.s32.totalorder %s29, 3
      %p105 = por %p103, %p104
      %p106 = scmp.ne.s32.totalorder %s97, %s98
      %p107 = scmp.eq.s32.totalorder %s29, 0
      %p108 = por %p106, %p107
      %p109 = scmp.ne.s32.totalorder %s97, %s98
      %p110 = scmp.eq.s32.totalorder %s30, 3
      %p111 = por %p109, %p110
      %p113 = scmp.ne.s32.totalorder %s98, %s112
      %p114 = scmp.eq.s32.totalorder %s30, 0
      %p115 = por %p113, %p114
      %s116 = ssub.s32 %s24, %s31
      %p117 = scmp.eq.s32.totalorder %s116, 0
      %s119 = sadd.s32 %s118, 1
      %s120 = scalar_select %p117, %s118, %s119
      %p123 = pneg %p117
      %p124 = scmp.eq.s32.totalorder %s24, 3
      %p125 = por %p123, %p124
      %p126 = scmp.ne.s32.totalorder %s118, %s121
      %p127 = scmp.eq.s32.totalorder %s24, 0
      %p128 = por %p126, %p127
      %p129 = scmp.ne.s32.totalorder %s118, %s121
      %p130 = scmp.eq.s32.totalorder %s29, 3
      %p131 = por %p129, %p130
      %p132 = scmp.ne.s32.totalorder %s121, %s122
      %p133 = scmp.eq.s32.totalorder %s29, 0
      %p134 = por %p132, %p133
      %p135 = scmp.ne.s32.totalorder %s121, %s122
      %p136 = scmp.eq.s32.totalorder %s30, 3
      %p137 = por %p135, %p136
      %p139 = scmp.ne.s32.totalorder %s122, %s138
      %p140 = scmp.eq.s32.totalorder %s30, 0
      %p141 = por %p139, %p140
      %s142 = ssub.s32 %s24, %s31
      %p143 = scmp.eq.s32.totalorder %s142, 0
      %s145 = sadd.s32 %s144, 1
      %s146 = scalar_select %p143, %s144, %s145
      %p149 = pneg %p143
      %p150 = scmp.eq.s32.totalorder %s24, 3
      %p151 = por %p149, %p150
      %p152 = scmp.ne.s32.totalorder %s144, %s147
      %p153 = scmp.eq.s32.totalorder %s24, 0
      %p154 = por %p152, %p153
      %p155 = scmp.ne.s32.totalorder %s144, %s147
      %p156 = scmp.eq.s32.totalorder %s29, 3
      %p157 = por %p155, %p156
      %p158 = scmp.ne.s32.totalorder %s147, %s148
      %p159 = scmp.eq.s32.totalorder %s29, 0
      %p160 = por %p158, %p159
      %p161 = scmp.ne.s32.totalorder %s147, %s148
      %p162 = scmp.eq.s32.totalorder %s30, 3
      %p163 = por %p161, %p162
      %p165 = scmp.ne.s32.totalorder %s148, %s164
      %p166 = scmp.eq.s32.totalorder %s30, 0
      %p167 = por %p165, %p166
      %s168 = ssub.s32 %s24, %s31
      %p169 = scmp.eq.s32.totalorder %s168, 0
      %s171 = sadd.s32 %s170, 1
      %s172 = scalar_select %p169, %s170, %s171
      %p175 = pneg %p169
      %p176 = scmp.eq.s32.totalorder %s24, 3
      %p177 = por %p175, %p176
      %p178 = scmp.ne.s32.totalorder %s170, %s173
      %p179 = scmp.eq.s32.totalorder %s24, 0
      %p180 = por %p178, %p179
      %p181 = scmp.ne.s32.totalorder %s170, %s173
      %p182 = scmp.eq.s32.totalorder %s29, 3
      %p183 = por %p181, %p182
      %p184 = scmp.ne.s32.totalorder %s173, %s174
      %p185 = scmp.eq.s32.totalorder %s29, 0
      %p186 = por %p184, %p185
      %p187 = scmp.ne.s32.totalorder %s173, %s174
      %p188 = scmp.eq.s32.totalorder %s30, 3
      %p189 = por %p187, %p188
      %p191 = scmp.ne.s32.totalorder %s174, %s190
      %p192 = scmp.eq.s32.totalorder %s30, 0
      %p193 = por %p191, %p192
      %s194 = ssub.s32 %s24, %s31
      %p195 = scmp.eq.s32.totalorder %s194, 0
      %s197 = sadd.s32 %s196, 1
      %s198 = scalar_select %p195, %s196, %s197
      %p201 = pneg %p195
      %p202 = scmp.eq.s32.totalorder %s24, 3
      %p203 = por %p201, %p202
      %p204 = scmp.ne.s32.totalorder %s196, %s199
      %p205 = scmp.eq.s32.totalorder %s24, 0
      %p206 = por %p204, %p205
      %p207 = scmp.ne.s32.totalorder %s196, %s199
      %p208 = scmp.eq.s32.totalorder %s29, 3
      %p209 = por %p207, %p208
      %p210 = scmp.ne.s32.totalorder %s199, %s200
      %p211 = scmp.eq.s32.totalorder %s29, 0
      %p212 = por %p210, %p211
      %p213 = scmp.ne.s32.totalorder %s199, %s200
      %p214 = scmp.eq.s32.totalorder %s30, 3
      %p215 = por %p213, %p214
      %p217 = scmp.ne.s32.totalorder %s200, %s216
      %p218 = scmp.eq.s32.totalorder %s30, 0
      %p219 = por %p217, %p218
      %s221 = sadd.s32 %s220, 1
      %p224 = scmp.eq.s32.totalorder %s24, 3
      %p225 = scmp.ne.s32.totalorder %s220, %s222
      %p226 = scmp.eq.s32.totalorder %s24, 0
      %p227 = por %p225, %p226
      %p228 = scmp.ne.s32.totalorder %s220, %s222
      %p229 = scmp.eq.s32.totalorder %s29, 3
      %p230 = por %p228, %p229
      %p231 = scmp.ne.s32.totalorder %s222, %s223
      %p232 = scmp.eq.s32.totalorder %s29, 0
      %p233 = por %p231, %p232
      %p234 = scmp.ne.s32.totalorder %s222, %s223
      %p235 = scmp.eq.s32.totalorder %s30, 3
      %p236 = por %p234, %p235
      %p238 = scmp.ne.s32.totalorder %s223, %s237
      %p239 = scmp.eq.s32.totalorder %s30, 0
      %p240 = por %p238, %p239
      %s242 = sadd.s32 %s241, 1
      %p245 = scmp.eq.s32.totalorder %s24, 3
      %p246 = scmp.ne.s32.totalorder %s241, %s243
      %p247 = scmp.eq.s32.totalorder %s24, 0
      %p248 = por %p246, %p247
      %p249 = scmp.ne.s32.totalorder %s241, %s243
      %p250 = scmp.eq.s32.totalorder %s29, 3
      %p251 = por %p249, %p250
      %p252 = scmp.ne.s32.totalorder %s243, %s244
      %p253 = scmp.eq.s32.totalorder %s29, 0
      %p254 = por %p252, %p253
      %p255 = scmp.ne.s32.totalorder %s243, %s244
      %p256 = scmp.eq.s32.totalorder %s30, 3
      %p257 = por %p255, %p256
      %p259 = scmp.ne.s32.totalorder %s244, %s258
      %p260 = scmp.eq.s32.totalorder %s30, 0
      %p261 = por %p259, %p260
      %s263 = sadd.s32 %s262, 1
      %p266 = scmp.eq.s32.totalorder %s24, 3
      %p267 = scmp.ne.s32.totalorder %s262, %s264
      %p268 = scmp.eq.s32.totalorder %s24, 0
      %p269 = por %p267, %p268
      %p270 = scmp.ne.s32.totalorder %s262, %s264
      %p271 = scmp.eq.s32.totalorder %s29, 3
      %p272 = por %p270, %p271
      %p273 = scmp.ne.s32.totalorder %s264, %s265
      %p274 = scmp.eq.s32.totalorder %s29, 0
      %p275 = por %p273, %p274
      %p276 = scmp.ne.s32.totalorder %s264, %s265
      %p277 = scmp.eq.s32.totalorder %s30, 3
      %p278 = por %p276, %p277
      %p280 = scmp.ne.s32.totalorder %s265, %s279
      %p281 = scmp.eq.s32.totalorder %s30, 0
      %p282 = por %p280, %p281
      %p283 = scmp.le.s32.totalorder 1, %s24
      %p284 = scmp.lt.s32.totalorder %s24, 5
      %p285 = pnand %p283, %p284
      %p286 = pneg %p285
      // Predicated region
      $region9: #{face_verification_forward.1} parent=5 // pred_check
        _
      $region10: #{face_verification_forward.1} parent=5 // pred_check_branch
        %288 = sbr.rel (%p285) target = $region12
      $region11: #{face_verification_forward.1} parent=5 // pred_region
        %s289 = ssub.s32 %s24, 1
        // Predicated region
        $region13: #{face_verification_forward.1} parent=11 // pred_check
          %p290 = pneg %p45
        $region14: #{face_verification_forward.1} parent=11 // pred_check_branch
          %292 = sbr.rel (%p290) target = $region16
        $region15: #{face_verification_forward.1} parent=11 // pred_region
          _
        $region16: #{face_verification_forward.1} parent=11 // pred_fallthru
          _
        // Predicated region
        $region17: #{face_verification_forward.1} parent=11 // pred_check
          %p293 = pneg %p66
        $region18: #{face_verification_forward.1} parent=11 // pred_check_branch
          %295 = sbr.rel (%p293) target = $region20
        $region19: #{face_verification_forward.1} parent=11 // pred_region
          _
        $region20: #{face_verification_forward.1} parent=11 // pred_fallthru
          _
        // Predicated region
        $region21: #{face_verification_forward.1} parent=11 // pred_check
          %p296 = pneg %p87
        $region22: #{face_verification_forward.1} parent=11 // pred_check_branch
          %298 = sbr.rel (%p296) target = $region24
        $region23: #{face_verification_forward.1} parent=11 // pred_region
          _
        $region24: #{face_verification_forward.1} parent=11 // pred_fallthru
          _
        // Predicated region
        $region25: #{face_verification_forward.1} parent=11 // pred_check
          %p299 = pneg %p108
        $region26: #{face_verification_forward.1} parent=11 // pred_check_branch
          %301 = sbr.rel (%p299) target = $region28
        $region27: #{face_verification_forward.1} parent=11 // pred_region
          _
        $region28: #{face_verification_forward.1} parent=11 // pred_fallthru
          _
        // Predicated region
        $region29: #{face_verification_forward.1} parent=11 // pred_check
          %p302 = pneg %p233
        $region30: #{face_verification_forward.1} parent=11 // pred_check_branch
          %304 = sbr.rel (%p302) target = $region32
        $region31: #{face_verification_forward.1} parent=11 // pred_region
          _
        $region32: #{face_verification_forward.1} parent=11 // pred_fallthru
          _
        // Predicated region
        $region33: #{face_verification_forward.1} parent=11 // pred_check
          %p305 = pneg %p254
        $region34: #{face_verification_forward.1} parent=11 // pred_check_branch
          %307 = sbr.rel (%p305) target = $region36
        $region35: #{face_verification_forward.1} parent=11 // pred_region
          _
        $region36: #{face_verification_forward.1} parent=11 // pred_fallthru
          _
      $region12: #{face_verification_forward.1} parent=5 // pred_fallthru
        _
      %p308 = scmp.lt.s32.totalorder %s24, 4
      // Predicated region
      $region37: #{face_verification_forward.1} parent=5 // pred_check
        %p309 = pneg %p308
      $region38: #{face_verification_forward.1} parent=5 // pred_check_branch
        %311 = sbr.rel (%p309) target = $region40
      $region39: #{face_verification_forward.1} parent=5 // pred_region
        // Predicated region
        $region41: #{face_verification_forward.1} parent=39 // pred_check
          %p312 = pneg %p128
        $region42: #{face_verification_forward.1} parent=39 // pred_check_branch
          %314 = sbr.rel (%p312) target = $region44
        $region43: #{face_verification_forward.1} parent=39 // pred_region
          %s315 = sand.u32 %s118, 1
          %s316 = scalar_lea.sflag [#allocation6], %s315
          %s317 = sand.u32 %s118, 1
          %s318 = smul.addr %s317, 256
          %s319 = scalar_lea.vmem [#allocation5], %s318
          %s320 = smul.u32 2, %s24
          %s322 = ssub.s32 4096, 4096
          %323 = vsyncadd %s316, %s322
          %s324 = smul.addr %s320, 128
          %s325 = scalar_lea.hbm %s4, %s324
          %s326 = sshll.u32 %s319, 4
          %s327 = int_to_ptr.vmem [resolvable:$true] %s326
          %332 = dma.hbm_to_vmem [thread:$0]  %s325, 4096, %s327, %s316, 1024, 256, 16
        $region44: #{face_verification_forward.1} parent=39 // pred_fallthru
          _
        // Predicated region
        $region45: #{face_verification_forward.1} parent=39 // pred_check
          %p333 = pneg %p154
        $region46: #{face_verification_forward.1} parent=39 // pred_check_branch
          %335 = sbr.rel (%p333) target = $region48
        $region47: #{face_verification_forward.1} parent=39 // pred_region
          %s336 = smul.u32 2, %s24
          %p337 = scmp.lt.s32.totalorder %s336, 7
          %s338 = scalar_select %p337, %s336, 7
          %s339 = scalar_lea.vmem %s5, %s338
          %s340 = smul.u32 2, %s24
        $region48: #{face_verification_forward.1} parent=39 // pred_fallthru
          _
        // Predicated region
        $region49: #{face_verification_forward.1} parent=39 // pred_check
          %p341 = pneg %p180
        $region50: #{face_verification_forward.1} parent=39 // pred_check_branch
          %343 = sbr.rel (%p341) target = $region52
        $region51: #{face_verification_forward.1} parent=39 // pred_region
          %s344 = smul.u32 2, %s24
          %p345 = scmp.lt.s32.totalorder %s344, 7
          %s346 = scalar_select %p345, %s344, 7
          %s347 = scalar_lea.vmem %s6, %s346
          %s348 = smul.u32 2, %s24
        $region52: #{face_verification_forward.1} parent=39 // pred_fallthru
          _
        // Predicated region
        $region53: #{face_verification_forward.1} parent=39 // pred_check
          %p349 = pneg %p206
        $region54: #{face_verification_forward.1} parent=39 // pred_check_branch
          %351 = sbr.rel (%p349) target = $region56
        $region55: #{face_verification_forward.1} parent=39 // pred_region
          %s352 = sand.u32 %s196, 1
          %s353 = scalar_lea.sflag [#allocation9], %s352
          %s354 = sand.u32 %s196, 1
          %s355 = smul.addr %s354, 128
          %s356 = scalar_lea.vmem [#allocation8], %s355
          %s357 = smul.u32 8, %s24
          %s359 = ssub.s32 2048, 2048
          %360 = vsyncadd %s353, %s359
          %s361 = smul.addr %s357, 2
          %s362 = smul.addr %s361, 128
          %s363 = scalar_lea.hbm %s7, %s362
          %s364 = sshll.u32 %s356, 4
          %s365 = int_to_ptr.vmem [resolvable:$true] %s364
          %370 = dma.hbm_to_vmem [thread:$0]  %s363, 2048, %s365, %s353, 256, 256, 16
        $region56: #{face_verification_forward.1} parent=39 // pred_fallthru
          _
      $region40: #{face_verification_forward.1} parent=5 // pred_fallthru
        _
      %p371 = scmp.le.s32.totalorder 1, %s24
      %p372 = scmp.lt.s32.totalorder %s24, 5
      %p373 = pnand %p371, %p372
      %p374 = pneg %p373
      // Predicated region
      $region57: #{face_verification_forward.1} parent=5 // pred_check
        _
      $region58: #{face_verification_forward.1} parent=5 // pred_check_branch
        %376 = sbr.rel (%p373) target = $region60
      $region59: #{face_verification_forward.1} parent=5 // pred_region
        %s377 = ssub.s32 %s24, 1
        %s378 = sand.u32 %s121, 1
        %s379 = scalar_lea.sflag [#allocation6], %s378
        %s380 = sand.u32 %s121, 1
        %s381 = smul.addr %s380, 256
        %s382 = scalar_lea.vmem [#allocation5], %s381
        // Predicated region
        $region61: #{face_verification_forward.1} parent=59 // pred_check
          %p383 = pneg %p134
        $region62: #{face_verification_forward.1} parent=59 // pred_check_branch
          %385 = sbr.rel (%p383) target = $region64
        $region63: #{face_verification_forward.1} parent=59 // pred_region
          %386 = dma.done %s379, 4096
        $region64: #{face_verification_forward.1} parent=59 // pred_fallthru
          _
        %s387 = sand.u32 %s199, 1
        %s388 = scalar_lea.sflag [#allocation9], %s387
        %s389 = sand.u32 %s199, 1
        %s390 = smul.addr %s389, 128
        %s391 = scalar_lea.vmem [#allocation8], %s390
        // Predicated region
        $region65: #{face_verification_forward.1} parent=59 // pred_check
          %p392 = pneg %p212
        $region66: #{face_verification_forward.1} parent=59 // pred_check_branch
          %394 = sbr.rel (%p392) target = $region68
        $region67: #{face_verification_forward.1} parent=59 // pred_region
          %395 = dma.done %s388, 2048
        $region68: #{face_verification_forward.1} parent=59 // pred_fallthru
          _
        %p396 = pneg %p45
        %p397 = pneg %p42
        %p398 = pneg %p66
        %p399 = pneg %p63
        %p400 = pneg %p87
        %p401 = pneg %p84
        %p402 = pneg %p108
        %p403 = pneg %p105
        %s404 = sand.u32 %s121, 1
        %s405 = scalar_lea.sflag [#allocation6], %s404
        %s406 = sand.u32 %s121, 1
        %s407 = smul.addr %s406, 256
        %s408 = scalar_lea.vmem [#allocation5], %s407
        %p409 = pneg %p134
        %p410 = pneg %p131
        %s411 = smul.u32 2, %s29
        %p412 = scmp.lt.s32.totalorder %s411, 7
        %s413 = scalar_select %p412, %s411, 7
        %s414 = scalar_lea.vmem %s5, %s413
        %p415 = pneg %p160
        %p416 = pneg %p157
        %s417 = smul.u32 2, %s29
        %p418 = scmp.lt.s32.totalorder %s417, 7
        %s419 = scalar_select %p418, %s417, 7
        %s420 = scalar_lea.vmem %s6, %s419
        %p421 = pneg %p186
        %p422 = pneg %p183
        %s423 = sand.u32 %s199, 1
        %s424 = scalar_lea.sflag [#allocation9], %s423
        %s425 = sand.u32 %s199, 1
        %s426 = smul.addr %s425, 128
        %s427 = scalar_lea.vmem [#allocation8], %s426
        %p428 = pneg %p212
        %p429 = pneg %p209
        %p430 = pneg %p233
        %p431 = pneg %p230
        %p432 = pneg %p254
        %p433 = pneg %p251
        %p434 = pneg %p275
        %p435 = pneg %p272
        %s436 = smul.u32 2, %s29
        %s437 = smul.u32 2, %s29
        %p438 = scmp.lt.s32.totalorder %s437, 7
        %s439 = scalar_select %p438, %s437, 7
        %s440 = scalar_lea.vmem %s5, %s439
        %s441 = smul.u32 2, %s29
        %s442 = smul.u32 2, %s29
        %p443 = scmp.lt.s32.totalorder %s442, 7
        %s444 = scalar_select %p443, %s442, 7
        %s445 = scalar_lea.vmem %s6, %s444
        %s446 = smul.u32 2, %s29
        %s447 = smul.u32 8, %s29
        %p448 = scmp.eq.s32.totalorder %s29, 0
        // Predicated region
        $region69: #{face_verification_forward.1} parent=59 // pred_check
          %p449 = pneg %p448
        $region70: #{face_verification_forward.1} parent=59 // pred_check_branch
          %451 = sbr.rel (%p449) target = $region72
        $region71: #{face_verification_forward.1} parent=59 // pred_region
          %v452 = vld [vmem:[%s1] sm:$0xff]
          %v453 = vld [vmem:[%s1 + $0x8] sm:$0xff]
          %v454 = vld [vmem:[%s2] sm:$0xff]
          %v455 = vld [vmem:[%s2 + $0x8] sm:$0xff]
          %v458 = vlaneseq
          %v459 = vshrl.u32 %v458, 7
          %v460 = vsub.s32 0, %v459
          %v461 = vrot.slane %v452, %v460
          %v462 = vlaneseq
          %v463 = vshrl.u32 %v462, 7
          %v464 = vsub.s32 4, %v463
          %v465 = vrot.slane %v452, %v464
          %v466 = vlaneseq
          %v467 = vshrl.u32 %v466, 7
          %v468 = vsub.s32 0, %v467
          %v469 = vrot.slane %v453, %v468
          %v470 = vlaneseq
          %v471 = vshrl.u32 %v470, 7
          %v472 = vsub.s32 4, %v471
          %v473 = vrot.slane %v453, %v472
          %v478 = vlaneseq
          %v479 = vshrl.u32 %v478, 7
          %v480 = vsub.s32 0, %v479
          %v481 = vrot.slane %v461, %v480
          %483 = vbcast.lane.b32.xlu0 %v481, 256
          %v484 = vpop.permute.xlu0 %483
          %s486 = sor.u32 256, 8
          %487 = vbcast.lane.b32.xlu0 %v481, %s486
          %v488 = vpop.permute.xlu0 %487
          %s490 = sor.u32 256, 16
          %491 = vbcast.lane.b32.xlu0 %v481, %s490
          %v492 = vpop.permute.xlu0 %491
          %s494 = sor.u32 256, 24
          %495 = vbcast.lane.b32.xlu0 %v481, %s494
          %v496 = vpop.permute.xlu0 %495
          %s498 = sor.u32 256, 32
          %499 = vbcast.lane.b32.xlu0 %v481, %s498
          %v500 = vpop.permute.xlu0 %499
          %s502 = sor.u32 256, 40
          %503 = vbcast.lane.b32.xlu0 %v481, %s502
          %v504 = vpop.permute.xlu0 %503
          %s506 = sor.u32 256, 48
          %507 = vbcast.lane.b32.xlu0 %v481, %s506
          %v508 = vpop.permute.xlu0 %507
          %s510 = sor.u32 256, 56
          %511 = vbcast.lane.b32.xlu0 %v481, %s510
          %v512 = vpop.permute.xlu0 %511
          %s514 = sor.u32 256, 64
          %515 = vbcast.lane.b32.xlu0 %v481, %s514
          %v516 = vpop.permute.xlu0 %515
          %s518 = sor.u32 256, 72
          %519 = vbcast.lane.b32.xlu0 %v481, %s518
          %v520 = vpop.permute.xlu0 %519
          %s522 = sor.u32 256, 80
          %523 = vbcast.lane.b32.xlu0 %v481, %s522
          %v524 = vpop.permute.xlu0 %523
          %s526 = sor.u32 256, 88
          %527 = vbcast.lane.b32.xlu0 %v481, %s526
          %v528 = vpop.permute.xlu0 %527
          %s530 = sor.u32 256, 96
          %531 = vbcast.lane.b32.xlu0 %v481, %s530
          %v532 = vpop.permute.xlu0 %531
          %s534 = sor.u32 256, 104
          %535 = vbcast.lane.b32.xlu0 %v481, %s534
          %v536 = vpop.permute.xlu0 %535
          %s538 = sor.u32 256, 112
          %539 = vbcast.lane.b32.xlu0 %v481, %s538
          %v540 = vpop.permute.xlu0 %539
          %s542 = sor.u32 256, 120
          %543 = vbcast.lane.b32.xlu0 %v481, %s542
          %v544 = vpop.permute.xlu0 %543
          %v545 = vlaneseq
          %v546 = vshrl.u32 %v545, 7
          %v547 = vsub.s32 0, %v546
          %v548 = vrot.slane %v465, %v547
          %550 = vbcast.lane.b32.xlu0 %v548, 256
          %v551 = vpop.permute.xlu0 %550
          %s553 = sor.u32 256, 8
          %554 = vbcast.lane.b32.xlu0 %v548, %s553
          %v555 = vpop.permute.xlu0 %554
          %s557 = sor.u32 256, 16
          %558 = vbcast.lane.b32.xlu0 %v548, %s557
          %v559 = vpop.permute.xlu0 %558
          %s561 = sor.u32 256, 24
          %562 = vbcast.lane.b32.xlu0 %v548, %s561
          %v563 = vpop.permute.xlu0 %562
          %s565 = sor.u32 256, 32
          %566 = vbcast.lane.b32.xlu0 %v548, %s565
          %v567 = vpop.permute.xlu0 %566
          %s569 = sor.u32 256, 40
          %570 = vbcast.lane.b32.xlu0 %v548, %s569
          %v571 = vpop.permute.xlu0 %570
          %s573 = sor.u32 256, 48
          %574 = vbcast.lane.b32.xlu0 %v548, %s573
          %v575 = vpop.permute.xlu0 %574
          %s577 = sor.u32 256, 56
          %578 = vbcast.lane.b32.xlu0 %v548, %s577
          %v579 = vpop.permute.xlu0 %578
          %s581 = sor.u32 256, 64
          %582 = vbcast.lane.b32.xlu0 %v548, %s581
          %v583 = vpop.permute.xlu0 %582
          %s585 = sor.u32 256, 72
          %586 = vbcast.lane.b32.xlu0 %v548, %s585
          %v587 = vpop.permute.xlu0 %586
          %s589 = sor.u32 256, 80
          %590 = vbcast.lane.b32.xlu0 %v548, %s589
          %v591 = vpop.permute.xlu0 %590
          %s593 = sor.u32 256, 88
          %594 = vbcast.lane.b32.xlu0 %v548, %s593
          %v595 = vpop.permute.xlu0 %594
          %s597 = sor.u32 256, 96
          %598 = vbcast.lane.b32.xlu0 %v548, %s597
          %v599 = vpop.permute.xlu0 %598
          %s601 = sor.u32 256, 104
          %602 = vbcast.lane.b32.xlu0 %v548, %s601
          %v603 = vpop.permute.xlu0 %602
          %s605 = sor.u32 256, 112
          %606 = vbcast.lane.b32.xlu0 %v548, %s605
          %v607 = vpop.permute.xlu0 %606
          %s609 = sor.u32 256, 120
          %610 = vbcast.lane.b32.xlu0 %v548, %s609
          %v611 = vpop.permute.xlu0 %610
          %v612 = vlaneseq
          %v613 = vshrl.u32 %v612, 7
          %v614 = vsub.s32 0, %v613
          %v615 = vrot.slane %v469, %v614
          %617 = vbcast.lane.b32.xlu0 %v615, 256
          %v618 = vpop.permute.xlu0 %617
          %s620 = sor.u32 256, 8
          %621 = vbcast.lane.b32.xlu0 %v615, %s620
          %v622 = vpop.permute.xlu0 %621
          %s624 = sor.u32 256, 16
          %625 = vbcast.lane.b32.xlu0 %v615, %s624
          %v626 = vpop.permute.xlu0 %625
          %s628 = sor.u32 256, 24
          %629 = vbcast.lane.b32.xlu0 %v615, %s628
          %v630 = vpop.permute.xlu0 %629
          %s632 = sor.u32 256, 32
          %633 = vbcast.lane.b32.xlu0 %v615, %s632
          %v634 = vpop.permute.xlu0 %633
          %s636 = sor.u32 256, 40
          %637 = vbcast.lane.b32.xlu0 %v615, %s636
          %v638 = vpop.permute.xlu0 %637
          %s640 = sor.u32 256, 48
          %641 = vbcast.lane.b32.xlu0 %v615, %s640
          %v642 = vpop.permute.xlu0 %641
          %s644 = sor.u32 256, 56
          %645 = vbcast.lane.b32.xlu0 %v615, %s644
          %v646 = vpop.permute.xlu0 %645
          %s648 = sor.u32 256, 64
          %649 = vbcast.lane.b32.xlu0 %v615, %s648
          %v650 = vpop.permute.xlu0 %649
          %s652 = sor.u32 256, 72
          %653 = vbcast.lane.b32.xlu0 %v615, %s652
          %v654 = vpop.permute.xlu0 %653
          %s656 = sor.u32 256, 80
          %657 = vbcast.lane.b32.xlu0 %v615, %s656
          %v658 = vpop.permute.xlu0 %657
          %s660 = sor.u32 256, 88
          %661 = vbcast.lane.b32.xlu0 %v615, %s660
          %v662 = vpop.permute.xlu0 %661
          %s664 = sor.u32 256, 96
          %665 = vbcast.lane.b32.xlu0 %v615, %s664
          %v666 = vpop.permute.xlu0 %665
          %s668 = sor.u32 256, 104
          %669 = vbcast.lane.b32.xlu0 %v615, %s668
          %v670 = vpop.permute.xlu0 %669
          %s672 = sor.u32 256, 112
          %673 = vbcast.lane.b32.xlu0 %v615, %s672
          %v674 = vpop.permute.xlu0 %673
          %s676 = sor.u32 256, 120
          %677 = vbcast.lane.b32.xlu0 %v615, %s676
          %v678 = vpop.permute.xlu0 %677
          %v679 = vlaneseq
          %v680 = vshrl.u32 %v679, 7
          %v681 = vsub.s32 0, %v680
          %v682 = vrot.slane %v473, %v681
          %684 = vbcast.lane.b32.xlu0 %v682, 256
          %v685 = vpop.permute.xlu0 %684
          %s687 = sor.u32 256, 8
          %688 = vbcast.lane.b32.xlu0 %v682, %s687
          %v689 = vpop.permute.xlu0 %688
          %s691 = sor.u32 256, 16
          %692 = vbcast.lane.b32.xlu0 %v682, %s691
          %v693 = vpop.permute.xlu0 %692
          %s695 = sor.u32 256, 24
          %696 = vbcast.lane.b32.xlu0 %v682, %s695
          %v697 = vpop.permute.xlu0 %696
          %s699 = sor.u32 256, 32
          %700 = vbcast.lane.b32.xlu0 %v682, %s699
          %v701 = vpop.permute.xlu0 %700
          %s703 = sor.u32 256, 40
          %704 = vbcast.lane.b32.xlu0 %v682, %s703
          %v705 = vpop.permute.xlu0 %704
          %s707 = sor.u32 256, 48
          %708 = vbcast.lane.b32.xlu0 %v682, %s707
          %v709 = vpop.permute.xlu0 %708
          %s711 = sor.u32 256, 56
          %712 = vbcast.lane.b32.xlu0 %v682, %s711
          %v713 = vpop.permute.xlu0 %712
          %s715 = sor.u32 256, 64
          %716 = vbcast.lane.b32.xlu0 %v682, %s715
          %v717 = vpop.permute.xlu0 %716
          %s719 = sor.u32 256, 72
          %720 = vbcast.lane.b32.xlu0 %v682, %s719
          %v721 = vpop.permute.xlu0 %720
          %s723 = sor.u32 256, 80
          %724 = vbcast.lane.b32.xlu0 %v682, %s723
          %v725 = vpop.permute.xlu0 %724
          %s727 = sor.u32 256, 88
          %728 = vbcast.lane.b32.xlu0 %v682, %s727
          %v729 = vpop.permute.xlu0 %728
          %s731 = sor.u32 256, 96
          %732 = vbcast.lane.b32.xlu0 %v682, %s731
          %v733 = vpop.permute.xlu0 %732
          %s735 = sor.u32 256, 104
          %736 = vbcast.lane.b32.xlu0 %v682, %s735
          %v737 = vpop.permute.xlu0 %736
          %s739 = sor.u32 256, 112
          %740 = vbcast.lane.b32.xlu0 %v682, %s739
          %v741 = vpop.permute.xlu0 %740
          %s743 = sor.u32 256, 120
          %744 = vbcast.lane.b32.xlu0 %v682, %s743
          %v745 = vpop.permute.xlu0 %744
          %v748 = vlaneseq
          %v749 = vshrl.u32 %v748, 7
          %v750 = vsub.s32 0, %v749
          %v751 = vrot.slane %v454, %v750
          %v752 = vlaneseq
          %v753 = vshrl.u32 %v752, 7
          %v754 = vsub.s32 4, %v753
          %v755 = vrot.slane %v454, %v754
          %v756 = vlaneseq
          %v757 = vshrl.u32 %v756, 7
          %v758 = vsub.s32 0, %v757
          %v759 = vrot.slane %v455, %v758
          %v760 = vlaneseq
          %v761 = vshrl.u32 %v760, 7
          %v762 = vsub.s32 4, %v761
          %v763 = vrot.slane %v455, %v762
          %v768 = vlaneseq
          %v769 = vshrl.u32 %v768, 7
          %v770 = vsub.s32 0, %v769
          %v771 = vrot.slane %v751, %v770
          %v772 = vlaneseq
          %v773 = vshrl.u32 %v772, 7
          %v774 = vsub.s32 0, %v773
          %v775 = vrot.slane %v755, %v774
          %v776 = vlaneseq
          %v777 = vshrl.u32 %v776, 7
          %v778 = vsub.s32 0, %v777
          %v779 = vrot.slane %v759, %v778
          %v780 = vlaneseq
          %v781 = vshrl.u32 %v780, 7
          %v782 = vsub.s32 0, %v781
          %v783 = vrot.slane %v763, %v782
          %v784 = vmul.f32 %v484, %v771
          %v785 = vmul.f32 %v484, %v775
          %v786 = vmul.f32 %v484, %v779
          %v787 = vmul.f32 %v484, %v783
          %v788 = vmul.f32 %v488, %v771
          %v789 = vmul.f32 %v488, %v775
          %v790 = vmul.f32 %v488, %v779
          %v791 = vmul.f32 %v488, %v783
          %v792 = vmul.f32 %v492, %v771
          %v793 = vmul.f32 %v492, %v775
          %v794 = vmul.f32 %v492, %v779
          %v795 = vmul.f32 %v492, %v783
          %v796 = vmul.f32 %v496, %v771
          %v797 = vmul.f32 %v496, %v775
          %v798 = vmul.f32 %v496, %v779
          %v799 = vmul.f32 %v496, %v783
          %v800 = vmul.f32 %v500, %v771
          %v801 = vmul.f32 %v500, %v775
          %v802 = vmul.f32 %v500, %v779
          %v803 = vmul.f32 %v500, %v783
          %v804 = vmul.f32 %v504, %v771
          %v805 = vmul.f32 %v504, %v775
          %v806 = vmul.f32 %v504, %v779
          %v807 = vmul.f32 %v504, %v783
          %v808 = vmul.f32 %v508, %v771
          %v809 = vmul.f32 %v508, %v775
          %v810 = vmul.f32 %v508, %v779
          %v811 = vmul.f32 %v508, %v783
          %v812 = vmul.f32 %v512, %v771
          %v813 = vmul.f32 %v512, %v775
          %v814 = vmul.f32 %v512, %v779
          %v815 = vmul.f32 %v512, %v783
          %v816 = vmul.f32 %v516, %v771
          %v817 = vmul.f32 %v516, %v775
          %v818 = vmul.f32 %v516, %v779
          %v819 = vmul.f32 %v516, %v783
          %v820 = vmul.f32 %v520, %v771
          %v821 = vmul.f32 %v520, %v775
          %v822 = vmul.f32 %v520, %v779
          %v823 = vmul.f32 %v520, %v783
          %v824 = vmul.f32 %v524, %v771
          %v825 = vmul.f32 %v524, %v775
          %v826 = vmul.f32 %v524, %v779
          %v827 = vmul.f32 %v524, %v783
          %v828 = vmul.f32 %v528, %v771
          %v829 = vmul.f32 %v528, %v775
          %v830 = vmul.f32 %v528, %v779
          %v831 = vmul.f32 %v528, %v783
          %v832 = vmul.f32 %v532, %v771
          %v833 = vmul.f32 %v532, %v775
          %v834 = vmul.f32 %v532, %v779
          %v835 = vmul.f32 %v532, %v783
          %v836 = vmul.f32 %v536, %v771
          %v837 = vmul.f32 %v536, %v775
          %v838 = vmul.f32 %v536, %v779
          %v839 = vmul.f32 %v536, %v783
          %v840 = vmul.f32 %v540, %v771
          %v841 = vmul.f32 %v540, %v775
          %v842 = vmul.f32 %v540, %v779
          %v843 = vmul.f32 %v540, %v783
          %v844 = vmul.f32 %v544, %v771
          %v845 = vmul.f32 %v544, %v775
          %v846 = vmul.f32 %v544, %v779
          %v847 = vmul.f32 %v544, %v783
          %v848 = vmul.f32 %v551, %v771
          %v849 = vmul.f32 %v551, %v775
          %v850 = vmul.f32 %v551, %v779
          %v851 = vmul.f32 %v551, %v783
          %v852 = vmul.f32 %v555, %v771
          %v853 = vmul.f32 %v555, %v775
          %v854 = vmul.f32 %v555, %v779
          %v855 = vmul.f32 %v555, %v783
          %v856 = vmul.f32 %v559, %v771
          %v857 = vmul.f32 %v559, %v775
          %v858 = vmul.f32 %v559, %v779
          %v859 = vmul.f32 %v559, %v783
          %v860 = vmul.f32 %v563, %v771
          %v861 = vmul.f32 %v563, %v775
          %v862 = vmul.f32 %v563, %v779
          %v863 = vmul.f32 %v563, %v783
          %v864 = vmul.f32 %v567, %v771
          %v865 = vmul.f32 %v567, %v775
          %v866 = vmul.f32 %v567, %v779
          %v867 = vmul.f32 %v567, %v783
          %v868 = vmul.f32 %v571, %v771
          %v869 = vmul.f32 %v571, %v775
          %v870 = vmul.f32 %v571, %v779
          %v871 = vmul.f32 %v571, %v783
          %v872 = vmul.f32 %v575, %v771
          %v873 = vmul.f32 %v575, %v775
          %v874 = vmul.f32 %v575, %v779
          %v875 = vmul.f32 %v575, %v783
          %v876 = vmul.f32 %v579, %v771
          %v877 = vmul.f32 %v579, %v775
          %v878 = vmul.f32 %v579, %v779
          %v879 = vmul.f32 %v579, %v783
          %v880 = vmul.f32 %v583, %v771
          %v881 = vmul.f32 %v583, %v775
          %v882 = vmul.f32 %v583, %v779
          %v883 = vmul.f32 %v583, %v783
          %v884 = vmul.f32 %v587, %v771
          %v885 = vmul.f32 %v587, %v775
          %v886 = vmul.f32 %v587, %v779
          %v887 = vmul.f32 %v587, %v783
          %v888 = vmul.f32 %v591, %v771
          %v889 = vmul.f32 %v591, %v775
          %v890 = vmul.f32 %v591, %v779
          %v891 = vmul.f32 %v591, %v783
          %v892 = vmul.f32 %v595, %v771
          %v893 = vmul.f32 %v595, %v775
          %v894 = vmul.f32 %v595, %v779
          %v895 = vmul.f32 %v595, %v783
          %v896 = vmul.f32 %v599, %v771
          %v897 = vmul.f32 %v599, %v775
          %v898 = vmul.f32 %v599, %v779
          %v899 = vmul.f32 %v599, %v783
          %v900 = vmul.f32 %v603, %v771
          %v901 = vmul.f32 %v603, %v775
          %v902 = vmul.f32 %v603, %v779
          %v903 = vmul.f32 %v603, %v783
          %v904 = vmul.f32 %v607, %v771
          %v905 = vmul.f32 %v607, %v775
          %v906 = vmul.f32 %v607, %v779
          %v907 = vmul.f32 %v607, %v783
          %v908 = vmul.f32 %v611, %v771
          %v909 = vmul.f32 %v611, %v775
          %v910 = vmul.f32 %v611, %v779
          %v911 = vmul.f32 %v611, %v783
          %v912 = vmul.f32 %v618, %v771
          %v913 = vmul.f32 %v618, %v775
          %v914 = vmul.f32 %v618, %v779
          %v915 = vmul.f32 %v618, %v783
          %v916 = vmul.f32 %v622, %v771
          %v917 = vmul.f32 %v622, %v775
          %v918 = vmul.f32 %v622, %v779
          %v919 = vmul.f32 %v622, %v783
          %v920 = vmul.f32 %v626, %v771
          %v921 = vmul.f32 %v626, %v775
          %v922 = vmul.f32 %v626, %v779
          %v923 = vmul.f32 %v626, %v783
          %v924 = vmul.f32 %v630, %v771
          %v925 = vmul.f32 %v630, %v775
          %v926 = vmul.f32 %v630, %v779
          %v927 = vmul.f32 %v630, %v783
          %v928 = vmul.f32 %v634, %v771
          %v929 = vmul.f32 %v634, %v775
          %v930 = vmul.f32 %v634, %v779
          %v931 = vmul.f32 %v634, %v783
          %v932 = vmul.f32 %v638, %v771
          %v933 = vmul.f32 %v638, %v775
          %v934 = vmul.f32 %v638, %v779
          %v935 = vmul.f32 %v638, %v783
          %v936 = vmul.f32 %v642, %v771
          %v937 = vmul.f32 %v642, %v775
          %v938 = vmul.f32 %v642, %v779
          %v939 = vmul.f32 %v642, %v783
          %v940 = vmul.f32 %v646, %v771
          %v941 = vmul.f32 %v646, %v775
          %v942 = vmul.f32 %v646, %v779
          %v943 = vmul.f32 %v646, %v783
          %v944 = vmul.f32 %v650, %v771
          %v945 = vmul.f32 %v650, %v775
          %v946 = vmul.f32 %v650, %v779
          %v947 = vmul.f32 %v650, %v783
          %v948 = vmul.f32 %v654, %v771
          %v949 = vmul.f32 %v654, %v775
          %v950 = vmul.f32 %v654, %v779
          %v951 = vmul.f32 %v654, %v783
          %v952 = vmul.f32 %v658, %v771
          %v953 = vmul.f32 %v658, %v775
          %v954 = vmul.f32 %v658, %v779
          %v955 = vmul.f32 %v658, %v783
          %v956 = vmul.f32 %v662, %v771
          %v957 = vmul.f32 %v662, %v775
          %v958 = vmul.f32 %v662, %v779
          %v959 = vmul.f32 %v662, %v783
          %v960 = vmul.f32 %v666, %v771
          %v961 = vmul.f32 %v666, %v775
          %v962 = vmul.f32 %v666, %v779
          %v963 = vmul.f32 %v666, %v783
          %v964 = vmul.f32 %v670, %v771
          %v965 = vmul.f32 %v670, %v775
          %v966 = vmul.f32 %v670, %v779
          %v967 = vmul.f32 %v670, %v783
          %v968 = vmul.f32 %v674, %v771
          %v969 = vmul.f32 %v674, %v775
          %v970 = vmul.f32 %v674, %v779
          %v971 = vmul.f32 %v674, %v783
          %v972 = vmul.f32 %v678, %v771
          %v973 = vmul.f32 %v678, %v775
          %v974 = vmul.f32 %v678, %v779
          %v975 = vmul.f32 %v678, %v783
          %v976 = vmul.f32 %v685, %v771
          %v977 = vmul.f32 %v685, %v775
          %v978 = vmul.f32 %v685, %v779
          %v979 = vmul.f32 %v685, %v783
          %v980 = vmul.f32 %v689, %v771
          %v981 = vmul.f32 %v689, %v775
          %v982 = vmul.f32 %v689, %v779
          %v983 = vmul.f32 %v689, %v783
          %v984 = vmul.f32 %v693, %v771
          %v985 = vmul.f32 %v693, %v775
          %v986 = vmul.f32 %v693, %v779
          %v987 = vmul.f32 %v693, %v783
          %v988 = vmul.f32 %v697, %v771
          %v989 = vmul.f32 %v697, %v775
          %v990 = vmul.f32 %v697, %v779
          %v991 = vmul.f32 %v697, %v783
          %v992 = vmul.f32 %v701, %v771
          %v993 = vmul.f32 %v701, %v775
          %v994 = vmul.f32 %v701, %v779
          %v995 = vmul.f32 %v701, %v783
          %v996 = vmul.f32 %v705, %v771
          %v997 = vmul.f32 %v705, %v775
          %v998 = vmul.f32 %v705, %v779
          %v999 = vmul.f32 %v705, %v783
          %v1000 = vmul.f32 %v709, %v771
          %v1001 = vmul.f32 %v709, %v775
          %v1002 = vmul.f32 %v709, %v779
          %v1003 = vmul.f32 %v709, %v783
          %v1004 = vmul.f32 %v713, %v771
          %v1005 = vmul.f32 %v713, %v775
          %v1006 = vmul.f32 %v713, %v779
          %v1007 = vmul.f32 %v713, %v783
          %v1008 = vmul.f32 %v717, %v771
          %v1009 = vmul.f32 %v717, %v775
          %v1010 = vmul.f32 %v717, %v779
          %v1011 = vmul.f32 %v717, %v783
          %v1012 = vmul.f32 %v721, %v771
          %v1013 = vmul.f32 %v721, %v775
          %v1014 = vmul.f32 %v721, %v779
          %v1015 = vmul.f32 %v721, %v783
          %v1016 = vmul.f32 %v725, %v771
          %v1017 = vmul.f32 %v725, %v775
          %v1018 = vmul.f32 %v725, %v779
          %v1019 = vmul.f32 %v725, %v783
          %v1020 = vmul.f32 %v729, %v771
          %v1021 = vmul.f32 %v729, %v775
          %v1022 = vmul.f32 %v729, %v779
          %v1023 = vmul.f32 %v729, %v783
          %v1024 = vmul.f32 %v733, %v771
          %v1025 = vmul.f32 %v733, %v775
          %v1026 = vmul.f32 %v733, %v779
          %v1027 = vmul.f32 %v733, %v783
          %v1028 = vmul.f32 %v737, %v771
          %v1029 = vmul.f32 %v737, %v775
          %v1030 = vmul.f32 %v737, %v779
          %v1031 = vmul.f32 %v737, %v783
          %v1032 = vmul.f32 %v741, %v771
          %v1033 = vmul.f32 %v741, %v775
          %v1034 = vmul.f32 %v741, %v779
          %v1035 = vmul.f32 %v741, %v783
          %v1036 = vmul.f32 %v745, %v771
          %v1037 = vmul.f32 %v745, %v775
          %v1038 = vmul.f32 %v745, %v779
          %v1039 = vmul.f32 %v745, %v783
          %v1040 = vadd.f32 %v784, 0.0
          %v1041 = vadd.f32 %v785, 0.0
          %v1042 = vadd.f32 %v786, 0.0
          %v1043 = vadd.f32 %v787, 0.0
          %v1044 = vadd.f32 %v788, 0.0
          %v1045 = vadd.f32 %v789, 0.0
          %v1046 = vadd.f32 %v790, 0.0
          %v1047 = vadd.f32 %v791, 0.0
          %v1048 = vadd.f32 %v792, 0.0
          %v1049 = vadd.f32 %v793, 0.0
          %v1050 = vadd.f32 %v794, 0.0
          %v1051 = vadd.f32 %v795, 0.0
          %v1052 = vadd.f32 %v796, 0.0
          %v1053 = vadd.f32 %v797, 0.0
          %v1054 = vadd.f32 %v798, 0.0
          %v1055 = vadd.f32 %v799, 0.0
          %v1056 = vadd.f32 %v800, 0.0
          %v1057 = vadd.f32 %v801, 0.0
          %v1058 = vadd.f32 %v802, 0.0
          %v1059 = vadd.f32 %v803, 0.0
          %v1060 = vadd.f32 %v804, 0.0
          %v1061 = vadd.f32 %v805, 0.0
          %v1062 = vadd.f32 %v806, 0.0
          %v1063 = vadd.f32 %v807, 0.0
          %v1064 = vadd.f32 %v808, 0.0
          %v1065 = vadd.f32 %v809, 0.0
          %v1066 = vadd.f32 %v810, 0.0
          %v1067 = vadd.f32 %v811, 0.0
          %v1068 = vadd.f32 %v812, 0.0
          %v1069 = vadd.f32 %v813, 0.0
          %v1070 = vadd.f32 %v814, 0.0
          %v1071 = vadd.f32 %v815, 0.0
          %v1072 = vadd.f32 %v816, 0.0
          %v1073 = vadd.f32 %v817, 0.0
          %v1074 = vadd.f32 %v818, 0.0
          %v1075 = vadd.f32 %v819, 0.0
          %v1076 = vadd.f32 %v820, 0.0
          %v1077 = vadd.f32 %v821, 0.0
          %v1078 = vadd.f32 %v822, 0.0
          %v1079 = vadd.f32 %v823, 0.0
          %v1080 = vadd.f32 %v824, 0.0
          %v1081 = vadd.f32 %v825, 0.0
          %v1082 = vadd.f32 %v826, 0.0
          %v1083 = vadd.f32 %v827, 0.0
          %v1084 = vadd.f32 %v828, 0.0
          %v1085 = vadd.f32 %v829, 0.0
          %v1086 = vadd.f32 %v830, 0.0
          %v1087 = vadd.f32 %v831, 0.0
          %v1088 = vadd.f32 %v832, 0.0
          %v1089 = vadd.f32 %v833, 0.0
          %v1090 = vadd.f32 %v834, 0.0
          %v1091 = vadd.f32 %v835, 0.0
          %v1092 = vadd.f32 %v836, 0.0
          %v1093 = vadd.f32 %v837, 0.0
          %v1094 = vadd.f32 %v838, 0.0
          %v1095 = vadd.f32 %v839, 0.0
          %v1096 = vadd.f32 %v840, 0.0
          %v1097 = vadd.f32 %v841, 0.0
          %v1098 = vadd.f32 %v842, 0.0
          %v1099 = vadd.f32 %v843, 0.0
          %v1100 = vadd.f32 %v844, 0.0
          %v1101 = vadd.f32 %v845, 0.0
          %v1102 = vadd.f32 %v846, 0.0
          %v1103 = vadd.f32 %v847, 0.0
          %v1104 = vadd.f32 %v848, 0.0
          %v1105 = vadd.f32 %v849, 0.0
          %v1106 = vadd.f32 %v850, 0.0
          %v1107 = vadd.f32 %v851, 0.0
          %v1108 = vadd.f32 %v852, 0.0
          %v1109 = vadd.f32 %v853, 0.0
          %v1110 = vadd.f32 %v854, 0.0
          %v1111 = vadd.f32 %v855, 0.0
          %v1112 = vadd.f32 %v856, 0.0
          %v1113 = vadd.f32 %v857, 0.0
          %v1114 = vadd.f32 %v858, 0.0
          %v1115 = vadd.f32 %v859, 0.0
          %v1116 = vadd.f32 %v860, 0.0
          %v1117 = vadd.f32 %v861, 0.0
          %v1118 = vadd.f32 %v862, 0.0
          %v1119 = vadd.f32 %v863, 0.0
          %v1120 = vadd.f32 %v864, 0.0
          %v1121 = vadd.f32 %v865, 0.0
          %v1122 = vadd.f32 %v866, 0.0
          %v1123 = vadd.f32 %v867, 0.0
          %v1124 = vadd.f32 %v868, 0.0
          %v1125 = vadd.f32 %v869, 0.0
          %v1126 = vadd.f32 %v870, 0.0
          %v1127 = vadd.f32 %v871, 0.0
          %v1128 = vadd.f32 %v872, 0.0
          %v1129 = vadd.f32 %v873, 0.0
          %v1130 = vadd.f32 %v874, 0.0
          %v1131 = vadd.f32 %v875, 0.0
          %v1132 = vadd.f32 %v876, 0.0
          %v1133 = vadd.f32 %v877, 0.0
          %v1134 = vadd.f32 %v878, 0.0
          %v1135 = vadd.f32 %v879, 0.0
          %v1136 = vadd.f32 %v880, 0.0
          %v1137 = vadd.f32 %v881, 0.0
          %v1138 = vadd.f32 %v882, 0.0
          %v1139 = vadd.f32 %v883, 0.0
          %v1140 = vadd.f32 %v884, 0.0
          %v1141 = vadd.f32 %v885, 0.0
          %v1142 = vadd.f32 %v886, 0.0
          %v1143 = vadd.f32 %v887, 0.0
          %v1144 = vadd.f32 %v888, 0.0
          %v1145 = vadd.f32 %v889, 0.0
          %v1146 = vadd.f32 %v890, 0.0
          %v1147 = vadd.f32 %v891, 0.0
          %v1148 = vadd.f32 %v892, 0.0
          %v1149 = vadd.f32 %v893, 0.0
          %v1150 = vadd.f32 %v894, 0.0
          %v1151 = vadd.f32 %v895, 0.0
          %v1152 = vadd.f32 %v896, 0.0
          %v1153 = vadd.f32 %v897, 0.0
          %v1154 = vadd.f32 %v898, 0.0
          %v1155 = vadd.f32 %v899, 0.0
          %v1156 = vadd.f32 %v900, 0.0
          %v1157 = vadd.f32 %v901, 0.0
          %v1158 = vadd.f32 %v902, 0.0
          %v1159 = vadd.f32 %v903, 0.0
          %v1160 = vadd.f32 %v904, 0.0
          %v1161 = vadd.f32 %v905, 0.0
          %v1162 = vadd.f32 %v906, 0.0
          %v1163 = vadd.f32 %v907, 0.0
          %v1164 = vadd.f32 %v908, 0.0
          %v1165 = vadd.f32 %v909, 0.0
          %v1166 = vadd.f32 %v910, 0.0
          %v1167 = vadd.f32 %v911, 0.0
          %v1168 = vadd.f32 %v912, 0.0
          %v1169 = vadd.f32 %v913, 0.0
          %v1170 = vadd.f32 %v914, 0.0
          %v1171 = vadd.f32 %v915, 0.0
          %v1172 = vadd.f32 %v916, 0.0
          %v1173 = vadd.f32 %v917, 0.0
          %v1174 = vadd.f32 %v918, 0.0
          %v1175 = vadd.f32 %v919, 0.0
          %v1176 = vadd.f32 %v920, 0.0
          %v1177 = vadd.f32 %v921, 0.0
          %v1178 = vadd.f32 %v922, 0.0
          %v1179 = vadd.f32 %v923, 0.0
          %v1180 = vadd.f32 %v924, 0.0
          %v1181 = vadd.f32 %v925, 0.0
          %v1182 = vadd.f32 %v926, 0.0
          %v1183 = vadd.f32 %v927, 0.0
          %v1184 = vadd.f32 %v928, 0.0
          %v1185 = vadd.f32 %v929, 0.0
          %v1186 = vadd.f32 %v930, 0.0
          %v1187 = vadd.f32 %v931, 0.0
          %v1188 = vadd.f32 %v932, 0.0
          %v1189 = vadd.f32 %v933, 0.0
          %v1190 = vadd.f32 %v934, 0.0
          %v1191 = vadd.f32 %v935, 0.0
          %v1192 = vadd.f32 %v936, 0.0
          %v1193 = vadd.f32 %v937, 0.0
          %v1194 = vadd.f32 %v938, 0.0
          %v1195 = vadd.f32 %v939, 0.0
          %v1196 = vadd.f32 %v940, 0.0
          %v1197 = vadd.f32 %v941, 0.0
          %v1198 = vadd.f32 %v942, 0.0
          %v1199 = vadd.f32 %v943, 0.0
          %v1200 = vadd.f32 %v944, 0.0
          %v1201 = vadd.f32 %v945, 0.0
          %v1202 = vadd.f32 %v946, 0.0
          %v1203 = vadd.f32 %v947, 0.0
          %v1204 = vadd.f32 %v948, 0.0
          %v1205 = vadd.f32 %v949, 0.0
          %v1206 = vadd.f32 %v950, 0.0
          %v1207 = vadd.f32 %v951, 0.0
          %v1208 = vadd.f32 %v952, 0.0
          %v1209 = vadd.f32 %v953, 0.0
          %v1210 = vadd.f32 %v954, 0.0
          %v1211 = vadd.f32 %v955, 0.0
          %v1212 = vadd.f32 %v956, 0.0
          %v1213 = vadd.f32 %v957, 0.0
          %v1214 = vadd.f32 %v958, 0.0
          %v1215 = vadd.f32 %v959, 0.0
          %v1216 = vadd.f32 %v960, 0.0
          %v1217 = vadd.f32 %v961, 0.0
          %v1218 = vadd.f32 %v962, 0.0
          %v1219 = vadd.f32 %v963, 0.0
          %v1220 = vadd.f32 %v964, 0.0
          %v1221 = vadd.f32 %v965, 0.0
          %v1222 = vadd.f32 %v966, 0.0
          %v1223 = vadd.f32 %v967, 0.0
          %v1224 = vadd.f32 %v968, 0.0
          %v1225 = vadd.f32 %v969, 0.0
          %v1226 = vadd.f32 %v970, 0.0
          %v1227 = vadd.f32 %v971, 0.0
          %v1228 = vadd.f32 %v972, 0.0
          %v1229 = vadd.f32 %v973, 0.0
          %v1230 = vadd.f32 %v974, 0.0
          %v1231 = vadd.f32 %v975, 0.0
          %v1232 = vadd.f32 %v976, 0.0
          %v1233 = vadd.f32 %v977, 0.0
          %v1234 = vadd.f32 %v978, 0.0
          %v1235 = vadd.f32 %v979, 0.0
          %v1236 = vadd.f32 %v980, 0.0
          %v1237 = vadd.f32 %v981, 0.0
          %v1238 = vadd.f32 %v982, 0.0
          %v1239 = vadd.f32 %v983, 0.0
          %v1240 = vadd.f32 %v984, 0.0
          %v1241 = vadd.f32 %v985, 0.0
          %v1242 = vadd.f32 %v986, 0.0
          %v1243 = vadd.f32 %v987, 0.0
          %v1244 = vadd.f32 %v988, 0.0
          %v1245 = vadd.f32 %v989, 0.0
          %v1246 = vadd.f32 %v990, 0.0
          %v1247 = vadd.f32 %v991, 0.0
          %v1248 = vadd.f32 %v992, 0.0
          %v1249 = vadd.f32 %v993, 0.0
          %v1250 = vadd.f32 %v994, 0.0
          %v1251 = vadd.f32 %v995, 0.0
          %v1252 = vadd.f32 %v996, 0.0
          %v1253 = vadd.f32 %v997, 0.0
          %v1254 = vadd.f32 %v998, 0.0
          %v1255 = vadd.f32 %v999, 0.0
          %v1256 = vadd.f32 %v1000, 0.0
          %v1257 = vadd.f32 %v1001, 0.0
          %v1258 = vadd.f32 %v1002, 0.0
          %v1259 = vadd.f32 %v1003, 0.0
          %v1260 = vadd.f32 %v1004, 0.0
          %v1261 = vadd.f32 %v1005, 0.0
          %v1262 = vadd.f32 %v1006, 0.0
          %v1263 = vadd.f32 %v1007, 0.0
          %v1264 = vadd.f32 %v1008, 0.0
          %v1265 = vadd.f32 %v1009, 0.0
          %v1266 = vadd.f32 %v1010, 0.0
          %v1267 = vadd.f32 %v1011, 0.0
          %v1268 = vadd.f32 %v1012, 0.0
          %v1269 = vadd.f32 %v1013, 0.0
          %v1270 = vadd.f32 %v1014, 0.0
          %v1271 = vadd.f32 %v1015, 0.0
          %v1272 = vadd.f32 %v1016, 0.0
          %v1273 = vadd.f32 %v1017, 0.0
          %v1274 = vadd.f32 %v1018, 0.0
          %v1275 = vadd.f32 %v1019, 0.0
          %v1276 = vadd.f32 %v1020, 0.0
          %v1277 = vadd.f32 %v1021, 0.0
          %v1278 = vadd.f32 %v1022, 0.0
          %v1279 = vadd.f32 %v1023, 0.0
          %v1280 = vadd.f32 %v1024, 0.0
          %v1281 = vadd.f32 %v1025, 0.0
          %v1282 = vadd.f32 %v1026, 0.0
          %v1283 = vadd.f32 %v1027, 0.0
          %v1284 = vadd.f32 %v1028, 0.0
          %v1285 = vadd.f32 %v1029, 0.0
          %v1286 = vadd.f32 %v1030, 0.0
          %v1287 = vadd.f32 %v1031, 0.0
          %v1288 = vadd.f32 %v1032, 0.0
          %v1289 = vadd.f32 %v1033, 0.0
          %v1290 = vadd.f32 %v1034, 0.0
          %v1291 = vadd.f32 %v1035, 0.0
          %v1292 = vadd.f32 %v1036, 0.0
          %v1293 = vadd.f32 %v1037, 0.0
          %v1294 = vadd.f32 %v1038, 0.0
          %v1295 = vadd.f32 %v1039, 0.0
          %v1296 = vlaneseq
          %v1297 = vshrl.u32 %v1296, 7
          %v1298 = vsub.s32 1, %v1297
          %v1299 = vrot.slane %v452, %v1298
          %v1300 = vlaneseq
          %v1301 = vshrl.u32 %v1300, 7
          %v1302 = vsub.s32 5, %v1301
          %v1303 = vrot.slane %v452, %v1302
          %v1304 = vlaneseq
          %v1305 = vshrl.u32 %v1304, 7
          %v1306 = vsub.s32 1, %v1305
          %v1307 = vrot.slane %v453, %v1306
          %v1308 = vlaneseq
          %v1309 = vshrl.u32 %v1308, 7
          %v1310 = vsub.s32 5, %v1309
          %v1311 = vrot.slane %v453, %v1310
          %v1316 = vlaneseq
          %v1317 = vshrl.u32 %v1316, 7
          %v1318 = vsub.s32 1, %v1317
          %v1319 = vrot.slane %v1299, %v1318
          %1321 = vbcast.lane.b32.xlu0 %v1319, 256
          %v1322 = vpop.permute.xlu0 %1321
          %s1324 = sor.u32 256, 8
          %1325 = vbcast.lane.b32.xlu0 %v1319, %s1324
          %v1326 = vpop.permute.xlu0 %1325
          %s1328 = sor.u32 256, 16
          %1329 = vbcast.lane.b32.xlu0 %v1319, %s1328
          %v1330 = vpop.permute.xlu0 %1329
          %s1332 = sor.u32 256, 24
          %1333 = vbcast.lane.b32.xlu0 %v1319, %s1332
          %v1334 = vpop.permute.xlu0 %1333
          %s1336 = sor.u32 256, 32
          %1337 = vbcast.lane.b32.xlu0 %v1319, %s1336
          %v1338 = vpop.permute.xlu0 %1337
          %s1340 = sor.u32 256, 40
          %1341 = vbcast.lane.b32.xlu0 %v1319, %s1340
          %v1342 = vpop.permute.xlu0 %1341
          %s1344 = sor.u32 256, 48
          %1345 = vbcast.lane.b32.xlu0 %v1319, %s1344
          %v1346 = vpop.permute.xlu0 %1345
          %s1348 = sor.u32 256, 56
          %1349 = vbcast.lane.b32.xlu0 %v1319, %s1348
          %v1350 = vpop.permute.xlu0 %1349
          %s1352 = sor.u32 256, 64
          %1353 = vbcast.lane.b32.xlu0 %v1319, %s1352
          %v1354 = vpop.permute.xlu0 %1353
          %s1356 = sor.u32 256, 72
          %1357 = vbcast.lane.b32.xlu0 %v1319, %s1356
          %v1358 = vpop.permute.xlu0 %1357
          %s1360 = sor.u32 256, 80
          %1361 = vbcast.lane.b32.xlu0 %v1319, %s1360
          %v1362 = vpop.permute.xlu0 %1361
          %s1364 = sor.u32 256, 88
          %1365 = vbcast.lane.b32.xlu0 %v1319, %s1364
          %v1366 = vpop.permute.xlu0 %1365
          %s1368 = sor.u32 256, 96
          %1369 = vbcast.lane.b32.xlu0 %v1319, %s1368
          %v1370 = vpop.permute.xlu0 %1369
          %s1372 = sor.u32 256, 104
          %1373 = vbcast.lane.b32.xlu0 %v1319, %s1372
          %v1374 = vpop.permute.xlu0 %1373
          %s1376 = sor.u32 256, 112
          %1377 = vbcast.lane.b32.xlu0 %v1319, %s1376
          %v1378 = vpop.permute.xlu0 %1377
          %s1380 = sor.u32 256, 120
          %1381 = vbcast.lane.b32.xlu0 %v1319, %s1380
          %v1382 = vpop.permute.xlu0 %1381
          %v1383 = vlaneseq
          %v1384 = vshrl.u32 %v1383, 7
          %v1385 = vsub.s32 1, %v1384
          %v1386 = vrot.slane %v1303, %v1385
          %1388 = vbcast.lane.b32.xlu0 %v1386, 256
          %v1389 = vpop.permute.xlu0 %1388
          %s1391 = sor.u32 256, 8
          %1392 = vbcast.lane.b32.xlu0 %v1386, %s1391
          %v1393 = vpop.permute.xlu0 %1392
          %s1395 = sor.u32 256, 16
          %1396 = vbcast.lane.b32.xlu0 %v1386, %s1395
          %v1397 = vpop.permute.xlu0 %1396
          %s1399 = sor.u32 256, 24
          %1400 = vbcast.lane.b32.xlu0 %v1386, %s1399
          %v1401 = vpop.permute.xlu0 %1400
          %s1403 = sor.u32 256, 32
          %1404 = vbcast.lane.b32.xlu0 %v1386, %s1403
          %v1405 = vpop.permute.xlu0 %1404
          %s1407 = sor.u32 256, 40
          %1408 = vbcast.lane.b32.xlu0 %v1386, %s1407
          %v1409 = vpop.permute.xlu0 %1408
          %s1411 = sor.u32 256, 48
          %1412 = vbcast.lane.b32.xlu0 %v1386, %s1411
          %v1413 = vpop.permute.xlu0 %1412
          %s1415 = sor.u32 256, 56
          %1416 = vbcast.lane.b32.xlu0 %v1386, %s1415
          %v1417 = vpop.permute.xlu0 %1416
          %s1419 = sor.u32 256, 64
          %1420 = vbcast.lane.b32.xlu0 %v1386, %s1419
          %v1421 = vpop.permute.xlu0 %1420
          %s1423 = sor.u32 256, 72
          %1424 = vbcast.lane.b32.xlu0 %v1386, %s1423
          %v1425 = vpop.permute.xlu0 %1424
          %s1427 = sor.u32 256, 80
          %1428 = vbcast.lane.b32.xlu0 %v1386, %s1427
          %v1429 = vpop.permute.xlu0 %1428
          %s1431 = sor.u32 256, 88
          %1432 = vbcast.lane.b32.xlu0 %v1386, %s1431
          %v1433 = vpop.permute.xlu0 %1432
          %s1435 = sor.u32 256, 96
          %1436 = vbcast.lane.b32.xlu0 %v1386, %s1435
          %v1437 = vpop.permute.xlu0 %1436
          %s1439 = sor.u32 256, 104
          %1440 = vbcast.lane.b32.xlu0 %v1386, %s1439
          %v1441 = vpop.permute.xlu0 %1440
          %s1443 = sor.u32 256, 112
          %1444 = vbcast.lane.b32.xlu0 %v1386, %s1443
          %v1445 = vpop.permute.xlu0 %1444
          %s1447 = sor.u32 256, 120
          %1448 = vbcast.lane.b32.xlu0 %v1386, %s1447
          %v1449 = vpop.permute.xlu0 %1448
          %v1450 = vlaneseq
          %v1451 = vshrl.u32 %v1450, 7
          %v1452 = vsub.s32 1, %v1451
          %v1453 = vrot.slane %v1307, %v1452
          %1455 = vbcast.lane.b32.xlu0 %v1453, 256
          %v1456 = vpop.permute.xlu0 %1455
          %s1458 = sor.u32 256, 8
          %1459 = vbcast.lane.b32.xlu0 %v1453, %s1458
          %v1460 = vpop.permute.xlu0 %1459
          %s1462 = sor.u32 256, 16
          %1463 = vbcast.lane.b32.xlu0 %v1453, %s1462
          %v1464 = vpop.permute.xlu0 %1463
          %s1466 = sor.u32 256, 24
          %1467 = vbcast.lane.b32.xlu0 %v1453, %s1466
          %v1468 = vpop.permute.xlu0 %1467
          %s1470 = sor.u32 256, 32
          %1471 = vbcast.lane.b32.xlu0 %v1453, %s1470
          %v1472 = vpop.permute.xlu0 %1471
          %s1474 = sor.u32 256, 40
          %1475 = vbcast.lane.b32.xlu0 %v1453, %s1474
          %v1476 = vpop.permute.xlu0 %1475
          %s1478 = sor.u32 256, 48
          %1479 = vbcast.lane.b32.xlu0 %v1453, %s1478
          %v1480 = vpop.permute.xlu0 %1479
          %s1482 = sor.u32 256, 56
          %1483 = vbcast.lane.b32.xlu0 %v1453, %s1482
          %v1484 = vpop.permute.xlu0 %1483
          %s1486 = sor.u32 256, 64
          %1487 = vbcast.lane.b32.xlu0 %v1453, %s1486
          %v1488 = vpop.permute.xlu0 %1487
          %s1490 = sor.u32 256, 72
          %1491 = vbcast.lane.b32.xlu0 %v1453, %s1490
          %v1492 = vpop.permute.xlu0 %1491
          %s1494 = sor.u32 256, 80
          %1495 = vbcast.lane.b32.xlu0 %v1453, %s1494
          %v1496 = vpop.permute.xlu0 %1495
          %s1498 = sor.u32 256, 88
          %1499 = vbcast.lane.b32.xlu0 %v1453, %s1498
          %v1500 = vpop.permute.xlu0 %1499
          %s1502 = sor.u32 256, 96
          %1503 = vbcast.lane.b32.xlu0 %v1453, %s1502
          %v1504 = vpop.permute.xlu0 %1503
          %s1506 = sor.u32 256, 104
          %1507 = vbcast.lane.b32.xlu0 %v1453, %s1506
          %v1508 = vpop.permute.xlu0 %1507
          %s1510 = sor.u32 256, 112
          %1511 = vbcast.lane.b32.xlu0 %v1453, %s1510
          %v1512 = vpop.permute.xlu0 %1511
          %s1514 = sor.u32 256, 120
          %1515 = vbcast.lane.b32.xlu0 %v1453, %s1514
          %v1516 = vpop.permute.xlu0 %1515
          %v1517 = vlaneseq
          %v1518 = vshrl.u32 %v1517, 7
          %v1519 = vsub.s32 1, %v1518
          %v1520 = vrot.slane %v1311, %v1519
          %1522 = vbcast.lane.b32.xlu0 %v1520, 256
          %v1523 = vpop.permute.xlu0 %1522
          %s1525 = sor.u32 256, 8
          %1526 = vbcast.lane.b32.xlu0 %v1520, %s1525
          %v1527 = vpop.permute.xlu0 %1526
          %s1529 = sor.u32 256, 16
          %1530 = vbcast.lane.b32.xlu0 %v1520, %s1529
          %v1531 = vpop.permute.xlu0 %1530
          %s1533 = sor.u32 256, 24
          %1534 = vbcast.lane.b32.xlu0 %v1520, %s1533
          %v1535 = vpop.permute.xlu0 %1534
          %s1537 = sor.u32 256, 32
          %1538 = vbcast.lane.b32.xlu0 %v1520, %s1537
          %v1539 = vpop.permute.xlu0 %1538
          %s1541 = sor.u32 256, 40
          %1542 = vbcast.lane.b32.xlu0 %v1520, %s1541
          %v1543 = vpop.permute.xlu0 %1542
          %s1545 = sor.u32 256, 48
          %1546 = vbcast.lane.b32.xlu0 %v1520, %s1545
          %v1547 = vpop.permute.xlu0 %1546
          %s1549 = sor.u32 256, 56
          %1550 = vbcast.lane.b32.xlu0 %v1520, %s1549
          %v1551 = vpop.permute.xlu0 %1550
          %s1553 = sor.u32 256, 64
          %1554 = vbcast.lane.b32.xlu0 %v1520, %s1553
          %v1555 = vpop.permute.xlu0 %1554
          %s1557 = sor.u32 256, 72
          %1558 = vbcast.lane.b32.xlu0 %v1520, %s1557
          %v1559 = vpop.permute.xlu0 %1558
          %s1561 = sor.u32 256, 80
          %1562 = vbcast.lane.b32.xlu0 %v1520, %s1561
          %v1563 = vpop.permute.xlu0 %1562
          %s1565 = sor.u32 256, 88
          %1566 = vbcast.lane.b32.xlu0 %v1520, %s1565
          %v1567 = vpop.permute.xlu0 %1566
          %s1569 = sor.u32 256, 96
          %1570 = vbcast.lane.b32.xlu0 %v1520, %s1569
          %v1571 = vpop.permute.xlu0 %1570
          %s1573 = sor.u32 256, 104
          %1574 = vbcast.lane.b32.xlu0 %v1520, %s1573
          %v1575 = vpop.permute.xlu0 %1574
          %s1577 = sor.u32 256, 112
          %1578 = vbcast.lane.b32.xlu0 %v1520, %s1577
          %v1579 = vpop.permute.xlu0 %1578
          %s1581 = sor.u32 256, 120
          %1582 = vbcast.lane.b32.xlu0 %v1520, %s1581
          %v1583 = vpop.permute.xlu0 %1582
          %v1584 = vlaneseq
          %v1585 = vshrl.u32 %v1584, 7
          %v1586 = vsub.s32 1, %v1585
          %v1587 = vrot.slane %v454, %v1586
          %v1588 = vlaneseq
          %v1589 = vshrl.u32 %v1588, 7
          %v1590 = vsub.s32 5, %v1589
          %v1591 = vrot.slane %v454, %v1590
          %v1592 = vlaneseq
          %v1593 = vshrl.u32 %v1592, 7
          %v1594 = vsub.s32 1, %v1593
          %v1595 = vrot.slane %v455, %v1594
          %v1596 = vlaneseq
          %v1597 = vshrl.u32 %v1596, 7
          %v1598 = vsub.s32 5, %v1597
          %v1599 = vrot.slane %v455, %v1598
          %v1604 = vlaneseq
          %v1605 = vshrl.u32 %v1604, 7
          %v1606 = vsub.s32 1, %v1605
          %v1607 = vrot.slane %v1587, %v1606
          %v1608 = vlaneseq
          %v1609 = vshrl.u32 %v1608, 7
          %v1610 = vsub.s32 1, %v1609
          %v1611 = vrot.slane %v1591, %v1610
          %v1612 = vlaneseq
          %v1613 = vshrl.u32 %v1612, 7
          %v1614 = vsub.s32 1, %v1613
          %v1615 = vrot.slane %v1595, %v1614
          %v1616 = vlaneseq
          %v1617 = vshrl.u32 %v1616, 7
          %v1618 = vsub.s32 1, %v1617
          %v1619 = vrot.slane %v1599, %v1618
          %v1620 = vmul.f32 %v1322, %v1607
          %v1621 = vmul.f32 %v1322, %v1611
          %v1622 = vmul.f32 %v1322, %v1615
          %v1623 = vmul.f32 %v1322, %v1619
          %v1624 = vmul.f32 %v1326, %v1607
          %v1625 = vmul.f32 %v1326, %v1611
          %v1626 = vmul.f32 %v1326, %v1615
          %v1627 = vmul.f32 %v1326, %v1619
          %v1628 = vmul.f32 %v1330, %v1607
          %v1629 = vmul.f32 %v1330, %v1611
          %v1630 = vmul.f32 %v1330, %v1615
          %v1631 = vmul.f32 %v1330, %v1619
          %v1632 = vmul.f32 %v1334, %v1607
          %v1633 = vmul.f32 %v1334, %v1611
          %v1634 = vmul.f32 %v1334, %v1615
          %v1635 = vmul.f32 %v1334, %v1619
          %v1636 = vmul.f32 %v1338, %v1607
          %v1637 = vmul.f32 %v1338, %v1611
          %v1638 = vmul.f32 %v1338, %v1615
          %v1639 = vmul.f32 %v1338, %v1619
          %v1640 = vmul.f32 %v1342, %v1607
          %v1641 = vmul.f32 %v1342, %v1611
          %v1642 = vmul.f32 %v1342, %v1615
          %v1643 = vmul.f32 %v1342, %v1619
          %v1644 = vmul.f32 %v1346, %v1607
          %v1645 = vmul.f32 %v1346, %v1611
          %v1646 = vmul.f32 %v1346, %v1615
          %v1647 = vmul.f32 %v1346, %v1619
          %v1648 = vmul.f32 %v1350, %v1607
          %v1649 = vmul.f32 %v1350, %v1611
          %v1650 = vmul.f32 %v1350, %v1615
          %v1651 = vmul.f32 %v1350, %v1619
          %v1652 = vmul.f32 %v1354, %v1607
          %v1653 = vmul.f32 %v1354, %v1611
          %v1654 = vmul.f32 %v1354, %v1615
          %v1655 = vmul.f32 %v1354, %v1619
          %v1656 = vmul.f32 %v1358, %v1607
          %v1657 = vmul.f32 %v1358, %v1611
          %v1658 = vmul.f32 %v1358, %v1615
          %v1659 = vmul.f32 %v1358, %v1619
          %v1660 = vmul.f32 %v1362, %v1607
          %v1661 = vmul.f32 %v1362, %v1611
          %v1662 = vmul.f32 %v1362, %v1615
          %v1663 = vmul.f32 %v1362, %v1619
          %v1664 = vmul.f32 %v1366, %v1607
          %v1665 = vmul.f32 %v1366, %v1611
          %v1666 = vmul.f32 %v1366, %v1615
          %v1667 = vmul.f32 %v1366, %v1619
          %v1668 = vmul.f32 %v1370, %v1607
          %v1669 = vmul.f32 %v1370, %v1611
          %v1670 = vmul.f32 %v1370, %v1615
          %v1671 = vmul.f32 %v1370, %v1619
          %v1672 = vmul.f32 %v1374, %v1607
          %v1673 = vmul.f32 %v1374, %v1611
          %v1674 = vmul.f32 %v1374, %v1615
          %v1675 = vmul.f32 %v1374, %v1619
          %v1676 = vmul.f32 %v1378, %v1607
          %v1677 = vmul.f32 %v1378, %v1611
          %v1678 = vmul.f32 %v1378, %v1615
          %v1679 = vmul.f32 %v1378, %v1619
          %v1680 = vmul.f32 %v1382, %v1607
          %v1681 = vmul.f32 %v1382, %v1611
          %v1682 = vmul.f32 %v1382, %v1615
          %v1683 = vmul.f32 %v1382, %v1619
          %v1684 = vmul.f32 %v1389, %v1607
          %v1685 = vmul.f32 %v1389, %v1611
          %v1686 = vmul.f32 %v1389, %v1615
          %v1687 = vmul.f32 %v1389, %v1619
          %v1688 = vmul.f32 %v1393, %v1607
          %v1689 = vmul.f32 %v1393, %v1611
          %v1690 = vmul.f32 %v1393, %v1615
          %v1691 = vmul.f32 %v1393, %v1619
          %v1692 = vmul.f32 %v1397, %v1607
          %v1693 = vmul.f32 %v1397, %v1611
          %v1694 = vmul.f32 %v1397, %v1615
          %v1695 = vmul.f32 %v1397, %v1619
          %v1696 = vmul.f32 %v1401, %v1607
          %v1697 = vmul.f32 %v1401, %v1611
          %v1698 = vmul.f32 %v1401, %v1615
          %v1699 = vmul.f32 %v1401, %v1619
          %v1700 = vmul.f32 %v1405, %v1607
          %v1701 = vmul.f32 %v1405, %v1611
          %v1702 = vmul.f32 %v1405, %v1615
          %v1703 = vmul.f32 %v1405, %v1619
          %v1704 = vmul.f32 %v1409, %v1607
          %v1705 = vmul.f32 %v1409, %v1611
          %v1706 = vmul.f32 %v1409, %v1615
          %v1707 = vmul.f32 %v1409, %v1619
          %v1708 = vmul.f32 %v1413, %v1607
          %v1709 = vmul.f32 %v1413, %v1611
          %v1710 = vmul.f32 %v1413, %v1615
          %v1711 = vmul.f32 %v1413, %v1619
          %v1712 = vmul.f32 %v1417, %v1607
          %v1713 = vmul.f32 %v1417, %v1611
          %v1714 = vmul.f32 %v1417, %v1615
          %v1715 = vmul.f32 %v1417, %v1619
          %v1716 = vmul.f32 %v1421, %v1607
          %v1717 = vmul.f32 %v1421, %v1611
          %v1718 = vmul.f32 %v1421, %v1615
          %v1719 = vmul.f32 %v1421, %v1619
          %v1720 = vmul.f32 %v1425, %v1607
          %v1721 = vmul.f32 %v1425, %v1611
          %v1722 = vmul.f32 %v1425, %v1615
          %v1723 = vmul.f32 %v1425, %v1619
          %v1724 = vmul.f32 %v1429, %v1607
          %v1725 = vmul.f32 %v1429, %v1611
          %v1726 = vmul.f32 %v1429, %v1615
          %v1727 = vmul.f32 %v1429, %v1619
          %v1728 = vmul.f32 %v1433, %v1607
          %v1729 = vmul.f32 %v1433, %v1611
          %v1730 = vmul.f32 %v1433, %v1615
          %v1731 = vmul.f32 %v1433, %v1619
          %v1732 = vmul.f32 %v1437, %v1607
          %v1733 = vmul.f32 %v1437, %v1611
          %v1734 = vmul.f32 %v1437, %v1615
          %v1735 = vmul.f32 %v1437, %v1619
          %v1736 = vmul.f32 %v1441, %v1607
          %v1737 = vmul.f32 %v1441, %v1611
          %v1738 = vmul.f32 %v1441, %v1615
          %v1739 = vmul.f32 %v1441, %v1619
          %v1740 = vmul.f32 %v1445, %v1607
          %v1741 = vmul.f32 %v1445, %v1611
          %v1742 = vmul.f32 %v1445, %v1615
          %v1743 = vmul.f32 %v1445, %v1619
          %v1744 = vmul.f32 %v1449, %v1607
          %v1745 = vmul.f32 %v1449, %v1611
          %v1746 = vmul.f32 %v1449, %v1615
          %v1747 = vmul.f32 %v1449, %v1619
          %v1748 = vmul.f32 %v1456, %v1607
          %v1749 = vmul.f32 %v1456, %v1611
          %v1750 = vmul.f32 %v1456, %v1615
          %v1751 = vmul.f32 %v1456, %v1619
          %v1752 = vmul.f32 %v1460, %v1607
          %v1753 = vmul.f32 %v1460, %v1611
          %v1754 = vmul.f32 %v1460, %v1615
          %v1755 = vmul.f32 %v1460, %v1619
          %v1756 = vmul.f32 %v1464, %v1607
          %v1757 = vmul.f32 %v1464, %v1611
          %v1758 = vmul.f32 %v1464, %v1615
          %v1759 = vmul.f32 %v1464, %v1619
          %v1760 = vmul.f32 %v1468, %v1607
          %v1761 = vmul.f32 %v1468, %v1611
          %v1762 = vmul.f32 %v1468, %v1615
          %v1763 = vmul.f32 %v1468, %v1619
          %v1764 = vmul.f32 %v1472, %v1607
          %v1765 = vmul.f32 %v1472, %v1611
          %v1766 = vmul.f32 %v1472, %v1615
          %v1767 = vmul.f32 %v1472, %v1619
          %v1768 = vmul.f32 %v1476, %v1607
          %v1769 = vmul.f32 %v1476, %v1611
          %v1770 = vmul.f32 %v1476, %v1615
          %v1771 = vmul.f32 %v1476, %v1619
          %v1772 = vmul.f32 %v1480, %v1607
          %v1773 = vmul.f32 %v1480, %v1611
          %v1774 = vmul.f32 %v1480, %v1615
          %v1775 = vmul.f32 %v1480, %v1619
          %v1776 = vmul.f32 %v1484, %v1607
          %v1777 = vmul.f32 %v1484, %v1611
          %v1778 = vmul.f32 %v1484, %v1615
          %v1779 = vmul.f32 %v1484, %v1619
          %v1780 = vmul.f32 %v1488, %v1607
          %v1781 = vmul.f32 %v1488, %v1611
          %v1782 = vmul.f32 %v1488, %v1615
          %v1783 = vmul.f32 %v1488, %v1619
          %v1784 = vmul.f32 %v1492, %v1607
          %v1785 = vmul.f32 %v1492, %v1611
          %v1786 = vmul.f32 %v1492, %v1615
          %v1787 = vmul.f32 %v1492, %v1619
          %v1788 = vmul.f32 %v1496, %v1607
          %v1789 = vmul.f32 %v1496, %v1611
          %v1790 = vmul.f32 %v1496, %v1615
          %v1791 = vmul.f32 %v1496, %v1619
          %v1792 = vmul.f32 %v1500, %v1607
          %v1793 = vmul.f32 %v1500, %v1611
          %v1794 = vmul.f32 %v1500, %v1615
          %v1795 = vmul.f32 %v1500, %v1619
          %v1796 = vmul.f32 %v1504, %v1607
          %v1797 = vmul.f32 %v1504, %v1611
          %v1798 = vmul.f32 %v1504, %v1615
          %v1799 = vmul.f32 %v1504, %v1619
          %v1800 = vmul.f32 %v1508, %v1607
          %v1801 = vmul.f32 %v1508, %v1611
          %v1802 = vmul.f32 %v1508, %v1615
          %v1803 = vmul.f32 %v1508, %v1619
          %v1804 = vmul.f32 %v1512, %v1607
          %v1805 = vmul.f32 %v1512, %v1611
          %v1806 = vmul.f32 %v1512, %v1615
          %v1807 = vmul.f32 %v1512, %v1619
          %v1808 = vmul.f32 %v1516, %v1607
          %v1809 = vmul.f32 %v1516, %v1611
          %v1810 = vmul.f32 %v1516, %v1615
          %v1811 = vmul.f32 %v1516, %v1619
          %v1812 = vmul.f32 %v1523, %v1607
          %v1813 = vmul.f32 %v1523, %v1611
          %v1814 = vmul.f32 %v1523, %v1615
          %v1815 = vmul.f32 %v1523, %v1619
          %v1816 = vmul.f32 %v1527, %v1607
          %v1817 = vmul.f32 %v1527, %v1611
          %v1818 = vmul.f32 %v1527, %v1615
          %v1819 = vmul.f32 %v1527, %v1619
          %v1820 = vmul.f32 %v1531, %v1607
          %v1821 = vmul.f32 %v1531, %v1611
          %v1822 = vmul.f32 %v1531, %v1615
          %v1823 = vmul.f32 %v1531, %v1619
          %v1824 = vmul.f32 %v1535, %v1607
          %v1825 = vmul.f32 %v1535, %v1611
          %v1826 = vmul.f32 %v1535, %v1615
          %v1827 = vmul.f32 %v1535, %v1619
          %v1828 = vmul.f32 %v1539, %v1607
          %v1829 = vmul.f32 %v1539, %v1611
          %v1830 = vmul.f32 %v1539, %v1615
          %v1831 = vmul.f32 %v1539, %v1619
          %v1832 = vmul.f32 %v1543, %v1607
          %v1833 = vmul.f32 %v1543, %v1611
          %v1834 = vmul.f32 %v1543, %v1615
          %v1835 = vmul.f32 %v1543, %v1619
          %v1836 = vmul.f32 %v1547, %v1607
          %v1837 = vmul.f32 %v1547, %v1611
          %v1838 = vmul.f32 %v1547, %v1615
          %v1839 = vmul.f32 %v1547, %v1619
          %v1840 = vmul.f32 %v1551, %v1607
          %v1841 = vmul.f32 %v1551, %v1611
          %v1842 = vmul.f32 %v1551, %v1615
          %v1843 = vmul.f32 %v1551, %v1619
          %v1844 = vmul.f32 %v1555, %v1607
          %v1845 = vmul.f32 %v1555, %v1611
          %v1846 = vmul.f32 %v1555, %v1615
          %v1847 = vmul.f32 %v1555, %v1619
          %v1848 = vmul.f32 %v1559, %v1607
          %v1849 = vmul.f32 %v1559, %v1611
          %v1850 = vmul.f32 %v1559, %v1615
          %v1851 = vmul.f32 %v1559, %v1619
          %v1852 = vmul.f32 %v1563, %v1607
          %v1853 = vmul.f32 %v1563, %v1611
          %v1854 = vmul.f32 %v1563, %v1615
          %v1855 = vmul.f32 %v1563, %v1619
          %v1856 = vmul.f32 %v1567, %v1607
          %v1857 = vmul.f32 %v1567, %v1611
          %v1858 = vmul.f32 %v1567, %v1615
          %v1859 = vmul.f32 %v1567, %v1619
          %v1860 = vmul.f32 %v1571, %v1607
          %v1861 = vmul.f32 %v1571, %v1611
          %v1862 = vmul.f32 %v1571, %v1615
          %v1863 = vmul.f32 %v1571, %v1619
          %v1864 = vmul.f32 %v1575, %v1607
          %v1865 = vmul.f32 %v1575, %v1611
          %v1866 = vmul.f32 %v1575, %v1615
          %v1867 = vmul.f32 %v1575, %v1619
          %v1868 = vmul.f32 %v1579, %v1607
          %v1869 = vmul.f32 %v1579, %v1611
          %v1870 = vmul.f32 %v1579, %v1615
          %v1871 = vmul.f32 %v1579, %v1619
          %v1872 = vmul.f32 %v1583, %v1607
          %v1873 = vmul.f32 %v1583, %v1611
          %v1874 = vmul.f32 %v1583, %v1615
          %v1875 = vmul.f32 %v1583, %v1619
          %v1876 = vadd.f32 %v1040, %v1620
          %v1877 = vadd.f32 %v1041, %v1621
          %v1878 = vadd.f32 %v1042, %v1622
          %v1879 = vadd.f32 %v1043, %v1623
          %v1880 = vadd.f32 %v1044, %v1624
          %v1881 = vadd.f32 %v1045, %v1625
          %v1882 = vadd.f32 %v1046, %v1626
          %v1883 = vadd.f32 %v1047, %v1627
          %v1884 = vadd.f32 %v1048, %v1628
          %v1885 = vadd.f32 %v1049, %v1629
          %v1886 = vadd.f32 %v1050, %v1630
          %v1887 = vadd.f32 %v1051, %v1631
          %v1888 = vadd.f32 %v1052, %v1632
          %v1889 = vadd.f32 %v1053, %v1633
          %v1890 = vadd.f32 %v1054, %v1634
          %v1891 = vadd.f32 %v1055, %v1635
          %v1892 = vadd.f32 %v1056, %v1636
          %v1893 = vadd.f32 %v1057, %v1637
          %v1894 = vadd.f32 %v1058, %v1638
          %v1895 = vadd.f32 %v1059, %v1639
          %v1896 = vadd.f32 %v1060, %v1640
          %v1897 = vadd.f32 %v1061, %v1641
          %v1898 = vadd.f32 %v1062, %v1642
          %v1899 = vadd.f32 %v1063, %v1643
          %v1900 = vadd.f32 %v1064, %v1644
          %v1901 = vadd.f32 %v1065, %v1645
          %v1902 = vadd.f32 %v1066, %v1646
          %v1903 = vadd.f32 %v1067, %v1647
          %v1904 = vadd.f32 %v1068, %v1648
          %v1905 = vadd.f32 %v1069, %v1649
          %v1906 = vadd.f32 %v1070, %v1650
          %v1907 = vadd.f32 %v1071, %v1651
          %v1908 = vadd.f32 %v1072, %v1652
          %v1909 = vadd.f32 %v1073, %v1653
          %v1910 = vadd.f32 %v1074, %v1654
          %v1911 = vadd.f32 %v1075, %v1655
          %v1912 = vadd.f32 %v1076, %v1656
          %v1913 = vadd.f32 %v1077, %v1657
          %v1914 = vadd.f32 %v1078, %v1658
          %v1915 = vadd.f32 %v1079, %v1659
          %v1916 = vadd.f32 %v1080, %v1660
          %v1917 = vadd.f32 %v1081, %v1661
          %v1918 = vadd.f32 %v1082, %v1662
          %v1919 = vadd.f32 %v1083, %v1663
          %v1920 = vadd.f32 %v1084, %v1664
          %v1921 = vadd.f32 %v1085, %v1665
          %v1922 = vadd.f32 %v1086, %v1666
          %v1923 = vadd.f32 %v1087, %v1667
          %v1924 = vadd.f32 %v1088, %v1668
          %v1925 = vadd.f32 %v1089, %v1669
          %v1926 = vadd.f32 %v1090, %v1670
          %v1927 = vadd.f32 %v1091, %v1671
          %v1928 = vadd.f32 %v1092, %v1672
          %v1929 = vadd.f32 %v1093, %v1673
          %v1930 = vadd.f32 %v1094, %v1674
          %v1931 = vadd.f32 %v1095, %v1675
          %v1932 = vadd.f32 %v1096, %v1676
          %v1933 = vadd.f32 %v1097, %v1677
          %v1934 = vadd.f32 %v1098, %v1678
          %v1935 = vadd.f32 %v1099, %v1679
          %v1936 = vadd.f32 %v1100, %v1680
          %v1937 = vadd.f32 %v1101, %v1681
          %v1938 = vadd.f32 %v1102, %v1682
          %v1939 = vadd.f32 %v1103, %v1683
          %v1940 = vadd.f32 %v1104, %v1684
          %v1941 = vadd.f32 %v1105, %v1685
          %v1942 = vadd.f32 %v1106, %v1686
          %v1943 = vadd.f32 %v1107, %v1687
          %v1944 = vadd.f32 %v1108, %v1688
          %v1945 = vadd.f32 %v1109, %v1689
          %v1946 = vadd.f32 %v1110, %v1690
          %v1947 = vadd.f32 %v1111, %v1691
          %v1948 = vadd.f32 %v1112, %v1692
          %v1949 = vadd.f32 %v1113, %v1693
          %v1950 = vadd.f32 %v1114, %v1694
          %v1951 = vadd.f32 %v1115, %v1695
          %v1952 = vadd.f32 %v1116, %v1696
          %v1953 = vadd.f32 %v1117, %v1697
          %v1954 = vadd.f32 %v1118, %v1698
          %v1955 = vadd.f32 %v1119, %v1699
          %v1956 = vadd.f32 %v1120, %v1700
          %v1957 = vadd.f32 %v1121, %v1701
          %v1958 = vadd.f32 %v1122, %v1702
          %v1959 = vadd.f32 %v1123, %v1703
          %v1960 = vadd.f32 %v1124, %v1704
          %v1961 = vadd.f32 %v1125, %v1705
          %v1962 = vadd.f32 %v1126, %v1706
          %v1963 = vadd.f32 %v1127, %v1707
          %v1964 = vadd.f32 %v1128, %v1708
          %v1965 = vadd.f32 %v1129, %v1709
          %v1966 = vadd.f32 %v1130, %v1710
          %v1967 = vadd.f32 %v1131, %v1711
          %v1968 = vadd.f32 %v1132, %v1712
          %v1969 = vadd.f32 %v1133, %v1713
          %v1970 = vadd.f32 %v1134, %v1714
          %v1971 = vadd.f32 %v1135, %v1715
          %v1972 = vadd.f32 %v1136, %v1716
          %v1973 = vadd.f32 %v1137, %v1717
          %v1974 = vadd.f32 %v1138, %v1718
          %v1975 = vadd.f32 %v1139, %v1719
          %v1976 = vadd.f32 %v1140, %v1720
          %v1977 = vadd.f32 %v1141, %v1721
          %v1978 = vadd.f32 %v1142, %v1722
          %v1979 = vadd.f32 %v1143, %v1723
          %v1980 = vadd.f32 %v1144, %v1724
          %v1981 = vadd.f32 %v1145, %v1725
          %v1982 = vadd.f32 %v1146, %v1726
          %v1983 = vadd.f32 %v1147, %v1727
          %v1984 = vadd.f32 %v1148, %v1728
          %v1985 = vadd.f32 %v1149, %v1729
          %v1986 = vadd.f32 %v1150, %v1730
          %v1987 = vadd.f32 %v1151, %v1731
          %v1988 = vadd.f32 %v1152, %v1732
          %v1989 = vadd.f32 %v1153, %v1733
          %v1990 = vadd.f32 %v1154, %v1734
          %v1991 = vadd.f32 %v1155, %v1735
          %v1992 = vadd.f32 %v1156, %v1736
          %v1993 = vadd.f32 %v1157, %v1737
          %v1994 = vadd.f32 %v1158, %v1738
          %v1995 = vadd.f32 %v1159, %v1739
          %v1996 = vadd.f32 %v1160, %v1740
          %v1997 = vadd.f32 %v1161, %v1741
          %v1998 = vadd.f32 %v1162, %v1742
          %v1999 = vadd.f32 %v1163, %v1743
          %v2000 = vadd.f32 %v1164, %v1744
          %v2001 = vadd.f32 %v1165, %v1745
          %v2002 = vadd.f32 %v1166, %v1746
          %v2003 = vadd.f32 %v1167, %v1747
          %v2004 = vadd.f32 %v1168, %v1748
          %v2005 = vadd.f32 %v1169, %v1749
          %v2006 = vadd.f32 %v1170, %v1750
          %v2007 = vadd.f32 %v1171, %v1751
          %v2008 = vadd.f32 %v1172, %v1752
          %v2009 = vadd.f32 %v1173, %v1753
          %v2010 = vadd.f32 %v1174, %v1754
          %v2011 = vadd.f32 %v1175, %v1755
          %v2012 = vadd.f32 %v1176, %v1756
          %v2013 = vadd.f32 %v1177, %v1757
          %v2014 = vadd.f32 %v1178, %v1758
          %v2015 = vadd.f32 %v1179, %v1759
          %v2016 = vadd.f32 %v1180, %v1760
          %v2017 = vadd.f32 %v1181, %v1761
          %v2018 = vadd.f32 %v1182, %v1762
          %v2019 = vadd.f32 %v1183, %v1763
          %v2020 = vadd.f32 %v1184, %v1764
          %v2021 = vadd.f32 %v1185, %v1765
          %v2022 = vadd.f32 %v1186, %v1766
          %v2023 = vadd.f32 %v1187, %v1767
          %v2024 = vadd.f32 %v1188, %v1768
          %v2025 = vadd.f32 %v1189, %v1769
          %v2026 = vadd.f32 %v1190, %v1770
          %v2027 = vadd.f32 %v1191, %v1771
          %v2028 = vadd.f32 %v1192, %v1772
          %v2029 = vadd.f32 %v1193, %v1773
          %v2030 = vadd.f32 %v1194, %v1774
          %v2031 = vadd.f32 %v1195, %v1775
          %v2032 = vadd.f32 %v1196, %v1776
          %v2033 = vadd.f32 %v1197, %v1777
          %v2034 = vadd.f32 %v1198, %v1778
          %v2035 = vadd.f32 %v1199, %v1779
          %v2036 = vadd.f32 %v1200, %v1780
          %v2037 = vadd.f32 %v1201, %v1781
          %v2038 = vadd.f32 %v1202, %v1782
          %v2039 = vadd.f32 %v1203, %v1783
          %v2040 = vadd.f32 %v1204, %v1784
          %v2041 = vadd.f32 %v1205, %v1785
          %v2042 = vadd.f32 %v1206, %v1786
          %v2043 = vadd.f32 %v1207, %v1787
          %v2044 = vadd.f32 %v1208, %v1788
          %v2045 = vadd.f32 %v1209, %v1789
          %v2046 = vadd.f32 %v1210, %v1790
          %v2047 = vadd.f32 %v1211, %v1791
          %v2048 = vadd.f32 %v1212, %v1792
          %v2049 = vadd.f32 %v1213, %v1793
          %v2050 = vadd.f32 %v1214, %v1794
          %v2051 = vadd.f32 %v1215, %v1795
          %v2052 = vadd.f32 %v1216, %v1796
          %v2053 = vadd.f32 %v1217, %v1797
          %v2054 = vadd.f32 %v1218, %v1798
          %v2055 = vadd.f32 %v1219, %v1799
          %v2056 = vadd.f32 %v1220, %v1800
          %v2057 = vadd.f32 %v1221, %v1801
          %v2058 = vadd.f32 %v1222, %v1802
          %v2059 = vadd.f32 %v1223, %v1803
          %v2060 = vadd.f32 %v1224, %v1804
          %v2061 = vadd.f32 %v1225, %v1805
          %v2062 = vadd.f32 %v1226, %v1806
          %v2063 = vadd.f32 %v1227, %v1807
          %v2064 = vadd.f32 %v1228, %v1808
          %v2065 = vadd.f32 %v1229, %v1809
          %v2066 = vadd.f32 %v1230, %v1810
          %v2067 = vadd.f32 %v1231, %v1811
          %v2068 = vadd.f32 %v1232, %v1812
          %v2069 = vadd.f32 %v1233, %v1813
          %v2070 = vadd.f32 %v1234, %v1814
          %v2071 = vadd.f32 %v1235, %v1815
          %v2072 = vadd.f32 %v1236, %v1816
          %v2073 = vadd.f32 %v1237, %v1817
          %v2074 = vadd.f32 %v1238, %v1818
          %v2075 = vadd.f32 %v1239, %v1819
          %v2076 = vadd.f32 %v1240, %v1820
          %v2077 = vadd.f32 %v1241, %v1821
          %v2078 = vadd.f32 %v1242, %v1822
          %v2079 = vadd.f32 %v1243, %v1823
          %v2080 = vadd.f32 %v1244, %v1824
          %v2081 = vadd.f32 %v1245, %v1825
          %v2082 = vadd.f32 %v1246, %v1826
          %v2083 = vadd.f32 %v1247, %v1827
          %v2084 = vadd.f32 %v1248, %v1828
          %v2085 = vadd.f32 %v1249, %v1829
          %v2086 = vadd.f32 %v1250, %v1830
          %v2087 = vadd.f32 %v1251, %v1831
          %v2088 = vadd.f32 %v1252, %v1832
          %v2089 = vadd.f32 %v1253, %v1833
          %v2090 = vadd.f32 %v1254, %v1834
          %v2091 = vadd.f32 %v1255, %v1835
          %v2092 = vadd.f32 %v1256, %v1836
          %v2093 = vadd.f32 %v1257, %v1837
          %v2094 = vadd.f32 %v1258, %v1838
          %v2095 = vadd.f32 %v1259, %v1839
          %v2096 = vadd.f32 %v1260, %v1840
          %v2097 = vadd.f32 %v1261, %v1841
          %v2098 = vadd.f32 %v1262, %v1842
          %v2099 = vadd.f32 %v1263, %v1843
          %v2100 = vadd.f32 %v1264, %v1844
          %v2101 = vadd.f32 %v1265, %v1845
          %v2102 = vadd.f32 %v1266, %v1846
          %v2103 = vadd.f32 %v1267, %v1847
          %v2104 = vadd.f32 %v1268, %v1848
          %v2105 = vadd.f32 %v1269, %v1849
          %v2106 = vadd.f32 %v1270, %v1850
          %v2107 = vadd.f32 %v1271, %v1851
          %v2108 = vadd.f32 %v1272, %v1852
          %v2109 = vadd.f32 %v1273, %v1853
          %v2110 = vadd.f32 %v1274, %v1854
          %v2111 = vadd.f32 %v1275, %v1855
          %v2112 = vadd.f32 %v1276, %v1856
          %v2113 = vadd.f32 %v1277, %v1857
          %v2114 = vadd.f32 %v1278, %v1858
          %v2115 = vadd.f32 %v1279, %v1859
          %v2116 = vadd.f32 %v1280, %v1860
          %v2117 = vadd.f32 %v1281, %v1861
          %v2118 = vadd.f32 %v1282, %v1862
          %v2119 = vadd.f32 %v1283, %v1863
          %v2120 = vadd.f32 %v1284, %v1864
          %v2121 = vadd.f32 %v1285, %v1865
          %v2122 = vadd.f32 %v1286, %v1866
          %v2123 = vadd.f32 %v1287, %v1867
          %v2124 = vadd.f32 %v1288, %v1868
          %v2125 = vadd.f32 %v1289, %v1869
          %v2126 = vadd.f32 %v1290, %v1870
          %v2127 = vadd.f32 %v1291, %v1871
          %v2128 = vadd.f32 %v1292, %v1872
          %v2129 = vadd.f32 %v1293, %v1873
          %v2130 = vadd.f32 %v1294, %v1874
          %v2131 = vadd.f32 %v1295, %v1875
          %v2132 = vlaneseq
          %v2133 = vshrl.u32 %v2132, 7
          %v2134 = vsub.s32 2, %v2133
          %v2135 = vrot.slane %v452, %v2134
          %v2136 = vlaneseq
          %v2137 = vshrl.u32 %v2136, 7
          %v2138 = vsub.s32 6, %v2137
          %v2139 = vrot.slane %v452, %v2138
          %v2140 = vlaneseq
          %v2141 = vshrl.u32 %v2140, 7
          %v2142 = vsub.s32 2, %v2141
          %v2143 = vrot.slane %v453, %v2142
          %v2144 = vlaneseq
          %v2145 = vshrl.u32 %v2144, 7
          %v2146 = vsub.s32 6, %v2145
          %v2147 = vrot.slane %v453, %v2146
          %v2152 = vlaneseq
          %v2153 = vshrl.u32 %v2152, 7
          %v2154 = vsub.s32 2, %v2153
          %v2155 = vrot.slane %v2135, %v2154
          %2157 = vbcast.lane.b32.xlu0 %v2155, 256
          %v2158 = vpop.permute.xlu0 %2157
          %s2160 = sor.u32 256, 8
          %2161 = vbcast.lane.b32.xlu0 %v2155, %s2160
          %v2162 = vpop.permute.xlu0 %2161
          %s2164 = sor.u32 256, 16
          %2165 = vbcast.lane.b32.xlu0 %v2155, %s2164
          %v2166 = vpop.permute.xlu0 %2165
          %s2168 = sor.u32 256, 24
          %2169 = vbcast.lane.b32.xlu0 %v2155, %s2168
          %v2170 = vpop.permute.xlu0 %2169
          %s2172 = sor.u32 256, 32
          %2173 = vbcast.lane.b32.xlu0 %v2155, %s2172
          %v2174 = vpop.permute.xlu0 %2173
          %s2176 = sor.u32 256, 40
          %2177 = vbcast.lane.b32.xlu0 %v2155, %s2176
          %v2178 = vpop.permute.xlu0 %2177
          %s2180 = sor.u32 256, 48
          %2181 = vbcast.lane.b32.xlu0 %v2155, %s2180
          %v2182 = vpop.permute.xlu0 %2181
          %s2184 = sor.u32 256, 56
          %2185 = vbcast.lane.b32.xlu0 %v2155, %s2184
          %v2186 = vpop.permute.xlu0 %2185
          %s2188 = sor.u32 256, 64
          %2189 = vbcast.lane.b32.xlu0 %v2155, %s2188
          %v2190 = vpop.permute.xlu0 %2189
          %s2192 = sor.u32 256, 72
          %2193 = vbcast.lane.b32.xlu0 %v2155, %s2192
          %v2194 = vpop.permute.xlu0 %2193
          %s2196 = sor.u32 256, 80
          %2197 = vbcast.lane.b32.xlu0 %v2155, %s2196
          %v2198 = vpop.permute.xlu0 %2197
          %s2200 = sor.u32 256, 88
          %2201 = vbcast.lane.b32.xlu0 %v2155, %s2200
          %v2202 = vpop.permute.xlu0 %2201
          %s2204 = sor.u32 256, 96
          %2205 = vbcast.lane.b32.xlu0 %v2155, %s2204
          %v2206 = vpop.permute.xlu0 %2205
          %s2208 = sor.u32 256, 104
          %2209 = vbcast.lane.b32.xlu0 %v2155, %s2208
          %v2210 = vpop.permute.xlu0 %2209
          %s2212 = sor.u32 256, 112
          %2213 = vbcast.lane.b32.xlu0 %v2155, %s2212
          %v2214 = vpop.permute.xlu0 %2213
          %s2216 = sor.u32 256, 120
          %2217 = vbcast.lane.b32.xlu0 %v2155, %s2216
          %v2218 = vpop.permute.xlu0 %2217
          %v2219 = vlaneseq
          %v2220 = vshrl.u32 %v2219, 7
          %v2221 = vsub.s32 2, %v2220
          %v2222 = vrot.slane %v2139, %v2221
          %2224 = vbcast.lane.b32.xlu0 %v2222, 256
          %v2225 = vpop.permute.xlu0 %2224
          %s2227 = sor.u32 256, 8
          %2228 = vbcast.lane.b32.xlu0 %v2222, %s2227
          %v2229 = vpop.permute.xlu0 %2228
          %s2231 = sor.u32 256, 16
          %2232 = vbcast.lane.b32.xlu0 %v2222, %s2231
          %v2233 = vpop.permute.xlu0 %2232
          %s2235 = sor.u32 256, 24
          %2236 = vbcast.lane.b32.xlu0 %v2222, %s2235
          %v2237 = vpop.permute.xlu0 %2236
          %s2239 = sor.u32 256, 32
          %2240 = vbcast.lane.b32.xlu0 %v2222, %s2239
          %v2241 = vpop.permute.xlu0 %2240
          %s2243 = sor.u32 256, 40
          %2244 = vbcast.lane.b32.xlu0 %v2222, %s2243
          %v2245 = vpop.permute.xlu0 %2244
          %s2247 = sor.u32 256, 48
          %2248 = vbcast.lane.b32.xlu0 %v2222, %s2247
          %v2249 = vpop.permute.xlu0 %2248
          %s2251 = sor.u32 256, 56
          %2252 = vbcast.lane.b32.xlu0 %v2222, %s2251
          %v2253 = vpop.permute.xlu0 %2252
          %s2255 = sor.u32 256, 64
          %2256 = vbcast.lane.b32.xlu0 %v2222, %s2255
          %v2257 = vpop.permute.xlu0 %2256
          %s2259 = sor.u32 256, 72
          %2260 = vbcast.lane.b32.xlu0 %v2222, %s2259
          %v2261 = vpop.permute.xlu0 %2260
          %s2263 = sor.u32 256, 80
          %2264 = vbcast.lane.b32.xlu0 %v2222, %s2263
          %v2265 = vpop.permute.xlu0 %2264
          %s2267 = sor.u32 256, 88
          %2268 = vbcast.lane.b32.xlu0 %v2222, %s2267
          %v2269 = vpop.permute.xlu0 %2268
          %s2271 = sor.u32 256, 96
          %2272 = vbcast.lane.b32.xlu0 %v2222, %s2271
          %v2273 = vpop.permute.xlu0 %2272
          %s2275 = sor.u32 256, 104
          %2276 = vbcast.lane.b32.xlu0 %v2222, %s2275
          %v2277 = vpop.permute.xlu0 %2276
          %s2279 = sor.u32 256, 112
          %2280 = vbcast.lane.b32.xlu0 %v2222, %s2279
          %v2281 = vpop.permute.xlu0 %2280
          %s2283 = sor.u32 256, 120
          %2284 = vbcast.lane.b32.xlu0 %v2222, %s2283
          %v2285 = vpop.permute.xlu0 %2284
          %v2286 = vlaneseq
          %v2287 = vshrl.u32 %v2286, 7
          %v2288 = vsub.s32 2, %v2287
          %v2289 = vrot.slane %v2143, %v2288
          %2291 = vbcast.lane.b32.xlu0 %v2289, 256
          %v2292 = vpop.permute.xlu0 %2291
          %s2294 = sor.u32 256, 8
          %2295 = vbcast.lane.b32.xlu0 %v2289, %s2294
          %v2296 = vpop.permute.xlu0 %2295
          %s2298 = sor.u32 256, 16
          %2299 = vbcast.lane.b32.xlu0 %v2289, %s2298
          %v2300 = vpop.permute.xlu0 %2299
          %s2302 = sor.u32 256, 24
          %2303 = vbcast.lane.b32.xlu0 %v2289, %s2302
          %v2304 = vpop.permute.xlu0 %2303
          %s2306 = sor.u32 256, 32
          %2307 = vbcast.lane.b32.xlu0 %v2289, %s2306
          %v2308 = vpop.permute.xlu0 %2307
          %s2310 = sor.u32 256, 40
          %2311 = vbcast.lane.b32.xlu0 %v2289, %s2310
          %v2312 = vpop.permute.xlu0 %2311
          %s2314 = sor.u32 256, 48
          %2315 = vbcast.lane.b32.xlu0 %v2289, %s2314
          %v2316 = vpop.permute.xlu0 %2315
          %s2318 = sor.u32 256, 56
          %2319 = vbcast.lane.b32.xlu0 %v2289, %s2318
          %v2320 = vpop.permute.xlu0 %2319
          %s2322 = sor.u32 256, 64
          %2323 = vbcast.lane.b32.xlu0 %v2289, %s2322
          %v2324 = vpop.permute.xlu0 %2323
          %s2326 = sor.u32 256, 72
          %2327 = vbcast.lane.b32.xlu0 %v2289, %s2326
          %v2328 = vpop.permute.xlu0 %2327
          %s2330 = sor.u32 256, 80
          %2331 = vbcast.lane.b32.xlu0 %v2289, %s2330
          %v2332 = vpop.permute.xlu0 %2331
          %s2334 = sor.u32 256, 88
          %2335 = vbcast.lane.b32.xlu0 %v2289, %s2334
          %v2336 = vpop.permute.xlu0 %2335
          %s2338 = sor.u32 256, 96
          %2339 = vbcast.lane.b32.xlu0 %v2289, %s2338
          %v2340 = vpop.permute.xlu0 %2339
          %s2342 = sor.u32 256, 104
          %2343 = vbcast.lane.b32.xlu0 %v2289, %s2342
          %v2344 = vpop.permute.xlu0 %2343
          %s2346 = sor.u32 256, 112
          %2347 = vbcast.lane.b32.xlu0 %v2289, %s2346
          %v2348 = vpop.permute.xlu0 %2347
          %s2350 = sor.u32 256, 120
          %2351 = vbcast.lane.b32.xlu0 %v2289, %s2350
          %v2352 = vpop.permute.xlu0 %2351
          %v2353 = vlaneseq
          %v2354 = vshrl.u32 %v2353, 7
          %v2355 = vsub.s32 2, %v2354
          %v2356 = vrot.slane %v2147, %v2355
          %2358 = vbcast.lane.b32.xlu0 %v2356, 256
          %v2359 = vpop.permute.xlu0 %2358
          %s2361 = sor.u32 256, 8
          %2362 = vbcast.lane.b32.xlu0 %v2356, %s2361
          %v2363 = vpop.permute.xlu0 %2362
          %s2365 = sor.u32 256, 16
          %2366 = vbcast.lane.b32.xlu0 %v2356, %s2365
          %v2367 = vpop.permute.xlu0 %2366
          %s2369 = sor.u32 256, 24
          %2370 = vbcast.lane.b32.xlu0 %v2356, %s2369
          %v2371 = vpop.permute.xlu0 %2370
          %s2373 = sor.u32 256, 32
          %2374 = vbcast.lane.b32.xlu0 %v2356, %s2373
          %v2375 = vpop.permute.xlu0 %2374
          %s2377 = sor.u32 256, 40
          %2378 = vbcast.lane.b32.xlu0 %v2356, %s2377
          %v2379 = vpop.permute.xlu0 %2378
          %s2381 = sor.u32 256, 48
          %2382 = vbcast.lane.b32.xlu0 %v2356, %s2381
          %v2383 = vpop.permute.xlu0 %2382
          %s2385 = sor.u32 256, 56
          %2386 = vbcast.lane.b32.xlu0 %v2356, %s2385
          %v2387 = vpop.permute.xlu0 %2386
          %s2389 = sor.u32 256, 64
          %2390 = vbcast.lane.b32.xlu0 %v2356, %s2389
          %v2391 = vpop.permute.xlu0 %2390
          %s2393 = sor.u32 256, 72
          %2394 = vbcast.lane.b32.xlu0 %v2356, %s2393
          %v2395 = vpop.permute.xlu0 %2394
          %s2397 = sor.u32 256, 80
          %2398 = vbcast.lane.b32.xlu0 %v2356, %s2397
          %v2399 = vpop.permute.xlu0 %2398
          %s2401 = sor.u32 256, 88
          %2402 = vbcast.lane.b32.xlu0 %v2356, %s2401
          %v2403 = vpop.permute.xlu0 %2402
          %s2405 = sor.u32 256, 96
          %2406 = vbcast.lane.b32.xlu0 %v2356, %s2405
          %v2407 = vpop.permute.xlu0 %2406
          %s2409 = sor.u32 256, 104
          %2410 = vbcast.lane.b32.xlu0 %v2356, %s2409
          %v2411 = vpop.permute.xlu0 %2410
          %s2413 = sor.u32 256, 112
          %2414 = vbcast.lane.b32.xlu0 %v2356, %s2413
          %v2415 = vpop.permute.xlu0 %2414
          %s2417 = sor.u32 256, 120
          %2418 = vbcast.lane.b32.xlu0 %v2356, %s2417
          %v2419 = vpop.permute.xlu0 %2418
          %v2420 = vlaneseq
          %v2421 = vshrl.u32 %v2420, 7
          %v2422 = vsub.s32 2, %v2421
          %v2423 = vrot.slane %v454, %v2422
          %v2424 = vlaneseq
          %v2425 = vshrl.u32 %v2424, 7
          %v2426 = vsub.s32 6, %v2425
          %v2427 = vrot.slane %v454, %v2426
          %v2428 = vlaneseq
          %v2429 = vshrl.u32 %v2428, 7
          %v2430 = vsub.s32 2, %v2429
          %v2431 = vrot.slane %v455, %v2430
          %v2432 = vlaneseq
          %v2433 = vshrl.u32 %v2432, 7
          %v2434 = vsub.s32 6, %v2433
          %v2435 = vrot.slane %v455, %v2434
          %v2440 = vlaneseq
          %v2441 = vshrl.u32 %v2440, 7
          %v2442 = vsub.s32 2, %v2441
          %v2443 = vrot.slane %v2423, %v2442
          %v2444 = vlaneseq
          %v2445 = vshrl.u32 %v2444, 7
          %v2446 = vsub.s32 2, %v2445
          %v2447 = vrot.slane %v2427, %v2446
          %v2448 = vlaneseq
          %v2449 = vshrl.u32 %v2448, 7
          %v2450 = vsub.s32 2, %v2449
          %v2451 = vrot.slane %v2431, %v2450
          %v2452 = vlaneseq
          %v2453 = vshrl.u32 %v2452, 7
          %v2454 = vsub.s32 2, %v2453
          %v2455 = vrot.slane %v2435, %v2454
          %v2456 = vmul.f32 %v2158, %v2443
          %v2457 = vmul.f32 %v2158, %v2447
          %v2458 = vmul.f32 %v2158, %v2451
          %v2459 = vmul.f32 %v2158, %v2455
          %v2460 = vmul.f32 %v2162, %v2443
          %v2461 = vmul.f32 %v2162, %v2447
          %v2462 = vmul.f32 %v2162, %v2451
          %v2463 = vmul.f32 %v2162, %v2455
          %v2464 = vmul.f32 %v2166, %v2443
          %v2465 = vmul.f32 %v2166, %v2447
          %v2466 = vmul.f32 %v2166, %v2451
          %v2467 = vmul.f32 %v2166, %v2455
          %v2468 = vmul.f32 %v2170, %v2443
          %v2469 = vmul.f32 %v2170, %v2447
          %v2470 = vmul.f32 %v2170, %v2451
          %v2471 = vmul.f32 %v2170, %v2455
          %v2472 = vmul.f32 %v2174, %v2443
          %v2473 = vmul.f32 %v2174, %v2447
          %v2474 = vmul.f32 %v2174, %v2451
          %v2475 = vmul.f32 %v2174, %v2455
          %v2476 = vmul.f32 %v2178, %v2443
          %v2477 = vmul.f32 %v2178, %v2447
          %v2478 = vmul.f32 %v2178, %v2451
          %v2479 = vmul.f32 %v2178, %v2455
          %v2480 = vmul.f32 %v2182, %v2443
          %v2481 = vmul.f32 %v2182, %v2447
          %v2482 = vmul.f32 %v2182, %v2451
          %v2483 = vmul.f32 %v2182, %v2455
          %v2484 = vmul.f32 %v2186, %v2443
          %v2485 = vmul.f32 %v2186, %v2447
          %v2486 = vmul.f32 %v2186, %v2451
          %v2487 = vmul.f32 %v2186, %v2455
          %v2488 = vmul.f32 %v2190, %v2443
          %v2489 = vmul.f32 %v2190, %v2447
          %v2490 = vmul.f32 %v2190, %v2451
          %v2491 = vmul.f32 %v2190, %v2455
          %v2492 = vmul.f32 %v2194, %v2443
          %v2493 = vmul.f32 %v2194, %v2447
          %v2494 = vmul.f32 %v2194, %v2451
          %v2495 = vmul.f32 %v2194, %v2455
          %v2496 = vmul.f32 %v2198, %v2443
          %v2497 = vmul.f32 %v2198, %v2447
          %v2498 = vmul.f32 %v2198, %v2451
          %v2499 = vmul.f32 %v2198, %v2455
          %v2500 = vmul.f32 %v2202, %v2443
          %v2501 = vmul.f32 %v2202, %v2447
          %v2502 = vmul.f32 %v2202, %v2451
          %v2503 = vmul.f32 %v2202, %v2455
          %v2504 = vmul.f32 %v2206, %v2443
          %v2505 = vmul.f32 %v2206, %v2447
          %v2506 = vmul.f32 %v2206, %v2451
          %v2507 = vmul.f32 %v2206, %v2455
          %v2508 = vmul.f32 %v2210, %v2443
          %v2509 = vmul.f32 %v2210, %v2447
          %v2510 = vmul.f32 %v2210, %v2451
          %v2511 = vmul.f32 %v2210, %v2455
          %v2512 = vmul.f32 %v2214, %v2443
          %v2513 = vmul.f32 %v2214, %v2447
          %v2514 = vmul.f32 %v2214, %v2451
          %v2515 = vmul.f32 %v2214, %v2455
          %v2516 = vmul.f32 %v2218, %v2443
          %v2517 = vmul.f32 %v2218, %v2447
          %v2518 = vmul.f32 %v2218, %v2451
          %v2519 = vmul.f32 %v2218, %v2455
          %v2520 = vmul.f32 %v2225, %v2443
          %v2521 = vmul.f32 %v2225, %v2447
          %v2522 = vmul.f32 %v2225, %v2451
          %v2523 = vmul.f32 %v2225, %v2455
          %v2524 = vmul.f32 %v2229, %v2443
          %v2525 = vmul.f32 %v2229, %v2447
          %v2526 = vmul.f32 %v2229, %v2451
          %v2527 = vmul.f32 %v2229, %v2455
          %v2528 = vmul.f32 %v2233, %v2443
          %v2529 = vmul.f32 %v2233, %v2447
          %v2530 = vmul.f32 %v2233, %v2451
          %v2531 = vmul.f32 %v2233, %v2455
          %v2532 = vmul.f32 %v2237, %v2443
          %v2533 = vmul.f32 %v2237, %v2447
          %v2534 = vmul.f32 %v2237, %v2451
          %v2535 = vmul.f32 %v2237, %v2455
          %v2536 = vmul.f32 %v2241, %v2443
          %v2537 = vmul.f32 %v2241, %v2447
          %v2538 = vmul.f32 %v2241, %v2451
          %v2539 = vmul.f32 %v2241, %v2455
          %v2540 = vmul.f32 %v2245, %v2443
          %v2541 = vmul.f32 %v2245, %v2447
          %v2542 = vmul.f32 %v2245, %v2451
          %v2543 = vmul.f32 %v2245, %v2455
          %v2544 = vmul.f32 %v2249, %v2443
          %v2545 = vmul.f32 %v2249, %v2447
          %v2546 = vmul.f32 %v2249, %v2451
          %v2547 = vmul.f32 %v2249, %v2455
          %v2548 = vmul.f32 %v2253, %v2443
          %v2549 = vmul.f32 %v2253, %v2447
          %v2550 = vmul.f32 %v2253, %v2451
          %v2551 = vmul.f32 %v2253, %v2455
          %v2552 = vmul.f32 %v2257, %v2443
          %v2553 = vmul.f32 %v2257, %v2447
          %v2554 = vmul.f32 %v2257, %v2451
          %v2555 = vmul.f32 %v2257, %v2455
          %v2556 = vmul.f32 %v2261, %v2443
          %v2557 = vmul.f32 %v2261, %v2447
          %v2558 = vmul.f32 %v2261, %v2451
          %v2559 = vmul.f32 %v2261, %v2455
          %v2560 = vmul.f32 %v2265, %v2443
          %v2561 = vmul.f32 %v2265, %v2447
          %v2562 = vmul.f32 %v2265, %v2451
          %v2563 = vmul.f32 %v2265, %v2455
          %v2564 = vmul.f32 %v2269, %v2443
          %v2565 = vmul.f32 %v2269, %v2447
          %v2566 = vmul.f32 %v2269, %v2451
          %v2567 = vmul.f32 %v2269, %v2455
          %v2568 = vmul.f32 %v2273, %v2443
          %v2569 = vmul.f32 %v2273, %v2447
          %v2570 = vmul.f32 %v2273, %v2451
          %v2571 = vmul.f32 %v2273, %v2455
          %v2572 = vmul.f32 %v2277, %v2443
          %v2573 = vmul.f32 %v2277, %v2447
          %v2574 = vmul.f32 %v2277, %v2451
          %v2575 = vmul.f32 %v2277, %v2455
          %v2576 = vmul.f32 %v2281, %v2443
          %v2577 = vmul.f32 %v2281, %v2447
          %v2578 = vmul.f32 %v2281, %v2451
          %v2579 = vmul.f32 %v2281, %v2455
          %v2580 = vmul.f32 %v2285, %v2443
          %v2581 = vmul.f32 %v2285, %v2447
          %v2582 = vmul.f32 %v2285, %v2451
          %v2583 = vmul.f32 %v2285, %v2455
          %v2584 = vmul.f32 %v2292, %v2443
          %v2585 = vmul.f32 %v2292, %v2447
          %v2586 = vmul.f32 %v2292, %v2451
          %v2587 = vmul.f32 %v2292, %v2455
          %v2588 = vmul.f32 %v2296, %v2443
          %v2589 = vmul.f32 %v2296, %v2447
          %v2590 = vmul.f32 %v2296, %v2451
          %v2591 = vmul.f32 %v2296, %v2455
          %v2592 = vmul.f32 %v2300, %v2443
          %v2593 = vmul.f32 %v2300, %v2447
          %v2594 = vmul.f32 %v2300, %v2451
          %v2595 = vmul.f32 %v2300, %v2455
          %v2596 = vmul.f32 %v2304, %v2443
          %v2597 = vmul.f32 %v2304, %v2447
          %v2598 = vmul.f32 %v2304, %v2451
          %v2599 = vmul.f32 %v2304, %v2455
          %v2600 = vmul.f32 %v2308, %v2443
          %v2601 = vmul.f32 %v2308, %v2447
          %v2602 = vmul.f32 %v2308, %v2451
          %v2603 = vmul.f32 %v2308, %v2455
          %v2604 = vmul.f32 %v2312, %v2443
          %v2605 = vmul.f32 %v2312, %v2447
          %v2606 = vmul.f32 %v2312, %v2451
          %v2607 = vmul.f32 %v2312, %v2455
          %v2608 = vmul.f32 %v2316, %v2443
          %v2609 = vmul.f32 %v2316, %v2447
          %v2610 = vmul.f32 %v2316, %v2451
          %v2611 = vmul.f32 %v2316, %v2455
          %v2612 = vmul.f32 %v2320, %v2443
          %v2613 = vmul.f32 %v2320, %v2447
          %v2614 = vmul.f32 %v2320, %v2451
          %v2615 = vmul.f32 %v2320, %v2455
          %v2616 = vmul.f32 %v2324, %v2443
          %v2617 = vmul.f32 %v2324, %v2447
          %v2618 = vmul.f32 %v2324, %v2451
          %v2619 = vmul.f32 %v2324, %v2455
          %v2620 = vmul.f32 %v2328, %v2443
          %v2621 = vmul.f32 %v2328, %v2447
          %v2622 = vmul.f32 %v2328, %v2451
          %v2623 = vmul.f32 %v2328, %v2455
          %v2624 = vmul.f32 %v2332, %v2443
          %v2625 = vmul.f32 %v2332, %v2447
          %v2626 = vmul.f32 %v2332, %v2451
          %v2627 = vmul.f32 %v2332, %v2455
          %v2628 = vmul.f32 %v2336, %v2443
          %v2629 = vmul.f32 %v2336, %v2447
          %v2630 = vmul.f32 %v2336, %v2451
          %v2631 = vmul.f32 %v2336, %v2455
          %v2632 = vmul.f32 %v2340, %v2443
          %v2633 = vmul.f32 %v2340, %v2447
          %v2634 = vmul.f32 %v2340, %v2451
          %v2635 = vmul.f32 %v2340, %v2455
          %v2636 = vmul.f32 %v2344, %v2443
          %v2637 = vmul.f32 %v2344, %v2447
          %v2638 = vmul.f32 %v2344, %v2451
          %v2639 = vmul.f32 %v2344, %v2455
          %v2640 = vmul.f32 %v2348, %v2443
          %v2641 = vmul.f32 %v2348, %v2447
          %v2642 = vmul.f32 %v2348, %v2451
          %v2643 = vmul.f32 %v2348, %v2455
          %v2644 = vmul.f32 %v2352, %v2443
          %v2645 = vmul.f32 %v2352, %v2447
          %v2646 = vmul.f32 %v2352, %v2451
          %v2647 = vmul.f32 %v2352, %v2455
          %v2648 = vmul.f32 %v2359, %v2443
          %v2649 = vmul.f32 %v2359, %v2447
          %v2650 = vmul.f32 %v2359, %v2451
          %v2651 = vmul.f32 %v2359, %v2455
          %v2652 = vmul.f32 %v2363, %v2443
          %v2653 = vmul.f32 %v2363, %v2447
          %v2654 = vmul.f32 %v2363, %v2451
          %v2655 = vmul.f32 %v2363, %v2455
          %v2656 = vmul.f32 %v2367, %v2443
          %v2657 = vmul.f32 %v2367, %v2447
          %v2658 = vmul.f32 %v2367, %v2451
          %v2659 = vmul.f32 %v2367, %v2455
          %v2660 = vmul.f32 %v2371, %v2443
          %v2661 = vmul.f32 %v2371, %v2447
          %v2662 = vmul.f32 %v2371, %v2451
          %v2663 = vmul.f32 %v2371, %v2455
          %v2664 = vmul.f32 %v2375, %v2443
          %v2665 = vmul.f32 %v2375, %v2447
          %v2666 = vmul.f32 %v2375, %v2451
          %v2667 = vmul.f32 %v2375, %v2455
          %v2668 = vmul.f32 %v2379, %v2443
          %v2669 = vmul.f32 %v2379, %v2447
          %v2670 = vmul.f32 %v2379, %v2451
          %v2671 = vmul.f32 %v2379, %v2455
          %v2672 = vmul.f32 %v2383, %v2443
          %v2673 = vmul.f32 %v2383, %v2447
          %v2674 = vmul.f32 %v2383, %v2451
          %v2675 = vmul.f32 %v2383, %v2455
          %v2676 = vmul.f32 %v2387, %v2443
          %v2677 = vmul.f32 %v2387, %v2447
          %v2678 = vmul.f32 %v2387, %v2451
          %v2679 = vmul.f32 %v2387, %v2455
          %v2680 = vmul.f32 %v2391, %v2443
          %v2681 = vmul.f32 %v2391, %v2447
          %v2682 = vmul.f32 %v2391, %v2451
          %v2683 = vmul.f32 %v2391, %v2455
          %v2684 = vmul.f32 %v2395, %v2443
          %v2685 = vmul.f32 %v2395, %v2447
          %v2686 = vmul.f32 %v2395, %v2451
          %v2687 = vmul.f32 %v2395, %v2455
          %v2688 = vmul.f32 %v2399, %v2443
          %v2689 = vmul.f32 %v2399, %v2447
          %v2690 = vmul.f32 %v2399, %v2451
          %v2691 = vmul.f32 %v2399, %v2455
          %v2692 = vmul.f32 %v2403, %v2443
          %v2693 = vmul.f32 %v2403, %v2447
          %v2694 = vmul.f32 %v2403, %v2451
          %v2695 = vmul.f32 %v2403, %v2455
          %v2696 = vmul.f32 %v2407, %v2443
          %v2697 = vmul.f32 %v2407, %v2447
          %v2698 = vmul.f32 %v2407, %v2451
          %v2699 = vmul.f32 %v2407, %v2455
          %v2700 = vmul.f32 %v2411, %v2443
          %v2701 = vmul.f32 %v2411, %v2447
          %v2702 = vmul.f32 %v2411, %v2451
          %v2703 = vmul.f32 %v2411, %v2455
          %v2704 = vmul.f32 %v2415, %v2443
          %v2705 = vmul.f32 %v2415, %v2447
          %v2706 = vmul.f32 %v2415, %v2451
          %v2707 = vmul.f32 %v2415, %v2455
          %v2708 = vmul.f32 %v2419, %v2443
          %v2709 = vmul.f32 %v2419, %v2447
          %v2710 = vmul.f32 %v2419, %v2451
          %v2711 = vmul.f32 %v2419, %v2455
          %v2712 = vadd.f32 %v1876, %v2456
          %v2713 = vadd.f32 %v1877, %v2457
          %v2714 = vadd.f32 %v1878, %v2458
          %v2715 = vadd.f32 %v1879, %v2459
          %v2716 = vadd.f32 %v1880, %v2460
          %v2717 = vadd.f32 %v1881, %v2461
          %v2718 = vadd.f32 %v1882, %v2462
          %v2719 = vadd.f32 %v1883, %v2463
          %v2720 = vadd.f32 %v1884, %v2464
          %v2721 = vadd.f32 %v1885, %v2465
          %v2722 = vadd.f32 %v1886, %v2466
          %v2723 = vadd.f32 %v1887, %v2467
          %v2724 = vadd.f32 %v1888, %v2468
          %v2725 = vadd.f32 %v1889, %v2469
          %v2726 = vadd.f32 %v1890, %v2470
          %v2727 = vadd.f32 %v1891, %v2471
          %v2728 = vadd.f32 %v1892, %v2472
          %v2729 = vadd.f32 %v1893, %v2473
          %v2730 = vadd.f32 %v1894, %v2474
          %v2731 = vadd.f32 %v1895, %v2475
          %v2732 = vadd.f32 %v1896, %v2476
          %v2733 = vadd.f32 %v1897, %v2477
          %v2734 = vadd.f32 %v1898, %v2478
          %v2735 = vadd.f32 %v1899, %v2479
          %v2736 = vadd.f32 %v1900, %v2480
          %v2737 = vadd.f32 %v1901, %v2481
          %v2738 = vadd.f32 %v1902, %v2482
          %v2739 = vadd.f32 %v1903, %v2483
          %v2740 = vadd.f32 %v1904, %v2484
          %v2741 = vadd.f32 %v1905, %v2485
          %v2742 = vadd.f32 %v1906, %v2486
          %v2743 = vadd.f32 %v1907, %v2487
          %v2744 = vadd.f32 %v1908, %v2488
          %v2745 = vadd.f32 %v1909, %v2489
          %v2746 = vadd.f32 %v1910, %v2490
          %v2747 = vadd.f32 %v1911, %v2491
          %v2748 = vadd.f32 %v1912, %v2492
          %v2749 = vadd.f32 %v1913, %v2493
          %v2750 = vadd.f32 %v1914, %v2494
          %v2751 = vadd.f32 %v1915, %v2495
          %v2752 = vadd.f32 %v1916, %v2496
          %v2753 = vadd.f32 %v1917, %v2497
          %v2754 = vadd.f32 %v1918, %v2498
          %v2755 = vadd.f32 %v1919, %v2499
          %v2756 = vadd.f32 %v1920, %v2500
          %v2757 = vadd.f32 %v1921, %v2501
          %v2758 = vadd.f32 %v1922, %v2502
          %v2759 = vadd.f32 %v1923, %v2503
          %v2760 = vadd.f32 %v1924, %v2504
          %v2761 = vadd.f32 %v1925, %v2505
          %v2762 = vadd.f32 %v1926, %v2506
          %v2763 = vadd.f32 %v1927, %v2507
          %v2764 = vadd.f32 %v1928, %v2508
          %v2765 = vadd.f32 %v1929, %v2509
          %v2766 = vadd.f32 %v1930, %v2510
          %v2767 = vadd.f32 %v1931, %v2511
          %v2768 = vadd.f32 %v1932, %v2512
          %v2769 = vadd.f32 %v1933, %v2513
          %v2770 = vadd.f32 %v1934, %v2514
          %v2771 = vadd.f32 %v1935, %v2515
          %v2772 = vadd.f32 %v1936, %v2516
          %v2773 = vadd.f32 %v1937, %v2517
          %v2774 = vadd.f32 %v1938, %v2518
          %v2775 = vadd.f32 %v1939, %v2519
          %v2776 = vadd.f32 %v1940, %v2520
          %v2777 = vadd.f32 %v1941, %v2521
          %v2778 = vadd.f32 %v1942, %v2522
          %v2779 = vadd.f32 %v1943, %v2523
          %v2780 = vadd.f32 %v1944, %v2524
          %v2781 = vadd.f32 %v1945, %v2525
          %v2782 = vadd.f32 %v1946, %v2526
          %v2783 = vadd.f32 %v1947, %v2527
          %v2784 = vadd.f32 %v1948, %v2528
          %v2785 = vadd.f32 %v1949, %v2529
          %v2786 = vadd.f32 %v1950, %v2530
          %v2787 = vadd.f32 %v1951, %v2531
          %v2788 = vadd.f32 %v1952, %v2532
          %v2789 = vadd.f32 %v1953, %v2533
          %v2790 = vadd.f32 %v1954, %v2534
          %v2791 = vadd.f32 %v1955, %v2535
          %v2792 = vadd.f32 %v1956, %v2536
          %v2793 = vadd.f32 %v1957, %v2537
          %v2794 = vadd.f32 %v1958, %v2538
          %v2795 = vadd.f32 %v1959, %v2539
          %v2796 = vadd.f32 %v1960, %v2540
          %v2797 = vadd.f32 %v1961, %v2541
          %v2798 = vadd.f32 %v1962, %v2542
          %v2799 = vadd.f32 %v1963, %v2543
          %v2800 = vadd.f32 %v1964, %v2544
          %v2801 = vadd.f32 %v1965, %v2545
          %v2802 = vadd.f32 %v1966, %v2546
          %v2803 = vadd.f32 %v1967, %v2547
          %v2804 = vadd.f32 %v1968, %v2548
          %v2805 = vadd.f32 %v1969, %v2549
          %v2806 = vadd.f32 %v1970, %v2550
          %v2807 = vadd.f32 %v1971, %v2551
          %v2808 = vadd.f32 %v1972, %v2552
          %v2809 = vadd.f32 %v1973, %v2553
          %v2810 = vadd.f32 %v1974, %v2554
          %v2811 = vadd.f32 %v1975, %v2555
          %v2812 = vadd.f32 %v1976, %v2556
          %v2813 = vadd.f32 %v1977, %v2557
          %v2814 = vadd.f32 %v1978, %v2558
          %v2815 = vadd.f32 %v1979, %v2559
          %v2816 = vadd.f32 %v1980, %v2560
          %v2817 = vadd.f32 %v1981, %v2561
          %v2818 = vadd.f32 %v1982, %v2562
          %v2819 = vadd.f32 %v1983, %v2563
          %v2820 = vadd.f32 %v1984, %v2564
          %v2821 = vadd.f32 %v1985, %v2565
          %v2822 = vadd.f32 %v1986, %v2566
          %v2823 = vadd.f32 %v1987, %v2567
          %v2824 = vadd.f32 %v1988, %v2568
          %v2825 = vadd.f32 %v1989, %v2569
          %v2826 = vadd.f32 %v1990, %v2570
          %v2827 = vadd.f32 %v1991, %v2571
          %v2828 = vadd.f32 %v1992, %v2572
          %v2829 = vadd.f32 %v1993, %v2573
          %v2830 = vadd.f32 %v1994, %v2574
          %v2831 = vadd.f32 %v1995, %v2575
          %v2832 = vadd.f32 %v1996, %v2576
          %v2833 = vadd.f32 %v1997, %v2577
          %v2834 = vadd.f32 %v1998, %v2578
          %v2835 = vadd.f32 %v1999, %v2579
          %v2836 = vadd.f32 %v2000, %v2580
          %v2837 = vadd.f32 %v2001, %v2581
          %v2838 = vadd.f32 %v2002, %v2582
          %v2839 = vadd.f32 %v2003, %v2583
          %v2840 = vadd.f32 %v2004, %v2584
          %v2841 = vadd.f32 %v2005, %v2585
          %v2842 = vadd.f32 %v2006, %v2586
          %v2843 = vadd.f32 %v2007, %v2587
          %v2844 = vadd.f32 %v2008, %v2588
          %v2845 = vadd.f32 %v2009, %v2589
          %v2846 = vadd.f32 %v2010, %v2590
          %v2847 = vadd.f32 %v2011, %v2591
          %v2848 = vadd.f32 %v2012, %v2592
          %v2849 = vadd.f32 %v2013, %v2593
          %v2850 = vadd.f32 %v2014, %v2594
          %v2851 = vadd.f32 %v2015, %v2595
          %v2852 = vadd.f32 %v2016, %v2596
          %v2853 = vadd.f32 %v2017, %v2597
          %v2854 = vadd.f32 %v2018, %v2598
          %v2855 = vadd.f32 %v2019, %v2599
          %v2856 = vadd.f32 %v2020, %v2600
          %v2857 = vadd.f32 %v2021, %v2601
          %v2858 = vadd.f32 %v2022, %v2602
          %v2859 = vadd.f32 %v2023, %v2603
          %v2860 = vadd.f32 %v2024, %v2604
          %v2861 = vadd.f32 %v2025, %v2605
          %v2862 = vadd.f32 %v2026, %v2606
          %v2863 = vadd.f32 %v2027, %v2607
          %v2864 = vadd.f32 %v2028, %v2608
          %v2865 = vadd.f32 %v2029, %v2609
          %v2866 = vadd.f32 %v2030, %v2610
          %v2867 = vadd.f32 %v2031, %v2611
          %v2868 = vadd.f32 %v2032, %v2612
          %v2869 = vadd.f32 %v2033, %v2613
          %v2870 = vadd.f32 %v2034, %v2614
          %v2871 = vadd.f32 %v2035, %v2615
          %v2872 = vadd.f32 %v2036, %v2616
          %v2873 = vadd.f32 %v2037, %v2617
          %v2874 = vadd.f32 %v2038, %v2618
          %v2875 = vadd.f32 %v2039, %v2619
          %v2876 = vadd.f32 %v2040, %v2620
          %v2877 = vadd.f32 %v2041, %v2621
          %v2878 = vadd.f32 %v2042, %v2622
          %v2879 = vadd.f32 %v2043, %v2623
          %v2880 = vadd.f32 %v2044, %v2624
          %v2881 = vadd.f32 %v2045, %v2625
          %v2882 = vadd.f32 %v2046, %v2626
          %v2883 = vadd.f32 %v2047, %v2627
          %v2884 = vadd.f32 %v2048, %v2628
          %v2885 = vadd.f32 %v2049, %v2629
          %v2886 = vadd.f32 %v2050, %v2630
          %v2887 = vadd.f32 %v2051, %v2631
          %v2888 = vadd.f32 %v2052, %v2632
          %v2889 = vadd.f32 %v2053, %v2633
          %v2890 = vadd.f32 %v2054, %v2634
          %v2891 = vadd.f32 %v2055, %v2635
          %v2892 = vadd.f32 %v2056, %v2636
          %v2893 = vadd.f32 %v2057, %v2637
          %v2894 = vadd.f32 %v2058, %v2638
          %v2895 = vadd.f32 %v2059, %v2639
          %v2896 = vadd.f32 %v2060, %v2640
          %v2897 = vadd.f32 %v2061, %v2641
          %v2898 = vadd.f32 %v2062, %v2642
          %v2899 = vadd.f32 %v2063, %v2643
          %v2900 = vadd.f32 %v2064, %v2644
          %v2901 = vadd.f32 %v2065, %v2645
          %v2902 = vadd.f32 %v2066, %v2646
          %v2903 = vadd.f32 %v2067, %v2647
          %v2904 = vadd.f32 %v2068, %v2648
          %v2905 = vadd.f32 %v2069, %v2649
          %v2906 = vadd.f32 %v2070, %v2650
          %v2907 = vadd.f32 %v2071, %v2651
          %v2908 = vadd.f32 %v2072, %v2652
          %v2909 = vadd.f32 %v2073, %v2653
          %v2910 = vadd.f32 %v2074, %v2654
          %v2911 = vadd.f32 %v2075, %v2655
          %v2912 = vadd.f32 %v2076, %v2656
          %v2913 = vadd.f32 %v2077, %v2657
          %v2914 = vadd.f32 %v2078, %v2658
          %v2915 = vadd.f32 %v2079, %v2659
          %v2916 = vadd.f32 %v2080, %v2660
          %v2917 = vadd.f32 %v2081, %v2661
          %v2918 = vadd.f32 %v2082, %v2662
          %v2919 = vadd.f32 %v2083, %v2663
          %v2920 = vadd.f32 %v2084, %v2664
          %v2921 = vadd.f32 %v2085, %v2665
          %v2922 = vadd.f32 %v2086, %v2666
          %v2923 = vadd.f32 %v2087, %v2667
          %v2924 = vadd.f32 %v2088, %v2668
          %v2925 = vadd.f32 %v2089, %v2669
          %v2926 = vadd.f32 %v2090, %v2670
          %v2927 = vadd.f32 %v2091, %v2671
          %v2928 = vadd.f32 %v2092, %v2672
          %v2929 = vadd.f32 %v2093, %v2673
          %v2930 = vadd.f32 %v2094, %v2674
          %v2931 = vadd.f32 %v2095, %v2675
          %v2932 = vadd.f32 %v2096, %v2676
          %v2933 = vadd.f32 %v2097, %v2677
          %v2934 = vadd.f32 %v2098, %v2678
          %v2935 = vadd.f32 %v2099, %v2679
          %v2936 = vadd.f32 %v2100, %v2680
          %v2937 = vadd.f32 %v2101, %v2681
          %v2938 = vadd.f32 %v2102, %v2682
          %v2939 = vadd.f32 %v2103, %v2683
          %v2940 = vadd.f32 %v2104, %v2684
          %v2941 = vadd.f32 %v2105, %v2685
          %v2942 = vadd.f32 %v2106, %v2686
          %v2943 = vadd.f32 %v2107, %v2687
          %v2944 = vadd.f32 %v2108, %v2688
          %v2945 = vadd.f32 %v2109, %v2689
          %v2946 = vadd.f32 %v2110, %v2690
          %v2947 = vadd.f32 %v2111, %v2691
          %v2948 = vadd.f32 %v2112, %v2692
          %v2949 = vadd.f32 %v2113, %v2693
          %v2950 = vadd.f32 %v2114, %v2694
          %v2951 = vadd.f32 %v2115, %v2695
          %v2952 = vadd.f32 %v2116, %v2696
          %v2953 = vadd.f32 %v2117, %v2697
          %v2954 = vadd.f32 %v2118, %v2698
          %v2955 = vadd.f32 %v2119, %v2699
          %v2956 = vadd.f32 %v2120, %v2700
          %v2957 = vadd.f32 %v2121, %v2701
          %v2958 = vadd.f32 %v2122, %v2702
          %v2959 = vadd.f32 %v2123, %v2703
          %v2960 = vadd.f32 %v2124, %v2704
          %v2961 = vadd.f32 %v2125, %v2705
          %v2962 = vadd.f32 %v2126, %v2706
          %v2963 = vadd.f32 %v2127, %v2707
          %v2964 = vadd.f32 %v2128, %v2708
          %v2965 = vadd.f32 %v2129, %v2709
          %v2966 = vadd.f32 %v2130, %v2710
          %v2967 = vadd.f32 %v2131, %v2711
          %v2968 = vlaneseq
          %v2969 = vshrl.u32 %v2968, 7
          %v2970 = vsub.s32 3, %v2969
          %v2971 = vrot.slane %v452, %v2970
          %v2972 = vlaneseq
          %v2973 = vshrl.u32 %v2972, 7
          %v2974 = vsub.s32 7, %v2973
          %v2975 = vrot.slane %v452, %v2974
          %v2976 = vlaneseq
          %v2977 = vshrl.u32 %v2976, 7
          %v2978 = vsub.s32 3, %v2977
          %v2979 = vrot.slane %v453, %v2978
          %v2980 = vlaneseq
          %v2981 = vshrl.u32 %v2980, 7
          %v2982 = vsub.s32 7, %v2981
          %v2983 = vrot.slane %v453, %v2982
          %v2988 = vlaneseq
          %v2989 = vshrl.u32 %v2988, 7
          %v2990 = vsub.s32 3, %v2989
          %v2991 = vrot.slane %v2971, %v2990
          %2993 = vbcast.lane.b32.xlu0 %v2991, 256
          %v2994 = vpop.permute.xlu0 %2993
          %s2996 = sor.u32 256, 8
          %2997 = vbcast.lane.b32.xlu0 %v2991, %s2996
          %v2998 = vpop.permute.xlu0 %2997
          %s3000 = sor.u32 256, 16
          %3001 = vbcast.lane.b32.xlu0 %v2991, %s3000
          %v3002 = vpop.permute.xlu0 %3001
          %s3004 = sor.u32 256, 24
          %3005 = vbcast.lane.b32.xlu0 %v2991, %s3004
          %v3006 = vpop.permute.xlu0 %3005
          %s3008 = sor.u32 256, 32
          %3009 = vbcast.lane.b32.xlu0 %v2991, %s3008
          %v3010 = vpop.permute.xlu0 %3009
          %s3012 = sor.u32 256, 40
          %3013 = vbcast.lane.b32.xlu0 %v2991, %s3012
          %v3014 = vpop.permute.xlu0 %3013
          %s3016 = sor.u32 256, 48
          %3017 = vbcast.lane.b32.xlu0 %v2991, %s3016
          %v3018 = vpop.permute.xlu0 %3017
          %s3020 = sor.u32 256, 56
          %3021 = vbcast.lane.b32.xlu0 %v2991, %s3020
          %v3022 = vpop.permute.xlu0 %3021
          %s3024 = sor.u32 256, 64
          %3025 = vbcast.lane.b32.xlu0 %v2991, %s3024
          %v3026 = vpop.permute.xlu0 %3025
          %s3028 = sor.u32 256, 72
          %3029 = vbcast.lane.b32.xlu0 %v2991, %s3028
          %v3030 = vpop.permute.xlu0 %3029
          %s3032 = sor.u32 256, 80
          %3033 = vbcast.lane.b32.xlu0 %v2991, %s3032
          %v3034 = vpop.permute.xlu0 %3033
          %s3036 = sor.u32 256, 88
          %3037 = vbcast.lane.b32.xlu0 %v2991, %s3036
          %v3038 = vpop.permute.xlu0 %3037
          %s3040 = sor.u32 256, 96
          %3041 = vbcast.lane.b32.xlu0 %v2991, %s3040
          %v3042 = vpop.permute.xlu0 %3041
          %s3044 = sor.u32 256, 104
          %3045 = vbcast.lane.b32.xlu0 %v2991, %s3044
          %v3046 = vpop.permute.xlu0 %3045
          %s3048 = sor.u32 256, 112
          %3049 = vbcast.lane.b32.xlu0 %v2991, %s3048
          %v3050 = vpop.permute.xlu0 %3049
          %s3052 = sor.u32 256, 120
          %3053 = vbcast.lane.b32.xlu0 %v2991, %s3052
          %v3054 = vpop.permute.xlu0 %3053
          %v3055 = vlaneseq
          %v3056 = vshrl.u32 %v3055, 7
          %v3057 = vsub.s32 3, %v3056
          %v3058 = vrot.slane %v2975, %v3057
          %3060 = vbcast.lane.b32.xlu0 %v3058, 256
          %v3061 = vpop.permute.xlu0 %3060
          %s3063 = sor.u32 256, 8
          %3064 = vbcast.lane.b32.xlu0 %v3058, %s3063
          %v3065 = vpop.permute.xlu0 %3064
          %s3067 = sor.u32 256, 16
          %3068 = vbcast.lane.b32.xlu0 %v3058, %s3067
          %v3069 = vpop.permute.xlu0 %3068
          %s3071 = sor.u32 256, 24
          %3072 = vbcast.lane.b32.xlu0 %v3058, %s3071
          %v3073 = vpop.permute.xlu0 %3072
          %s3075 = sor.u32 256, 32
          %3076 = vbcast.lane.b32.xlu0 %v3058, %s3075
          %v3077 = vpop.permute.xlu0 %3076
          %s3079 = sor.u32 256, 40
          %3080 = vbcast.lane.b32.xlu0 %v3058, %s3079
          %v3081 = vpop.permute.xlu0 %3080
          %s3083 = sor.u32 256, 48
          %3084 = vbcast.lane.b32.xlu0 %v3058, %s3083
          %v3085 = vpop.permute.xlu0 %3084
          %s3087 = sor.u32 256, 56
          %3088 = vbcast.lane.b32.xlu0 %v3058, %s3087
          %v3089 = vpop.permute.xlu0 %3088
          %s3091 = sor.u32 256, 64
          %3092 = vbcast.lane.b32.xlu0 %v3058, %s3091
          %v3093 = vpop.permute.xlu0 %3092
          %s3095 = sor.u32 256, 72
          %3096 = vbcast.lane.b32.xlu0 %v3058, %s3095
          %v3097 = vpop.permute.xlu0 %3096
          %s3099 = sor.u32 256, 80
          %3100 = vbcast.lane.b32.xlu0 %v3058, %s3099
          %v3101 = vpop.permute.xlu0 %3100
          %s3103 = sor.u32 256, 88
          %3104 = vbcast.lane.b32.xlu0 %v3058, %s3103
          %v3105 = vpop.permute.xlu0 %3104
          %s3107 = sor.u32 256, 96
          %3108 = vbcast.lane.b32.xlu0 %v3058, %s3107
          %v3109 = vpop.permute.xlu0 %3108
          %s3111 = sor.u32 256, 104
          %3112 = vbcast.lane.b32.xlu0 %v3058, %s3111
          %v3113 = vpop.permute.xlu0 %3112
          %s3115 = sor.u32 256, 112
          %3116 = vbcast.lane.b32.xlu0 %v3058, %s3115
          %v3117 = vpop.permute.xlu0 %3116
          %s3119 = sor.u32 256, 120
          %3120 = vbcast.lane.b32.xlu0 %v3058, %s3119
          %v3121 = vpop.permute.xlu0 %3120
          %v3122 = vlaneseq
          %v3123 = vshrl.u32 %v3122, 7
          %v3124 = vsub.s32 3, %v3123
          %v3125 = vrot.slane %v2979, %v3124
          %3127 = vbcast.lane.b32.xlu0 %v3125, 256
          %v3128 = vpop.permute.xlu0 %3127
          %s3130 = sor.u32 256, 8
          %3131 = vbcast.lane.b32.xlu0 %v3125, %s3130
          %v3132 = vpop.permute.xlu0 %3131
          %s3134 = sor.u32 256, 16
          %3135 = vbcast.lane.b32.xlu0 %v3125, %s3134
          %v3136 = vpop.permute.xlu0 %3135
          %s3138 = sor.u32 256, 24
          %3139 = vbcast.lane.b32.xlu0 %v3125, %s3138
          %v3140 = vpop.permute.xlu0 %3139
          %s3142 = sor.u32 256, 32
          %3143 = vbcast.lane.b32.xlu0 %v3125, %s3142
          %v3144 = vpop.permute.xlu0 %3143
          %s3146 = sor.u32 256, 40
          %3147 = vbcast.lane.b32.xlu0 %v3125, %s3146
          %v3148 = vpop.permute.xlu0 %3147
          %s3150 = sor.u32 256, 48
          %3151 = vbcast.lane.b32.xlu0 %v3125, %s3150
          %v3152 = vpop.permute.xlu0 %3151
          %s3154 = sor.u32 256, 56
          %3155 = vbcast.lane.b32.xlu0 %v3125, %s3154
          %v3156 = vpop.permute.xlu0 %3155
          %s3158 = sor.u32 256, 64
          %3159 = vbcast.lane.b32.xlu0 %v3125, %s3158
          %v3160 = vpop.permute.xlu0 %3159
          %s3162 = sor.u32 256, 72
          %3163 = vbcast.lane.b32.xlu0 %v3125, %s3162
          %v3164 = vpop.permute.xlu0 %3163
          %s3166 = sor.u32 256, 80
          %3167 = vbcast.lane.b32.xlu0 %v3125, %s3166
          %v3168 = vpop.permute.xlu0 %3167
          %s3170 = sor.u32 256, 88
          %3171 = vbcast.lane.b32.xlu0 %v3125, %s3170
          %v3172 = vpop.permute.xlu0 %3171
          %s3174 = sor.u32 256, 96
          %3175 = vbcast.lane.b32.xlu0 %v3125, %s3174
          %v3176 = vpop.permute.xlu0 %3175
          %s3178 = sor.u32 256, 104
          %3179 = vbcast.lane.b32.xlu0 %v3125, %s3178
          %v3180 = vpop.permute.xlu0 %3179
          %s3182 = sor.u32 256, 112
          %3183 = vbcast.lane.b32.xlu0 %v3125, %s3182
          %v3184 = vpop.permute.xlu0 %3183
          %s3186 = sor.u32 256, 120
          %3187 = vbcast.lane.b32.xlu0 %v3125, %s3186
          %v3188 = vpop.permute.xlu0 %3187
          %v3189 = vlaneseq
          %v3190 = vshrl.u32 %v3189, 7
          %v3191 = vsub.s32 3, %v3190
          %v3192 = vrot.slane %v2983, %v3191
          %3194 = vbcast.lane.b32.xlu0 %v3192, 256
          %v3195 = vpop.permute.xlu0 %3194
          %s3197 = sor.u32 256, 8
          %3198 = vbcast.lane.b32.xlu0 %v3192, %s3197
          %v3199 = vpop.permute.xlu0 %3198
          %s3201 = sor.u32 256, 16
          %3202 = vbcast.lane.b32.xlu0 %v3192, %s3201
          %v3203 = vpop.permute.xlu0 %3202
          %s3205 = sor.u32 256, 24
          %3206 = vbcast.lane.b32.xlu0 %v3192, %s3205
          %v3207 = vpop.permute.xlu0 %3206
          %s3209 = sor.u32 256, 32
          %3210 = vbcast.lane.b32.xlu0 %v3192, %s3209
          %v3211 = vpop.permute.xlu0 %3210
          %s3213 = sor.u32 256, 40
          %3214 = vbcast.lane.b32.xlu0 %v3192, %s3213
          %v3215 = vpop.permute.xlu0 %3214
          %s3217 = sor.u32 256, 48
          %3218 = vbcast.lane.b32.xlu0 %v3192, %s3217
          %v3219 = vpop.permute.xlu0 %3218
          %s3221 = sor.u32 256, 56
          %3222 = vbcast.lane.b32.xlu0 %v3192, %s3221
          %v3223 = vpop.permute.xlu0 %3222
          %s3225 = sor.u32 256, 64
          %3226 = vbcast.lane.b32.xlu0 %v3192, %s3225
          %v3227 = vpop.permute.xlu0 %3226
          %s3229 = sor.u32 256, 72
          %3230 = vbcast.lane.b32.xlu0 %v3192, %s3229
          %v3231 = vpop.permute.xlu0 %3230
          %s3233 = sor.u32 256, 80
          %3234 = vbcast.lane.b32.xlu0 %v3192, %s3233
          %v3235 = vpop.permute.xlu0 %3234
          %s3237 = sor.u32 256, 88
          %3238 = vbcast.lane.b32.xlu0 %v3192, %s3237
          %v3239 = vpop.permute.xlu0 %3238
          %s3241 = sor.u32 256, 96
          %3242 = vbcast.lane.b32.xlu0 %v3192, %s3241
          %v3243 = vpop.permute.xlu0 %3242
          %s3245 = sor.u32 256, 104
          %3246 = vbcast.lane.b32.xlu0 %v3192, %s3245
          %v3247 = vpop.permute.xlu0 %3246
          %s3249 = sor.u32 256, 112
          %3250 = vbcast.lane.b32.xlu0 %v3192, %s3249
          %v3251 = vpop.permute.xlu0 %3250
          %s3253 = sor.u32 256, 120
          %3254 = vbcast.lane.b32.xlu0 %v3192, %s3253
          %v3255 = vpop.permute.xlu0 %3254
          %v3256 = vlaneseq
          %v3257 = vshrl.u32 %v3256, 7
          %v3258 = vsub.s32 3, %v3257
          %v3259 = vrot.slane %v454, %v3258
          %v3260 = vlaneseq
          %v3261 = vshrl.u32 %v3260, 7
          %v3262 = vsub.s32 7, %v3261
          %v3263 = vrot.slane %v454, %v3262
          %v3264 = vlaneseq
          %v3265 = vshrl.u32 %v3264, 7
          %v3266 = vsub.s32 3, %v3265
          %v3267 = vrot.slane %v455, %v3266
          %v3268 = vlaneseq
          %v3269 = vshrl.u32 %v3268, 7
          %v3270 = vsub.s32 7, %v3269
          %v3271 = vrot.slane %v455, %v3270
          %v3276 = vlaneseq
          %v3277 = vshrl.u32 %v3276, 7
          %v3278 = vsub.s32 3, %v3277
          %v3279 = vrot.slane %v3259, %v3278
          %v3280 = vlaneseq
          %v3281 = vshrl.u32 %v3280, 7
          %v3282 = vsub.s32 3, %v3281
          %v3283 = vrot.slane %v3263, %v3282
          %v3284 = vlaneseq
          %v3285 = vshrl.u32 %v3284, 7
          %v3286 = vsub.s32 3, %v3285
          %v3287 = vrot.slane %v3267, %v3286
          %v3288 = vlaneseq
          %v3289 = vshrl.u32 %v3288, 7
          %v3290 = vsub.s32 3, %v3289
          %v3291 = vrot.slane %v3271, %v3290
          %v3292 = vmul.f32 %v2994, %v3279
          %v3293 = vmul.f32 %v2994, %v3283
          %v3294 = vmul.f32 %v2994, %v3287
          %v3295 = vmul.f32 %v2994, %v3291
          %v3296 = vmul.f32 %v2998, %v3279
          %v3297 = vmul.f32 %v2998, %v3283
          %v3298 = vmul.f32 %v2998, %v3287
          %v3299 = vmul.f32 %v2998, %v3291
          %v3300 = vmul.f32 %v3002, %v3279
          %v3301 = vmul.f32 %v3002, %v3283
          %v3302 = vmul.f32 %v3002, %v3287
          %v3303 = vmul.f32 %v3002, %v3291
          %v3304 = vmul.f32 %v3006, %v3279
          %v3305 = vmul.f32 %v3006, %v3283
          %v3306 = vmul.f32 %v3006, %v3287
          %v3307 = vmul.f32 %v3006, %v3291
          %v3308 = vmul.f32 %v3010, %v3279
          %v3309 = vmul.f32 %v3010, %v3283
          %v3310 = vmul.f32 %v3010, %v3287
          %v3311 = vmul.f32 %v3010, %v3291
          %v3312 = vmul.f32 %v3014, %v3279
          %v3313 = vmul.f32 %v3014, %v3283
          %v3314 = vmul.f32 %v3014, %v3287
          %v3315 = vmul.f32 %v3014, %v3291
          %v3316 = vmul.f32 %v3018, %v3279
          %v3317 = vmul.f32 %v3018, %v3283
          %v3318 = vmul.f32 %v3018, %v3287
          %v3319 = vmul.f32 %v3018, %v3291
          %v3320 = vmul.f32 %v3022, %v3279
          %v3321 = vmul.f32 %v3022, %v3283
          %v3322 = vmul.f32 %v3022, %v3287
          %v3323 = vmul.f32 %v3022, %v3291
          %v3324 = vmul.f32 %v3026, %v3279
          %v3325 = vmul.f32 %v3026, %v3283
          %v3326 = vmul.f32 %v3026, %v3287
          %v3327 = vmul.f32 %v3026, %v3291
          %v3328 = vmul.f32 %v3030, %v3279
          %v3329 = vmul.f32 %v3030, %v3283
          %v3330 = vmul.f32 %v3030, %v3287
          %v3331 = vmul.f32 %v3030, %v3291
          %v3332 = vmul.f32 %v3034, %v3279
          %v3333 = vmul.f32 %v3034, %v3283
          %v3334 = vmul.f32 %v3034, %v3287
          %v3335 = vmul.f32 %v3034, %v3291
          %v3336 = vmul.f32 %v3038, %v3279
          %v3337 = vmul.f32 %v3038, %v3283
          %v3338 = vmul.f32 %v3038, %v3287
          %v3339 = vmul.f32 %v3038, %v3291
          %v3340 = vmul.f32 %v3042, %v3279
          %v3341 = vmul.f32 %v3042, %v3283
          %v3342 = vmul.f32 %v3042, %v3287
          %v3343 = vmul.f32 %v3042, %v3291
          %v3344 = vmul.f32 %v3046, %v3279
          %v3345 = vmul.f32 %v3046, %v3283
          %v3346 = vmul.f32 %v3046, %v3287
          %v3347 = vmul.f32 %v3046, %v3291
          %v3348 = vmul.f32 %v3050, %v3279
          %v3349 = vmul.f32 %v3050, %v3283
          %v3350 = vmul.f32 %v3050, %v3287
          %v3351 = vmul.f32 %v3050, %v3291
          %v3352 = vmul.f32 %v3054, %v3279
          %v3353 = vmul.f32 %v3054, %v3283
          %v3354 = vmul.f32 %v3054, %v3287
          %v3355 = vmul.f32 %v3054, %v3291
          %v3356 = vmul.f32 %v3061, %v3279
          %v3357 = vmul.f32 %v3061, %v3283
          %v3358 = vmul.f32 %v3061, %v3287
          %v3359 = vmul.f32 %v3061, %v3291
          %v3360 = vmul.f32 %v3065, %v3279
          %v3361 = vmul.f32 %v3065, %v3283
          %v3362 = vmul.f32 %v3065, %v3287
          %v3363 = vmul.f32 %v3065, %v3291
          %v3364 = vmul.f32 %v3069, %v3279
          %v3365 = vmul.f32 %v3069, %v3283
          %v3366 = vmul.f32 %v3069, %v3287
          %v3367 = vmul.f32 %v3069, %v3291
          %v3368 = vmul.f32 %v3073, %v3279
          %v3369 = vmul.f32 %v3073, %v3283
          %v3370 = vmul.f32 %v3073, %v3287
          %v3371 = vmul.f32 %v3073, %v3291
          %v3372 = vmul.f32 %v3077, %v3279
          %v3373 = vmul.f32 %v3077, %v3283
          %v3374 = vmul.f32 %v3077, %v3287
          %v3375 = vmul.f32 %v3077, %v3291
          %v3376 = vmul.f32 %v3081, %v3279
          %v3377 = vmul.f32 %v3081, %v3283
          %v3378 = vmul.f32 %v3081, %v3287
          %v3379 = vmul.f32 %v3081, %v3291
          %v3380 = vmul.f32 %v3085, %v3279
          %v3381 = vmul.f32 %v3085, %v3283
          %v3382 = vmul.f32 %v3085, %v3287
          %v3383 = vmul.f32 %v3085, %v3291
          %v3384 = vmul.f32 %v3089, %v3279
          %v3385 = vmul.f32 %v3089, %v3283
          %v3386 = vmul.f32 %v3089, %v3287
          %v3387 = vmul.f32 %v3089, %v3291
          %v3388 = vmul.f32 %v3093, %v3279
          %v3389 = vmul.f32 %v3093, %v3283
          %v3390 = vmul.f32 %v3093, %v3287
          %v3391 = vmul.f32 %v3093, %v3291
          %v3392 = vmul.f32 %v3097, %v3279
          %v3393 = vmul.f32 %v3097, %v3283
          %v3394 = vmul.f32 %v3097, %v3287
          %v3395 = vmul.f32 %v3097, %v3291
          %v3396 = vmul.f32 %v3101, %v3279
          %v3397 = vmul.f32 %v3101, %v3283
          %v3398 = vmul.f32 %v3101, %v3287
          %v3399 = vmul.f32 %v3101, %v3291
          %v3400 = vmul.f32 %v3105, %v3279
          %v3401 = vmul.f32 %v3105, %v3283
          %v3402 = vmul.f32 %v3105, %v3287
          %v3403 = vmul.f32 %v3105, %v3291
          %v3404 = vmul.f32 %v3109, %v3279
          %v3405 = vmul.f32 %v3109, %v3283
          %v3406 = vmul.f32 %v3109, %v3287
          %v3407 = vmul.f32 %v3109, %v3291
          %v3408 = vmul.f32 %v3113, %v3279
          %v3409 = vmul.f32 %v3113, %v3283
          %v3410 = vmul.f32 %v3113, %v3287
          %v3411 = vmul.f32 %v3113, %v3291
          %v3412 = vmul.f32 %v3117, %v3279
          %v3413 = vmul.f32 %v3117, %v3283
          %v3414 = vmul.f32 %v3117, %v3287
          %v3415 = vmul.f32 %v3117, %v3291
          %v3416 = vmul.f32 %v3121, %v3279
          %v3417 = vmul.f32 %v3121, %v3283
          %v3418 = vmul.f32 %v3121, %v3287
          %v3419 = vmul.f32 %v3121, %v3291
          %v3420 = vmul.f32 %v3128, %v3279
          %v3421 = vmul.f32 %v3128, %v3283
          %v3422 = vmul.f32 %v3128, %v3287
          %v3423 = vmul.f32 %v3128, %v3291
          %v3424 = vmul.f32 %v3132, %v3279
          %v3425 = vmul.f32 %v3132, %v3283
          %v3426 = vmul.f32 %v3132, %v3287
          %v3427 = vmul.f32 %v3132, %v3291
          %v3428 = vmul.f32 %v3136, %v3279
          %v3429 = vmul.f32 %v3136, %v3283
          %v3430 = vmul.f32 %v3136, %v3287
          %v3431 = vmul.f32 %v3136, %v3291
          %v3432 = vmul.f32 %v3140, %v3279
          %v3433 = vmul.f32 %v3140, %v3283
          %v3434 = vmul.f32 %v3140, %v3287
          %v3435 = vmul.f32 %v3140, %v3291
          %v3436 = vmul.f32 %v3144, %v3279
          %v3437 = vmul.f32 %v3144, %v3283
          %v3438 = vmul.f32 %v3144, %v3287
          %v3439 = vmul.f32 %v3144, %v3291
          %v3440 = vmul.f32 %v3148, %v3279
          %v3441 = vmul.f32 %v3148, %v3283
          %v3442 = vmul.f32 %v3148, %v3287
          %v3443 = vmul.f32 %v3148, %v3291
          %v3444 = vmul.f32 %v3152, %v3279
          %v3445 = vmul.f32 %v3152, %v3283
          %v3446 = vmul.f32 %v3152, %v3287
          %v3447 = vmul.f32 %v3152, %v3291
          %v3448 = vmul.f32 %v3156, %v3279
          %v3449 = vmul.f32 %v3156, %v3283
          %v3450 = vmul.f32 %v3156, %v3287
          %v3451 = vmul.f32 %v3156, %v3291
          %v3452 = vmul.f32 %v3160, %v3279
          %v3453 = vmul.f32 %v3160, %v3283
          %v3454 = vmul.f32 %v3160, %v3287
          %v3455 = vmul.f32 %v3160, %v3291
          %v3456 = vmul.f32 %v3164, %v3279
          %v3457 = vmul.f32 %v3164, %v3283
          %v3458 = vmul.f32 %v3164, %v3287
          %v3459 = vmul.f32 %v3164, %v3291
          %v3460 = vmul.f32 %v3168, %v3279
          %v3461 = vmul.f32 %v3168, %v3283
          %v3462 = vmul.f32 %v3168, %v3287
          %v3463 = vmul.f32 %v3168, %v3291
          %v3464 = vmul.f32 %v3172, %v3279
          %v3465 = vmul.f32 %v3172, %v3283
          %v3466 = vmul.f32 %v3172, %v3287
          %v3467 = vmul.f32 %v3172, %v3291
          %v3468 = vmul.f32 %v3176, %v3279
          %v3469 = vmul.f32 %v3176, %v3283
          %v3470 = vmul.f32 %v3176, %v3287
          %v3471 = vmul.f32 %v3176, %v3291
          %v3472 = vmul.f32 %v3180, %v3279
          %v3473 = vmul.f32 %v3180, %v3283
          %v3474 = vmul.f32 %v3180, %v3287
          %v3475 = vmul.f32 %v3180, %v3291
          %v3476 = vmul.f32 %v3184, %v3279
          %v3477 = vmul.f32 %v3184, %v3283
          %v3478 = vmul.f32 %v3184, %v3287
          %v3479 = vmul.f32 %v3184, %v3291
          %v3480 = vmul.f32 %v3188, %v3279
          %v3481 = vmul.f32 %v3188, %v3283
          %v3482 = vmul.f32 %v3188, %v3287
          %v3483 = vmul.f32 %v3188, %v3291
          %v3484 = vmul.f32 %v3195, %v3279
          %v3485 = vmul.f32 %v3195, %v3283
          %v3486 = vmul.f32 %v3195, %v3287
          %v3487 = vmul.f32 %v3195, %v3291
          %v3488 = vmul.f32 %v3199, %v3279
          %v3489 = vmul.f32 %v3199, %v3283
          %v3490 = vmul.f32 %v3199, %v3287
          %v3491 = vmul.f32 %v3199, %v3291
          %v3492 = vmul.f32 %v3203, %v3279
          %v3493 = vmul.f32 %v3203, %v3283
          %v3494 = vmul.f32 %v3203, %v3287
          %v3495 = vmul.f32 %v3203, %v3291
          %v3496 = vmul.f32 %v3207, %v3279
          %v3497 = vmul.f32 %v3207, %v3283
          %v3498 = vmul.f32 %v3207, %v3287
          %v3499 = vmul.f32 %v3207, %v3291
          %v3500 = vmul.f32 %v3211, %v3279
          %v3501 = vmul.f32 %v3211, %v3283
          %v3502 = vmul.f32 %v3211, %v3287
          %v3503 = vmul.f32 %v3211, %v3291
          %v3504 = vmul.f32 %v3215, %v3279
          %v3505 = vmul.f32 %v3215, %v3283
          %v3506 = vmul.f32 %v3215, %v3287
          %v3507 = vmul.f32 %v3215, %v3291
          %v3508 = vmul.f32 %v3219, %v3279
          %v3509 = vmul.f32 %v3219, %v3283
          %v3510 = vmul.f32 %v3219, %v3287
          %v3511 = vmul.f32 %v3219, %v3291
          %v3512 = vmul.f32 %v3223, %v3279
          %v3513 = vmul.f32 %v3223, %v3283
          %v3514 = vmul.f32 %v3223, %v3287
          %v3515 = vmul.f32 %v3223, %v3291
          %v3516 = vmul.f32 %v3227, %v3279
          %v3517 = vmul.f32 %v3227, %v3283
          %v3518 = vmul.f32 %v3227, %v3287
          %v3519 = vmul.f32 %v3227, %v3291
          %v3520 = vmul.f32 %v3231, %v3279
          %v3521 = vmul.f32 %v3231, %v3283
          %v3522 = vmul.f32 %v3231, %v3287
          %v3523 = vmul.f32 %v3231, %v3291
          %v3524 = vmul.f32 %v3235, %v3279
          %v3525 = vmul.f32 %v3235, %v3283
          %v3526 = vmul.f32 %v3235, %v3287
          %v3527 = vmul.f32 %v3235, %v3291
          %v3528 = vmul.f32 %v3239, %v3279
          %v3529 = vmul.f32 %v3239, %v3283
          %v3530 = vmul.f32 %v3239, %v3287
          %v3531 = vmul.f32 %v3239, %v3291
          %v3532 = vmul.f32 %v3243, %v3279
          %v3533 = vmul.f32 %v3243, %v3283
          %v3534 = vmul.f32 %v3243, %v3287
          %v3535 = vmul.f32 %v3243, %v3291
          %v3536 = vmul.f32 %v3247, %v3279
          %v3537 = vmul.f32 %v3247, %v3283
          %v3538 = vmul.f32 %v3247, %v3287
          %v3539 = vmul.f32 %v3247, %v3291
          %v3540 = vmul.f32 %v3251, %v3279
          %v3541 = vmul.f32 %v3251, %v3283
          %v3542 = vmul.f32 %v3251, %v3287
          %v3543 = vmul.f32 %v3251, %v3291
          %v3544 = vmul.f32 %v3255, %v3279
          %v3545 = vmul.f32 %v3255, %v3283
          %v3546 = vmul.f32 %v3255, %v3287
          %v3547 = vmul.f32 %v3255, %v3291
          %v3548 = vadd.f32 %v2712, %v3292
          %v3549 = vadd.f32 %v2713, %v3293
          %v3550 = vadd.f32 %v2714, %v3294
          %v3551 = vadd.f32 %v2715, %v3295
          %v3552 = vadd.f32 %v2716, %v3296
          %v3553 = vadd.f32 %v2717, %v3297
          %v3554 = vadd.f32 %v2718, %v3298
          %v3555 = vadd.f32 %v2719, %v3299
          %v3556 = vadd.f32 %v2720, %v3300
          %v3557 = vadd.f32 %v2721, %v3301
          %v3558 = vadd.f32 %v2722, %v3302
          %v3559 = vadd.f32 %v2723, %v3303
          %v3560 = vadd.f32 %v2724, %v3304
          %v3561 = vadd.f32 %v2725, %v3305
          %v3562 = vadd.f32 %v2726, %v3306
          %v3563 = vadd.f32 %v2727, %v3307
          %v3564 = vadd.f32 %v2728, %v3308
          %v3565 = vadd.f32 %v2729, %v3309
          %v3566 = vadd.f32 %v2730, %v3310
          %v3567 = vadd.f32 %v2731, %v3311
          %v3568 = vadd.f32 %v2732, %v3312
          %v3569 = vadd.f32 %v2733, %v3313
          %v3570 = vadd.f32 %v2734, %v3314
          %v3571 = vadd.f32 %v2735, %v3315
          %v3572 = vadd.f32 %v2736, %v3316
          %v3573 = vadd.f32 %v2737, %v3317
          %v3574 = vadd.f32 %v2738, %v3318
          %v3575 = vadd.f32 %v2739, %v3319
          %v3576 = vadd.f32 %v2740, %v3320
          %v3577 = vadd.f32 %v2741, %v3321
          %v3578 = vadd.f32 %v2742, %v3322
          %v3579 = vadd.f32 %v2743, %v3323
          %v3580 = vadd.f32 %v2744, %v3324
          %v3581 = vadd.f32 %v2745, %v3325
          %v3582 = vadd.f32 %v2746, %v3326
          %v3583 = vadd.f32 %v2747, %v3327
          %v3584 = vadd.f32 %v2748, %v3328
          %v3585 = vadd.f32 %v2749, %v3329
          %v3586 = vadd.f32 %v2750, %v3330
          %v3587 = vadd.f32 %v2751, %v3331
          %v3588 = vadd.f32 %v2752, %v3332
          %v3589 = vadd.f32 %v2753, %v3333
          %v3590 = vadd.f32 %v2754, %v3334
          %v3591 = vadd.f32 %v2755, %v3335
          %v3592 = vadd.f32 %v2756, %v3336
          %v3593 = vadd.f32 %v2757, %v3337
          %v3594 = vadd.f32 %v2758, %v3338
          %v3595 = vadd.f32 %v2759, %v3339
          %v3596 = vadd.f32 %v2760, %v3340
          %v3597 = vadd.f32 %v2761, %v3341
          %v3598 = vadd.f32 %v2762, %v3342
          %v3599 = vadd.f32 %v2763, %v3343
          %v3600 = vadd.f32 %v2764, %v3344
          %v3601 = vadd.f32 %v2765, %v3345
          %v3602 = vadd.f32 %v2766, %v3346
          %v3603 = vadd.f32 %v2767, %v3347
          %v3604 = vadd.f32 %v2768, %v3348
          %v3605 = vadd.f32 %v2769, %v3349
          %v3606 = vadd.f32 %v2770, %v3350
          %v3607 = vadd.f32 %v2771, %v3351
          %v3608 = vadd.f32 %v2772, %v3352
          %v3609 = vadd.f32 %v2773, %v3353
          %v3610 = vadd.f32 %v2774, %v3354
          %v3611 = vadd.f32 %v2775, %v3355
          %v3612 = vadd.f32 %v2776, %v3356
          %v3613 = vadd.f32 %v2777, %v3357
          %v3614 = vadd.f32 %v2778, %v3358
          %v3615 = vadd.f32 %v2779, %v3359
          %v3616 = vadd.f32 %v2780, %v3360
          %v3617 = vadd.f32 %v2781, %v3361
          %v3618 = vadd.f32 %v2782, %v3362
          %v3619 = vadd.f32 %v2783, %v3363
          %v3620 = vadd.f32 %v2784, %v3364
          %v3621 = vadd.f32 %v2785, %v3365
          %v3622 = vadd.f32 %v2786, %v3366
          %v3623 = vadd.f32 %v2787, %v3367
          %v3624 = vadd.f32 %v2788, %v3368
          %v3625 = vadd.f32 %v2789, %v3369
          %v3626 = vadd.f32 %v2790, %v3370
          %v3627 = vadd.f32 %v2791, %v3371
          %v3628 = vadd.f32 %v2792, %v3372
          %v3629 = vadd.f32 %v2793, %v3373
          %v3630 = vadd.f32 %v2794, %v3374
          %v3631 = vadd.f32 %v2795, %v3375
          %v3632 = vadd.f32 %v2796, %v3376
          %v3633 = vadd.f32 %v2797, %v3377
          %v3634 = vadd.f32 %v2798, %v3378
          %v3635 = vadd.f32 %v2799, %v3379
          %v3636 = vadd.f32 %v2800, %v3380
          %v3637 = vadd.f32 %v2801, %v3381
          %v3638 = vadd.f32 %v2802, %v3382
          %v3639 = vadd.f32 %v2803, %v3383
          %v3640 = vadd.f32 %v2804, %v3384
          %v3641 = vadd.f32 %v2805, %v3385
          %v3642 = vadd.f32 %v2806, %v3386
          %v3643 = vadd.f32 %v2807, %v3387
          %v3644 = vadd.f32 %v2808, %v3388
          %v3645 = vadd.f32 %v2809, %v3389
          %v3646 = vadd.f32 %v2810, %v3390
          %v3647 = vadd.f32 %v2811, %v3391
          %v3648 = vadd.f32 %v2812, %v3392
          %v3649 = vadd.f32 %v2813, %v3393
          %v3650 = vadd.f32 %v2814, %v3394
          %v3651 = vadd.f32 %v2815, %v3395
          %v3652 = vadd.f32 %v2816, %v3396
          %v3653 = vadd.f32 %v2817, %v3397
          %v3654 = vadd.f32 %v2818, %v3398
          %v3655 = vadd.f32 %v2819, %v3399
          %v3656 = vadd.f32 %v2820, %v3400
          %v3657 = vadd.f32 %v2821, %v3401
          %v3658 = vadd.f32 %v2822, %v3402
          %v3659 = vadd.f32 %v2823, %v3403
          %v3660 = vadd.f32 %v2824, %v3404
          %v3661 = vadd.f32 %v2825, %v3405
          %v3662 = vadd.f32 %v2826, %v3406
          %v3663 = vadd.f32 %v2827, %v3407
          %v3664 = vadd.f32 %v2828, %v3408
          %v3665 = vadd.f32 %v2829, %v3409
          %v3666 = vadd.f32 %v2830, %v3410
          %v3667 = vadd.f32 %v2831, %v3411
          %v3668 = vadd.f32 %v2832, %v3412
          %v3669 = vadd.f32 %v2833, %v3413
          %v3670 = vadd.f32 %v2834, %v3414
          %v3671 = vadd.f32 %v2835, %v3415
          %v3672 = vadd.f32 %v2836, %v3416
          %v3673 = vadd.f32 %v2837, %v3417
          %v3674 = vadd.f32 %v2838, %v3418
          %v3675 = vadd.f32 %v2839, %v3419
          %v3676 = vadd.f32 %v2840, %v3420
          %v3677 = vadd.f32 %v2841, %v3421
          %v3678 = vadd.f32 %v2842, %v3422
          %v3679 = vadd.f32 %v2843, %v3423
          %v3680 = vadd.f32 %v2844, %v3424
          %v3681 = vadd.f32 %v2845, %v3425
          %v3682 = vadd.f32 %v2846, %v3426
          %v3683 = vadd.f32 %v2847, %v3427
          %v3684 = vadd.f32 %v2848, %v3428
          %v3685 = vadd.f32 %v2849, %v3429
          %v3686 = vadd.f32 %v2850, %v3430
          %v3687 = vadd.f32 %v2851, %v3431
          %v3688 = vadd.f32 %v2852, %v3432
          %v3689 = vadd.f32 %v2853, %v3433
          %v3690 = vadd.f32 %v2854, %v3434
          %v3691 = vadd.f32 %v2855, %v3435
          %v3692 = vadd.f32 %v2856, %v3436
          %v3693 = vadd.f32 %v2857, %v3437
          %v3694 = vadd.f32 %v2858, %v3438
          %v3695 = vadd.f32 %v2859, %v3439
          %v3696 = vadd.f32 %v2860, %v3440
          %v3697 = vadd.f32 %v2861, %v3441
          %v3698 = vadd.f32 %v2862, %v3442
          %v3699 = vadd.f32 %v2863, %v3443
          %v3700 = vadd.f32 %v2864, %v3444
          %v3701 = vadd.f32 %v2865, %v3445
          %v3702 = vadd.f32 %v2866, %v3446
          %v3703 = vadd.f32 %v2867, %v3447
          %v3704 = vadd.f32 %v2868, %v3448
          %v3705 = vadd.f32 %v2869, %v3449
          %v3706 = vadd.f32 %v2870, %v3450
          %v3707 = vadd.f32 %v2871, %v3451
          %v3708 = vadd.f32 %v2872, %v3452
          %v3709 = vadd.f32 %v2873, %v3453
          %v3710 = vadd.f32 %v2874, %v3454
          %v3711 = vadd.f32 %v2875, %v3455
          %v3712 = vadd.f32 %v2876, %v3456
          %v3713 = vadd.f32 %v2877, %v3457
          %v3714 = vadd.f32 %v2878, %v3458
          %v3715 = vadd.f32 %v2879, %v3459
          %v3716 = vadd.f32 %v2880, %v3460
          %v3717 = vadd.f32 %v2881, %v3461
          %v3718 = vadd.f32 %v2882, %v3462
          %v3719 = vadd.f32 %v2883, %v3463
          %v3720 = vadd.f32 %v2884, %v3464
          %v3721 = vadd.f32 %v2885, %v3465
          %v3722 = vadd.f32 %v2886, %v3466
          %v3723 = vadd.f32 %v2887, %v3467
          %v3724 = vadd.f32 %v2888, %v3468
          %v3725 = vadd.f32 %v2889, %v3469
          %v3726 = vadd.f32 %v2890, %v3470
          %v3727 = vadd.f32 %v2891, %v3471
          %v3728 = vadd.f32 %v2892, %v3472
          %v3729 = vadd.f32 %v2893, %v3473
          %v3730 = vadd.f32 %v2894, %v3474
          %v3731 = vadd.f32 %v2895, %v3475
          %v3732 = vadd.f32 %v2896, %v3476
          %v3733 = vadd.f32 %v2897, %v3477
          %v3734 = vadd.f32 %v2898, %v3478
          %v3735 = vadd.f32 %v2899, %v3479
          %v3736 = vadd.f32 %v2900, %v3480
          %v3737 = vadd.f32 %v2901, %v3481
          %v3738 = vadd.f32 %v2902, %v3482
          %v3739 = vadd.f32 %v2903, %v3483
          %v3740 = vadd.f32 %v2904, %v3484
          %v3741 = vadd.f32 %v2905, %v3485
          %v3742 = vadd.f32 %v2906, %v3486
          %v3743 = vadd.f32 %v2907, %v3487
          %v3744 = vadd.f32 %v2908, %v3488
          %v3745 = vadd.f32 %v2909, %v3489
          %v3746 = vadd.f32 %v2910, %v3490
          %v3747 = vadd.f32 %v2911, %v3491
          %v3748 = vadd.f32 %v2912, %v3492
          %v3749 = vadd.f32 %v2913, %v3493
          %v3750 = vadd.f32 %v2914, %v3494
          %v3751 = vadd.f32 %v2915, %v3495
          %v3752 = vadd.f32 %v2916, %v3496
          %v3753 = vadd.f32 %v2917, %v3497
          %v3754 = vadd.f32 %v2918, %v3498
          %v3755 = vadd.f32 %v2919, %v3499
          %v3756 = vadd.f32 %v2920, %v3500
          %v3757 = vadd.f32 %v2921, %v3501
          %v3758 = vadd.f32 %v2922, %v3502
          %v3759 = vadd.f32 %v2923, %v3503
          %v3760 = vadd.f32 %v2924, %v3504
          %v3761 = vadd.f32 %v2925, %v3505
          %v3762 = vadd.f32 %v2926, %v3506
          %v3763 = vadd.f32 %v2927, %v3507
          %v3764 = vadd.f32 %v2928, %v3508
          %v3765 = vadd.f32 %v2929, %v3509
          %v3766 = vadd.f32 %v2930, %v3510
          %v3767 = vadd.f32 %v2931, %v3511
          %v3768 = vadd.f32 %v2932, %v3512
          %v3769 = vadd.f32 %v2933, %v3513
          %v3770 = vadd.f32 %v2934, %v3514
          %v3771 = vadd.f32 %v2935, %v3515
          %v3772 = vadd.f32 %v2936, %v3516
          %v3773 = vadd.f32 %v2937, %v3517
          %v3774 = vadd.f32 %v2938, %v3518
          %v3775 = vadd.f32 %v2939, %v3519
          %v3776 = vadd.f32 %v2940, %v3520
          %v3777 = vadd.f32 %v2941, %v3521
          %v3778 = vadd.f32 %v2942, %v3522
          %v3779 = vadd.f32 %v2943, %v3523
          %v3780 = vadd.f32 %v2944, %v3524
          %v3781 = vadd.f32 %v2945, %v3525
          %v3782 = vadd.f32 %v2946, %v3526
          %v3783 = vadd.f32 %v2947, %v3527
          %v3784 = vadd.f32 %v2948, %v3528
          %v3785 = vadd.f32 %v2949, %v3529
          %v3786 = vadd.f32 %v2950, %v3530
          %v3787 = vadd.f32 %v2951, %v3531
          %v3788 = vadd.f32 %v2952, %v3532
          %v3789 = vadd.f32 %v2953, %v3533
          %v3790 = vadd.f32 %v2954, %v3534
          %v3791 = vadd.f32 %v2955, %v3535
          %v3792 = vadd.f32 %v2956, %v3536
          %v3793 = vadd.f32 %v2957, %v3537
          %v3794 = vadd.f32 %v2958, %v3538
          %v3795 = vadd.f32 %v2959, %v3539
          %v3796 = vadd.f32 %v2960, %v3540
          %v3797 = vadd.f32 %v2961, %v3541
          %v3798 = vadd.f32 %v2962, %v3542
          %v3799 = vadd.f32 %v2963, %v3543
          %v3800 = vadd.f32 %v2964, %v3544
          %v3801 = vadd.f32 %v2965, %v3545
          %v3802 = vadd.f32 %v2966, %v3546
          %v3803 = vadd.f32 %v2967, %v3547
          %v3804 = vld [vmem:[%s3] sm:$0xf]
          %v3806 = vlaneseq
          %v3807 = vshrl.u32 %v3806, 7
          %v3808 = vsub.s32 0, %v3807
          %v3809 = vrot.slane %v3804, %v3808
          %v3810 = vlaneseq
          %v3811 = vshrl.u32 %v3810, 7
          %v3812 = vsub.s32 1, %v3811
          %v3813 = vrot.slane %v3804, %v3812
          %v3814 = vlaneseq
          %v3815 = vshrl.u32 %v3814, 7
          %v3816 = vsub.s32 2, %v3815
          %v3817 = vrot.slane %v3804, %v3816
          %v3818 = vlaneseq
          %v3819 = vshrl.u32 %v3818, 7
          %v3820 = vsub.s32 3, %v3819
          %v3821 = vrot.slane %v3804, %v3820
          %v3826 = vadd.f32 %v3548, %v3809
          %v3827 = vadd.f32 %v3549, %v3813
          %v3828 = vadd.f32 %v3550, %v3817
          %v3829 = vadd.f32 %v3551, %v3821
          %v3830 = vadd.f32 %v3552, %v3809
          %v3831 = vadd.f32 %v3553, %v3813
          %v3832 = vadd.f32 %v3554, %v3817
          %v3833 = vadd.f32 %v3555, %v3821
          %v3834 = vadd.f32 %v3556, %v3809
          %v3835 = vadd.f32 %v3557, %v3813
          %v3836 = vadd.f32 %v3558, %v3817
          %v3837 = vadd.f32 %v3559, %v3821
          %v3838 = vadd.f32 %v3560, %v3809
          %v3839 = vadd.f32 %v3561, %v3813
          %v3840 = vadd.f32 %v3562, %v3817
          %v3841 = vadd.f32 %v3563, %v3821
          %v3842 = vadd.f32 %v3564, %v3809
          %v3843 = vadd.f32 %v3565, %v3813
          %v3844 = vadd.f32 %v3566, %v3817
          %v3845 = vadd.f32 %v3567, %v3821
          %v3846 = vadd.f32 %v3568, %v3809
          %v3847 = vadd.f32 %v3569, %v3813
          %v3848 = vadd.f32 %v3570, %v3817
          %v3849 = vadd.f32 %v3571, %v3821
          %v3850 = vadd.f32 %v3572, %v3809
          %v3851 = vadd.f32 %v3573, %v3813
          %v3852 = vadd.f32 %v3574, %v3817
          %v3853 = vadd.f32 %v3575, %v3821
          %v3854 = vadd.f32 %v3576, %v3809
          %v3855 = vadd.f32 %v3577, %v3813
          %v3856 = vadd.f32 %v3578, %v3817
          %v3857 = vadd.f32 %v3579, %v3821
          %v3858 = vadd.f32 %v3580, %v3809
          %v3859 = vadd.f32 %v3581, %v3813
          %v3860 = vadd.f32 %v3582, %v3817
          %v3861 = vadd.f32 %v3583, %v3821
          %v3862 = vadd.f32 %v3584, %v3809
          %v3863 = vadd.f32 %v3585, %v3813
          %v3864 = vadd.f32 %v3586, %v3817
          %v3865 = vadd.f32 %v3587, %v3821
          %v3866 = vadd.f32 %v3588, %v3809
          %v3867 = vadd.f32 %v3589, %v3813
          %v3868 = vadd.f32 %v3590, %v3817
          %v3869 = vadd.f32 %v3591, %v3821
          %v3870 = vadd.f32 %v3592, %v3809
          %v3871 = vadd.f32 %v3593, %v3813
          %v3872 = vadd.f32 %v3594, %v3817
          %v3873 = vadd.f32 %v3595, %v3821
          %v3874 = vadd.f32 %v3596, %v3809
          %v3875 = vadd.f32 %v3597, %v3813
          %v3876 = vadd.f32 %v3598, %v3817
          %v3877 = vadd.f32 %v3599, %v3821
          %v3878 = vadd.f32 %v3600, %v3809
          %v3879 = vadd.f32 %v3601, %v3813
          %v3880 = vadd.f32 %v3602, %v3817
          %v3881 = vadd.f32 %v3603, %v3821
          %v3882 = vadd.f32 %v3604, %v3809
          %v3883 = vadd.f32 %v3605, %v3813
          %v3884 = vadd.f32 %v3606, %v3817
          %v3885 = vadd.f32 %v3607, %v3821
          %v3886 = vadd.f32 %v3608, %v3809
          %v3887 = vadd.f32 %v3609, %v3813
          %v3888 = vadd.f32 %v3610, %v3817
          %v3889 = vadd.f32 %v3611, %v3821
          %v3890 = vadd.f32 %v3612, %v3809
          %v3891 = vadd.f32 %v3613, %v3813
          %v3892 = vadd.f32 %v3614, %v3817
          %v3893 = vadd.f32 %v3615, %v3821
          %v3894 = vadd.f32 %v3616, %v3809
          %v3895 = vadd.f32 %v3617, %v3813
          %v3896 = vadd.f32 %v3618, %v3817
          %v3897 = vadd.f32 %v3619, %v3821
          %v3898 = vadd.f32 %v3620, %v3809
          %v3899 = vadd.f32 %v3621, %v3813
          %v3900 = vadd.f32 %v3622, %v3817
          %v3901 = vadd.f32 %v3623, %v3821
          %v3902 = vadd.f32 %v3624, %v3809
          %v3903 = vadd.f32 %v3625, %v3813
          %v3904 = vadd.f32 %v3626, %v3817
          %v3905 = vadd.f32 %v3627, %v3821
          %v3906 = vadd.f32 %v3628, %v3809
          %v3907 = vadd.f32 %v3629, %v3813
          %v3908 = vadd.f32 %v3630, %v3817
          %v3909 = vadd.f32 %v3631, %v3821
          %v3910 = vadd.f32 %v3632, %v3809
          %v3911 = vadd.f32 %v3633, %v3813
          %v3912 = vadd.f32 %v3634, %v3817
          %v3913 = vadd.f32 %v3635, %v3821
          %v3914 = vadd.f32 %v3636, %v3809
          %v3915 = vadd.f32 %v3637, %v3813
          %v3916 = vadd.f32 %v3638, %v3817
          %v3917 = vadd.f32 %v3639, %v3821
          %v3918 = vadd.f32 %v3640, %v3809
          %v3919 = vadd.f32 %v3641, %v3813
          %v3920 = vadd.f32 %v3642, %v3817
          %v3921 = vadd.f32 %v3643, %v3821
          %v3922 = vadd.f32 %v3644, %v3809
          %v3923 = vadd.f32 %v3645, %v3813
          %v3924 = vadd.f32 %v3646, %v3817
          %v3925 = vadd.f32 %v3647, %v3821
          %v3926 = vadd.f32 %v3648, %v3809
          %v3927 = vadd.f32 %v3649, %v3813
          %v3928 = vadd.f32 %v3650, %v3817
          %v3929 = vadd.f32 %v3651, %v3821
          %v3930 = vadd.f32 %v3652, %v3809
          %v3931 = vadd.f32 %v3653, %v3813
          %v3932 = vadd.f32 %v3654, %v3817
          %v3933 = vadd.f32 %v3655, %v3821
          %v3934 = vadd.f32 %v3656, %v3809
          %v3935 = vadd.f32 %v3657, %v3813
          %v3936 = vadd.f32 %v3658, %v3817
          %v3937 = vadd.f32 %v3659, %v3821
          %v3938 = vadd.f32 %v3660, %v3809
          %v3939 = vadd.f32 %v3661, %v3813
          %v3940 = vadd.f32 %v3662, %v3817
          %v3941 = vadd.f32 %v3663, %v3821
          %v3942 = vadd.f32 %v3664, %v3809
          %v3943 = vadd.f32 %v3665, %v3813
          %v3944 = vadd.f32 %v3666, %v3817
          %v3945 = vadd.f32 %v3667, %v3821
          %v3946 = vadd.f32 %v3668, %v3809
          %v3947 = vadd.f32 %v3669, %v3813
          %v3948 = vadd.f32 %v3670, %v3817
          %v3949 = vadd.f32 %v3671, %v3821
          %v3950 = vadd.f32 %v3672, %v3809
          %v3951 = vadd.f32 %v3673, %v3813
          %v3952 = vadd.f32 %v3674, %v3817
          %v3953 = vadd.f32 %v3675, %v3821
          %v3954 = vadd.f32 %v3676, %v3809
          %v3955 = vadd.f32 %v3677, %v3813
          %v3956 = vadd.f32 %v3678, %v3817
          %v3957 = vadd.f32 %v3679, %v3821
          %v3958 = vadd.f32 %v3680, %v3809
          %v3959 = vadd.f32 %v3681, %v3813
          %v3960 = vadd.f32 %v3682, %v3817
          %v3961 = vadd.f32 %v3683, %v3821
          %v3962 = vadd.f32 %v3684, %v3809
          %v3963 = vadd.f32 %v3685, %v3813
          %v3964 = vadd.f32 %v3686, %v3817
          %v3965 = vadd.f32 %v3687, %v3821
          %v3966 = vadd.f32 %v3688, %v3809
          %v3967 = vadd.f32 %v3689, %v3813
          %v3968 = vadd.f32 %v3690, %v3817
          %v3969 = vadd.f32 %v3691, %v3821
          %v3970 = vadd.f32 %v3692, %v3809
          %v3971 = vadd.f32 %v3693, %v3813
          %v3972 = vadd.f32 %v3694, %v3817
          %v3973 = vadd.f32 %v3695, %v3821
          %v3974 = vadd.f32 %v3696, %v3809
          %v3975 = vadd.f32 %v3697, %v3813
          %v3976 = vadd.f32 %v3698, %v3817
          %v3977 = vadd.f32 %v3699, %v3821
          %v3978 = vadd.f32 %v3700, %v3809
          %v3979 = vadd.f32 %v3701, %v3813
          %v3980 = vadd.f32 %v3702, %v3817
          %v3981 = vadd.f32 %v3703, %v3821
          %v3982 = vadd.f32 %v3704, %v3809
          %v3983 = vadd.f32 %v3705, %v3813
          %v3984 = vadd.f32 %v3706, %v3817
          %v3985 = vadd.f32 %v3707, %v3821
          %v3986 = vadd.f32 %v3708, %v3809
          %v3987 = vadd.f32 %v3709, %v3813
          %v3988 = vadd.f32 %v3710, %v3817
          %v3989 = vadd.f32 %v3711, %v3821
          %v3990 = vadd.f32 %v3712, %v3809
          %v3991 = vadd.f32 %v3713, %v3813
          %v3992 = vadd.f32 %v3714, %v3817
          %v3993 = vadd.f32 %v3715, %v3821
          %v3994 = vadd.f32 %v3716, %v3809
          %v3995 = vadd.f32 %v3717, %v3813
          %v3996 = vadd.f32 %v3718, %v3817
          %v3997 = vadd.f32 %v3719, %v3821
          %v3998 = vadd.f32 %v3720, %v3809
          %v3999 = vadd.f32 %v3721, %v3813
          %v4000 = vadd.f32 %v3722, %v3817
          %v4001 = vadd.f32 %v3723, %v3821
          %v4002 = vadd.f32 %v3724, %v3809
          %v4003 = vadd.f32 %v3725, %v3813
          %v4004 = vadd.f32 %v3726, %v3817
          %v4005 = vadd.f32 %v3727, %v3821
          %v4006 = vadd.f32 %v3728, %v3809
          %v4007 = vadd.f32 %v3729, %v3813
          %v4008 = vadd.f32 %v3730, %v3817
          %v4009 = vadd.f32 %v3731, %v3821
          %v4010 = vadd.f32 %v3732, %v3809
          %v4011 = vadd.f32 %v3733, %v3813
          %v4012 = vadd.f32 %v3734, %v3817
          %v4013 = vadd.f32 %v3735, %v3821
          %v4014 = vadd.f32 %v3736, %v3809
          %v4015 = vadd.f32 %v3737, %v3813
          %v4016 = vadd.f32 %v3738, %v3817
          %v4017 = vadd.f32 %v3739, %v3821
          %v4018 = vadd.f32 %v3740, %v3809
          %v4019 = vadd.f32 %v3741, %v3813
          %v4020 = vadd.f32 %v3742, %v3817
          %v4021 = vadd.f32 %v3743, %v3821
          %v4022 = vadd.f32 %v3744, %v3809
          %v4023 = vadd.f32 %v3745, %v3813
          %v4024 = vadd.f32 %v3746, %v3817
          %v4025 = vadd.f32 %v3747, %v3821
          %v4026 = vadd.f32 %v3748, %v3809
          %v4027 = vadd.f32 %v3749, %v3813
          %v4028 = vadd.f32 %v3750, %v3817
          %v4029 = vadd.f32 %v3751, %v3821
          %v4030 = vadd.f32 %v3752, %v3809
          %v4031 = vadd.f32 %v3753, %v3813
          %v4032 = vadd.f32 %v3754, %v3817
          %v4033 = vadd.f32 %v3755, %v3821
          %v4034 = vadd.f32 %v3756, %v3809
          %v4035 = vadd.f32 %v3757, %v3813
          %v4036 = vadd.f32 %v3758, %v3817
          %v4037 = vadd.f32 %v3759, %v3821
          %v4038 = vadd.f32 %v3760, %v3809
          %v4039 = vadd.f32 %v3761, %v3813
          %v4040 = vadd.f32 %v3762, %v3817
          %v4041 = vadd.f32 %v3763, %v3821
          %v4042 = vadd.f32 %v3764, %v3809
          %v4043 = vadd.f32 %v3765, %v3813
          %v4044 = vadd.f32 %v3766, %v3817
          %v4045 = vadd.f32 %v3767, %v3821
          %v4046 = vadd.f32 %v3768, %v3809
          %v4047 = vadd.f32 %v3769, %v3813
          %v4048 = vadd.f32 %v3770, %v3817
          %v4049 = vadd.f32 %v3771, %v3821
          %v4050 = vadd.f32 %v3772, %v3809
          %v4051 = vadd.f32 %v3773, %v3813
          %v4052 = vadd.f32 %v3774, %v3817
          %v4053 = vadd.f32 %v3775, %v3821
          %v4054 = vadd.f32 %v3776, %v3809
          %v4055 = vadd.f32 %v3777, %v3813
          %v4056 = vadd.f32 %v3778, %v3817
          %v4057 = vadd.f32 %v3779, %v3821
          %v4058 = vadd.f32 %v3780, %v3809
          %v4059 = vadd.f32 %v3781, %v3813
          %v4060 = vadd.f32 %v3782, %v3817
          %v4061 = vadd.f32 %v3783, %v3821
          %v4062 = vadd.f32 %v3784, %v3809
          %v4063 = vadd.f32 %v3785, %v3813
          %v4064 = vadd.f32 %v3786, %v3817
          %v4065 = vadd.f32 %v3787, %v3821
          %v4066 = vadd.f32 %v3788, %v3809
          %v4067 = vadd.f32 %v3789, %v3813
          %v4068 = vadd.f32 %v3790, %v3817
          %v4069 = vadd.f32 %v3791, %v3821
          %v4070 = vadd.f32 %v3792, %v3809
          %v4071 = vadd.f32 %v3793, %v3813
          %v4072 = vadd.f32 %v3794, %v3817
          %v4073 = vadd.f32 %v3795, %v3821
          %v4074 = vadd.f32 %v3796, %v3809
          %v4075 = vadd.f32 %v3797, %v3813
          %v4076 = vadd.f32 %v3798, %v3817
          %v4077 = vadd.f32 %v3799, %v3821
          %v4078 = vadd.f32 %v3800, %v3809
          %v4079 = vadd.f32 %v3801, %v3813
          %v4080 = vadd.f32 %v3802, %v3817
          %v4081 = vadd.f32 %v3803, %v3821
          %v4082 = vmax.f32 %v3826, 0.0
          %v4083 = vmax.f32 %v3827, 0.0
          %v4084 = vmax.f32 %v3828, 0.0
          %v4085 = vmax.f32 %v3829, 0.0
          %v4086 = vmax.f32 %v3830, 0.0
          %v4087 = vmax.f32 %v3831, 0.0
          %v4088 = vmax.f32 %v3832, 0.0
          %v4089 = vmax.f32 %v3833, 0.0
          %v4090 = vmax.f32 %v3834, 0.0
          %v4091 = vmax.f32 %v3835, 0.0
          %v4092 = vmax.f32 %v3836, 0.0
          %v4093 = vmax.f32 %v3837, 0.0
          %v4094 = vmax.f32 %v3838, 0.0
          %v4095 = vmax.f32 %v3839, 0.0
          %v4096 = vmax.f32 %v3840, 0.0
          %v4097 = vmax.f32 %v3841, 0.0
          %v4098 = vmax.f32 %v3842, 0.0
          %v4099 = vmax.f32 %v3843, 0.0
          %v4100 = vmax.f32 %v3844, 0.0
          %v4101 = vmax.f32 %v3845, 0.0
          %v4102 = vmax.f32 %v3846, 0.0
          %v4103 = vmax.f32 %v3847, 0.0
          %v4104 = vmax.f32 %v3848, 0.0
          %v4105 = vmax.f32 %v3849, 0.0
          %v4106 = vmax.f32 %v3850, 0.0
          %v4107 = vmax.f32 %v3851, 0.0
          %v4108 = vmax.f32 %v3852, 0.0
          %v4109 = vmax.f32 %v3853, 0.0
          %v4110 = vmax.f32 %v3854, 0.0
          %v4111 = vmax.f32 %v3855, 0.0
          %v4112 = vmax.f32 %v3856, 0.0
          %v4113 = vmax.f32 %v3857, 0.0
          %v4114 = vmax.f32 %v3858, 0.0
          %v4115 = vmax.f32 %v3859, 0.0
          %v4116 = vmax.f32 %v3860, 0.0
          %v4117 = vmax.f32 %v3861, 0.0
          %v4118 = vmax.f32 %v3862, 0.0
          %v4119 = vmax.f32 %v3863, 0.0
          %v4120 = vmax.f32 %v3864, 0.0
          %v4121 = vmax.f32 %v3865, 0.0
          %v4122 = vmax.f32 %v3866, 0.0
          %v4123 = vmax.f32 %v3867, 0.0
          %v4124 = vmax.f32 %v3868, 0.0
          %v4125 = vmax.f32 %v3869, 0.0
          %v4126 = vmax.f32 %v3870, 0.0
          %v4127 = vmax.f32 %v3871, 0.0
          %v4128 = vmax.f32 %v3872, 0.0
          %v4129 = vmax.f32 %v3873, 0.0
          %v4130 = vmax.f32 %v3874, 0.0
          %v4131 = vmax.f32 %v3875, 0.0
          %v4132 = vmax.f32 %v3876, 0.0
          %v4133 = vmax.f32 %v3877, 0.0
          %v4134 = vmax.f32 %v3878, 0.0
          %v4135 = vmax.f32 %v3879, 0.0
          %v4136 = vmax.f32 %v3880, 0.0
          %v4137 = vmax.f32 %v3881, 0.0
          %v4138 = vmax.f32 %v3882, 0.0
          %v4139 = vmax.f32 %v3883, 0.0
          %v4140 = vmax.f32 %v3884, 0.0
          %v4141 = vmax.f32 %v3885, 0.0
          %v4142 = vmax.f32 %v3886, 0.0
          %v4143 = vmax.f32 %v3887, 0.0
          %v4144 = vmax.f32 %v3888, 0.0
          %v4145 = vmax.f32 %v3889, 0.0
          %v4146 = vmax.f32 %v3890, 0.0
          %v4147 = vmax.f32 %v3891, 0.0
          %v4148 = vmax.f32 %v3892, 0.0
          %v4149 = vmax.f32 %v3893, 0.0
          %v4150 = vmax.f32 %v3894, 0.0
          %v4151 = vmax.f32 %v3895, 0.0
          %v4152 = vmax.f32 %v3896, 0.0
          %v4153 = vmax.f32 %v3897, 0.0
          %v4154 = vmax.f32 %v3898, 0.0
          %v4155 = vmax.f32 %v3899, 0.0
          %v4156 = vmax.f32 %v3900, 0.0
          %v4157 = vmax.f32 %v3901, 0.0
          %v4158 = vmax.f32 %v3902, 0.0
          %v4159 = vmax.f32 %v3903, 0.0
          %v4160 = vmax.f32 %v3904, 0.0
          %v4161 = vmax.f32 %v3905, 0.0
          %v4162 = vmax.f32 %v3906, 0.0
          %v4163 = vmax.f32 %v3907, 0.0
          %v4164 = vmax.f32 %v3908, 0.0
          %v4165 = vmax.f32 %v3909, 0.0
          %v4166 = vmax.f32 %v3910, 0.0
          %v4167 = vmax.f32 %v3911, 0.0
          %v4168 = vmax.f32 %v3912, 0.0
          %v4169 = vmax.f32 %v3913, 0.0
          %v4170 = vmax.f32 %v3914, 0.0
          %v4171 = vmax.f32 %v3915, 0.0
          %v4172 = vmax.f32 %v3916, 0.0
          %v4173 = vmax.f32 %v3917, 0.0
          %v4174 = vmax.f32 %v3918, 0.0
          %v4175 = vmax.f32 %v3919, 0.0
          %v4176 = vmax.f32 %v3920, 0.0
          %v4177 = vmax.f32 %v3921, 0.0
          %v4178 = vmax.f32 %v3922, 0.0
          %v4179 = vmax.f32 %v3923, 0.0
          %v4180 = vmax.f32 %v3924, 0.0
          %v4181 = vmax.f32 %v3925, 0.0
          %v4182 = vmax.f32 %v3926, 0.0
          %v4183 = vmax.f32 %v3927, 0.0
          %v4184 = vmax.f32 %v3928, 0.0
          %v4185 = vmax.f32 %v3929, 0.0
          %v4186 = vmax.f32 %v3930, 0.0
          %v4187 = vmax.f32 %v3931, 0.0
          %v4188 = vmax.f32 %v3932, 0.0
          %v4189 = vmax.f32 %v3933, 0.0
          %v4190 = vmax.f32 %v3934, 0.0
          %v4191 = vmax.f32 %v3935, 0.0
          %v4192 = vmax.f32 %v3936, 0.0
          %v4193 = vmax.f32 %v3937, 0.0
          %v4194 = vmax.f32 %v3938, 0.0
          %v4195 = vmax.f32 %v3939, 0.0
          %v4196 = vmax.f32 %v3940, 0.0
          %v4197 = vmax.f32 %v3941, 0.0
          %v4198 = vmax.f32 %v3942, 0.0
          %v4199 = vmax.f32 %v3943, 0.0
          %v4200 = vmax.f32 %v3944, 0.0
          %v4201 = vmax.f32 %v3945, 0.0
          %v4202 = vmax.f32 %v3946, 0.0
          %v4203 = vmax.f32 %v3947, 0.0
          %v4204 = vmax.f32 %v3948, 0.0
          %v4205 = vmax.f32 %v3949, 0.0
          %v4206 = vmax.f32 %v3950, 0.0
          %v4207 = vmax.f32 %v3951, 0.0
          %v4208 = vmax.f32 %v3952, 0.0
          %v4209 = vmax.f32 %v3953, 0.0
          %v4210 = vmax.f32 %v3954, 0.0
          %v4211 = vmax.f32 %v3955, 0.0
          %v4212 = vmax.f32 %v3956, 0.0
          %v4213 = vmax.f32 %v3957, 0.0
          %v4214 = vmax.f32 %v3958, 0.0
          %v4215 = vmax.f32 %v3959, 0.0
          %v4216 = vmax.f32 %v3960, 0.0
          %v4217 = vmax.f32 %v3961, 0.0
          %v4218 = vmax.f32 %v3962, 0.0
          %v4219 = vmax.f32 %v3963, 0.0
          %v4220 = vmax.f32 %v3964, 0.0
          %v4221 = vmax.f32 %v3965, 0.0
          %v4222 = vmax.f32 %v3966, 0.0
          %v4223 = vmax.f32 %v3967, 0.0
          %v4224 = vmax.f32 %v3968, 0.0
          %v4225 = vmax.f32 %v3969, 0.0
          %v4226 = vmax.f32 %v3970, 0.0
          %v4227 = vmax.f32 %v3971, 0.0
          %v4228 = vmax.f32 %v3972, 0.0
          %v4229 = vmax.f32 %v3973, 0.0
          %v4230 = vmax.f32 %v3974, 0.0
          %v4231 = vmax.f32 %v3975, 0.0
          %v4232 = vmax.f32 %v3976, 0.0
          %v4233 = vmax.f32 %v3977, 0.0
          %v4234 = vmax.f32 %v3978, 0.0
          %v4235 = vmax.f32 %v3979, 0.0
          %v4236 = vmax.f32 %v3980, 0.0
          %v4237 = vmax.f32 %v3981, 0.0
          %v4238 = vmax.f32 %v3982, 0.0
          %v4239 = vmax.f32 %v3983, 0.0
          %v4240 = vmax.f32 %v3984, 0.0
          %v4241 = vmax.f32 %v3985, 0.0
          %v4242 = vmax.f32 %v3986, 0.0
          %v4243 = vmax.f32 %v3987, 0.0
          %v4244 = vmax.f32 %v3988, 0.0
          %v4245 = vmax.f32 %v3989, 0.0
          %v4246 = vmax.f32 %v3990, 0.0
          %v4247 = vmax.f32 %v3991, 0.0
          %v4248 = vmax.f32 %v3992, 0.0
          %v4249 = vmax.f32 %v3993, 0.0
          %v4250 = vmax.f32 %v3994, 0.0
          %v4251 = vmax.f32 %v3995, 0.0
          %v4252 = vmax.f32 %v3996, 0.0
          %v4253 = vmax.f32 %v3997, 0.0
          %v4254 = vmax.f32 %v3998, 0.0
          %v4255 = vmax.f32 %v3999, 0.0
          %v4256 = vmax.f32 %v4000, 0.0
          %v4257 = vmax.f32 %v4001, 0.0
          %v4258 = vmax.f32 %v4002, 0.0
          %v4259 = vmax.f32 %v4003, 0.0
          %v4260 = vmax.f32 %v4004, 0.0
          %v4261 = vmax.f32 %v4005, 0.0
          %v4262 = vmax.f32 %v4006, 0.0
          %v4263 = vmax.f32 %v4007, 0.0
          %v4264 = vmax.f32 %v4008, 0.0
          %v4265 = vmax.f32 %v4009, 0.0
          %v4266 = vmax.f32 %v4010, 0.0
          %v4267 = vmax.f32 %v4011, 0.0
          %v4268 = vmax.f32 %v4012, 0.0
          %v4269 = vmax.f32 %v4013, 0.0
          %v4270 = vmax.f32 %v4014, 0.0
          %v4271 = vmax.f32 %v4015, 0.0
          %v4272 = vmax.f32 %v4016, 0.0
          %v4273 = vmax.f32 %v4017, 0.0
          %v4274 = vmax.f32 %v4018, 0.0
          %v4275 = vmax.f32 %v4019, 0.0
          %v4276 = vmax.f32 %v4020, 0.0
          %v4277 = vmax.f32 %v4021, 0.0
          %v4278 = vmax.f32 %v4022, 0.0
          %v4279 = vmax.f32 %v4023, 0.0
          %v4280 = vmax.f32 %v4024, 0.0
          %v4281 = vmax.f32 %v4025, 0.0
          %v4282 = vmax.f32 %v4026, 0.0
          %v4283 = vmax.f32 %v4027, 0.0
          %v4284 = vmax.f32 %v4028, 0.0
          %v4285 = vmax.f32 %v4029, 0.0
          %v4286 = vmax.f32 %v4030, 0.0
          %v4287 = vmax.f32 %v4031, 0.0
          %v4288 = vmax.f32 %v4032, 0.0
          %v4289 = vmax.f32 %v4033, 0.0
          %v4290 = vmax.f32 %v4034, 0.0
          %v4291 = vmax.f32 %v4035, 0.0
          %v4292 = vmax.f32 %v4036, 0.0
          %v4293 = vmax.f32 %v4037, 0.0
          %v4294 = vmax.f32 %v4038, 0.0
          %v4295 = vmax.f32 %v4039, 0.0
          %v4296 = vmax.f32 %v4040, 0.0
          %v4297 = vmax.f32 %v4041, 0.0
          %v4298 = vmax.f32 %v4042, 0.0
          %v4299 = vmax.f32 %v4043, 0.0
          %v4300 = vmax.f32 %v4044, 0.0
          %v4301 = vmax.f32 %v4045, 0.0
          %v4302 = vmax.f32 %v4046, 0.0
          %v4303 = vmax.f32 %v4047, 0.0
          %v4304 = vmax.f32 %v4048, 0.0
          %v4305 = vmax.f32 %v4049, 0.0
          %v4306 = vmax.f32 %v4050, 0.0
          %v4307 = vmax.f32 %v4051, 0.0
          %v4308 = vmax.f32 %v4052, 0.0
          %v4309 = vmax.f32 %v4053, 0.0
          %v4310 = vmax.f32 %v4054, 0.0
          %v4311 = vmax.f32 %v4055, 0.0
          %v4312 = vmax.f32 %v4056, 0.0
          %v4313 = vmax.f32 %v4057, 0.0
          %v4314 = vmax.f32 %v4058, 0.0
          %v4315 = vmax.f32 %v4059, 0.0
          %v4316 = vmax.f32 %v4060, 0.0
          %v4317 = vmax.f32 %v4061, 0.0
          %v4318 = vmax.f32 %v4062, 0.0
          %v4319 = vmax.f32 %v4063, 0.0
          %v4320 = vmax.f32 %v4064, 0.0
          %v4321 = vmax.f32 %v4065, 0.0
          %v4322 = vmax.f32 %v4066, 0.0
          %v4323 = vmax.f32 %v4067, 0.0
          %v4324 = vmax.f32 %v4068, 0.0
          %v4325 = vmax.f32 %v4069, 0.0
          %v4326 = vmax.f32 %v4070, 0.0
          %v4327 = vmax.f32 %v4071, 0.0
          %v4328 = vmax.f32 %v4072, 0.0
          %v4329 = vmax.f32 %v4073, 0.0
          %v4330 = vmax.f32 %v4074, 0.0
          %v4331 = vmax.f32 %v4075, 0.0
          %v4332 = vmax.f32 %v4076, 0.0
          %v4333 = vmax.f32 %v4077, 0.0
          %v4334 = vmax.f32 %v4078, 0.0
          %v4335 = vmax.f32 %v4079, 0.0
          %v4336 = vmax.f32 %v4080, 0.0
          %v4337 = vmax.f32 %v4081, 0.0
          %v4338 = vadd.f32 %v4082, %v4086
          %v4339 = vadd.f32 %v4338, %v4090
          %v4340 = vadd.f32 %v4339, %v4094
          %v4341 = vadd.f32 %v4340, %v4098
          %v4342 = vadd.f32 %v4341, %v4102
          %v4343 = vadd.f32 %v4342, %v4106
          %v4344 = vadd.f32 %v4343, %v4110
          %v4345 = vadd.f32 %v4344, %v4114
          %v4346 = vadd.f32 %v4345, %v4118
          %v4347 = vadd.f32 %v4346, %v4122
          %v4348 = vadd.f32 %v4347, %v4126
          %v4349 = vadd.f32 %v4348, %v4130
          %v4350 = vadd.f32 %v4349, %v4134
          %v4351 = vadd.f32 %v4350, %v4138
          %v4352 = vadd.f32 %v4351, %v4142
          %v4353 = vadd.f32 %v4352, %v4146
          %v4354 = vadd.f32 %v4353, %v4150
          %v4355 = vadd.f32 %v4354, %v4154
          %v4356 = vadd.f32 %v4355, %v4158
          %v4357 = vadd.f32 %v4356, %v4162
          %v4358 = vadd.f32 %v4357, %v4166
          %v4359 = vadd.f32 %v4358, %v4170
          %v4360 = vadd.f32 %v4359, %v4174
          %v4361 = vadd.f32 %v4360, %v4178
          %v4362 = vadd.f32 %v4361, %v4182
          %v4363 = vadd.f32 %v4362, %v4186
          %v4364 = vadd.f32 %v4363, %v4190
          %v4365 = vadd.f32 %v4364, %v4194
          %v4366 = vadd.f32 %v4365, %v4198
          %v4367 = vadd.f32 %v4366, %v4202
          %v4368 = vadd.f32 %v4367, %v4206
          %v4369 = vrot.slane %v4368, 4
          %v4370 = vadd.f32 %v4368, %v4369
          %v4371 = vrot.slane %v4370, 2
          %v4372 = vadd.f32 %v4370, %v4371
          %v4373 = vrot.slane %v4372, 1
          %v4374 = vadd.f32 %v4372, %v4373
          %v4375 = vadd.f32 %v4083, %v4087
          %v4376 = vadd.f32 %v4375, %v4091
          %v4377 = vadd.f32 %v4376, %v4095
          %v4378 = vadd.f32 %v4377, %v4099
          %v4379 = vadd.f32 %v4378, %v4103
          %v4380 = vadd.f32 %v4379, %v4107
          %v4381 = vadd.f32 %v4380, %v4111
          %v4382 = vadd.f32 %v4381, %v4115
          %v4383 = vadd.f32 %v4382, %v4119
          %v4384 = vadd.f32 %v4383, %v4123
          %v4385 = vadd.f32 %v4384, %v4127
          %v4386 = vadd.f32 %v4385, %v4131
          %v4387 = vadd.f32 %v4386, %v4135
          %v4388 = vadd.f32 %v4387, %v4139
          %v4389 = vadd.f32 %v4388, %v4143
          %v4390 = vadd.f32 %v4389, %v4147
          %v4391 = vadd.f32 %v4390, %v4151
          %v4392 = vadd.f32 %v4391, %v4155
          %v4393 = vadd.f32 %v4392, %v4159
          %v4394 = vadd.f32 %v4393, %v4163
          %v4395 = vadd.f32 %v4394, %v4167
          %v4396 = vadd.f32 %v4395, %v4171
          %v4397 = vadd.f32 %v4396, %v4175
          %v4398 = vadd.f32 %v4397, %v4179
          %v4399 = vadd.f32 %v4398, %v4183
          %v4400 = vadd.f32 %v4399, %v4187
          %v4401 = vadd.f32 %v4400, %v4191
          %v4402 = vadd.f32 %v4401, %v4195
          %v4403 = vadd.f32 %v4402, %v4199
          %v4404 = vadd.f32 %v4403, %v4203
          %v4405 = vadd.f32 %v4404, %v4207
          %v4406 = vrot.slane %v4405, 4
          %v4407 = vadd.f32 %v4405, %v4406
          %v4408 = vrot.slane %v4407, 2
          %v4409 = vadd.f32 %v4407, %v4408
          %v4410 = vrot.slane %v4409, 1
          %v4411 = vadd.f32 %v4409, %v4410
          %v4412 = vadd.f32 %v4084, %v4088
          %v4413 = vadd.f32 %v4412, %v4092
          %v4414 = vadd.f32 %v4413, %v4096
          %v4415 = vadd.f32 %v4414, %v4100
          %v4416 = vadd.f32 %v4415, %v4104
          %v4417 = vadd.f32 %v4416, %v4108
          %v4418 = vadd.f32 %v4417, %v4112
          %v4419 = vadd.f32 %v4418, %v4116
          %v4420 = vadd.f32 %v4419, %v4120
          %v4421 = vadd.f32 %v4420, %v4124
          %v4422 = vadd.f32 %v4421, %v4128
          %v4423 = vadd.f32 %v4422, %v4132
          %v4424 = vadd.f32 %v4423, %v4136
          %v4425 = vadd.f32 %v4424, %v4140
          %v4426 = vadd.f32 %v4425, %v4144
          %v4427 = vadd.f32 %v4426, %v4148
          %v4428 = vadd.f32 %v4427, %v4152
          %v4429 = vadd.f32 %v4428, %v4156
          %v4430 = vadd.f32 %v4429, %v4160
          %v4431 = vadd.f32 %v4430, %v4164
          %v4432 = vadd.f32 %v4431, %v4168
          %v4433 = vadd.f32 %v4432, %v4172
          %v4434 = vadd.f32 %v4433, %v4176
          %v4435 = vadd.f32 %v4434, %v4180
          %v4436 = vadd.f32 %v4435, %v4184
          %v4437 = vadd.f32 %v4436, %v4188
          %v4438 = vadd.f32 %v4437, %v4192
          %v4439 = vadd.f32 %v4438, %v4196
          %v4440 = vadd.f32 %v4439, %v4200
          %v4441 = vadd.f32 %v4440, %v4204
          %v4442 = vadd.f32 %v4441, %v4208
          %v4443 = vrot.slane %v4442, 4
          %v4444 = vadd.f32 %v4442, %v4443
          %v4445 = vrot.slane %v4444, 2
          %v4446 = vadd.f32 %v4444, %v4445
          %v4447 = vrot.slane %v4446, 1
          %v4448 = vadd.f32 %v4446, %v4447
          %v4449 = vadd.f32 %v4085, %v4089
          %v4450 = vadd.f32 %v4449, %v4093
          %v4451 = vadd.f32 %v4450, %v4097
          %v4452 = vadd.f32 %v4451, %v4101
          %v4453 = vadd.f32 %v4452, %v4105
          %v4454 = vadd.f32 %v4453, %v4109
          %v4455 = vadd.f32 %v4454, %v4113
          %v4456 = vadd.f32 %v4455, %v4117
          %v4457 = vadd.f32 %v4456, %v4121
          %v4458 = vadd.f32 %v4457, %v4125
          %v4459 = vadd.f32 %v4458, %v4129
          %v4460 = vadd.f32 %v4459, %v4133
          %v4461 = vadd.f32 %v4460, %v4137
          %v4462 = vadd.f32 %v4461, %v4141
          %v4463 = vadd.f32 %v4462, %v4145
          %v4464 = vadd.f32 %v4463, %v4149
          %v4465 = vadd.f32 %v4464, %v4153
          %v4466 = vadd.f32 %v4465, %v4157
          %v4467 = vadd.f32 %v4466, %v4161
          %v4468 = vadd.f32 %v4467, %v4165
          %v4469 = vadd.f32 %v4468, %v4169
          %v4470 = vadd.f32 %v4469, %v4173
          %v4471 = vadd.f32 %v4470, %v4177
          %v4472 = vadd.f32 %v4471, %v4181
          %v4473 = vadd.f32 %v4472, %v4185
          %v4474 = vadd.f32 %v4473, %v4189
          %v4475 = vadd.f32 %v4474, %v4193
          %v4476 = vadd.f32 %v4475, %v4197
          %v4477 = vadd.f32 %v4476, %v4201
          %v4478 = vadd.f32 %v4477, %v4205
          %v4479 = vadd.f32 %v4478, %v4209
          %v4480 = vrot.slane %v4479, 4
          %v4481 = vadd.f32 %v4479, %v4480
          %v4482 = vrot.slane %v4481, 2
          %v4483 = vadd.f32 %v4481, %v4482
          %v4484 = vrot.slane %v4483, 1
          %v4485 = vadd.f32 %v4483, %v4484
          %v4486 = vadd.f32 %v4210, %v4214
          %v4487 = vadd.f32 %v4486, %v4218
          %v4488 = vadd.f32 %v4487, %v4222
          %v4489 = vadd.f32 %v4488, %v4226
          %v4490 = vadd.f32 %v4489, %v4230
          %v4491 = vadd.f32 %v4490, %v4234
          %v4492 = vadd.f32 %v4491, %v4238
          %v4493 = vadd.f32 %v4492, %v4242
          %v4494 = vadd.f32 %v4493, %v4246
          %v4495 = vadd.f32 %v4494, %v4250
          %v4496 = vadd.f32 %v4495, %v4254
          %v4497 = vadd.f32 %v4496, %v4258
          %v4498 = vadd.f32 %v4497, %v4262
          %v4499 = vadd.f32 %v4498, %v4266
          %v4500 = vadd.f32 %v4499, %v4270
          %v4501 = vadd.f32 %v4500, %v4274
          %v4502 = vadd.f32 %v4501, %v4278
          %v4503 = vadd.f32 %v4502, %v4282
          %v4504 = vadd.f32 %v4503, %v4286
          %v4505 = vadd.f32 %v4504, %v4290
          %v4506 = vadd.f32 %v4505, %v4294
          %v4507 = vadd.f32 %v4506, %v4298
          %v4508 = vadd.f32 %v4507, %v4302
          %v4509 = vadd.f32 %v4508, %v4306
          %v4510 = vadd.f32 %v4509, %v4310
          %v4511 = vadd.f32 %v4510, %v4314
          %v4512 = vadd.f32 %v4511, %v4318
          %v4513 = vadd.f32 %v4512, %v4322
          %v4514 = vadd.f32 %v4513, %v4326
          %v4515 = vadd.f32 %v4514, %v4330
          %v4516 = vadd.f32 %v4515, %v4334
          %v4517 = vrot.slane %v4516, 4
          %v4518 = vadd.f32 %v4516, %v4517
          %v4519 = vrot.slane %v4518, 2
          %v4520 = vadd.f32 %v4518, %v4519
          %v4521 = vrot.slane %v4520, 1
          %v4522 = vadd.f32 %v4520, %v4521
          %v4523 = vadd.f32 %v4211, %v4215
          %v4524 = vadd.f32 %v4523, %v4219
          %v4525 = vadd.f32 %v4524, %v4223
          %v4526 = vadd.f32 %v4525, %v4227
          %v4527 = vadd.f32 %v4526, %v4231
          %v4528 = vadd.f32 %v4527, %v4235
          %v4529 = vadd.f32 %v4528, %v4239
          %v4530 = vadd.f32 %v4529, %v4243
          %v4531 = vadd.f32 %v4530, %v4247
          %v4532 = vadd.f32 %v4531, %v4251
          %v4533 = vadd.f32 %v4532, %v4255
          %v4534 = vadd.f32 %v4533, %v4259
          %v4535 = vadd.f32 %v4534, %v4263
          %v4536 = vadd.f32 %v4535, %v4267
          %v4537 = vadd.f32 %v4536, %v4271
          %v4538 = vadd.f32 %v4537, %v4275
          %v4539 = vadd.f32 %v4538, %v4279
          %v4540 = vadd.f32 %v4539, %v4283
          %v4541 = vadd.f32 %v4540, %v4287
          %v4542 = vadd.f32 %v4541, %v4291
          %v4543 = vadd.f32 %v4542, %v4295
          %v4544 = vadd.f32 %v4543, %v4299
          %v4545 = vadd.f32 %v4544, %v4303
          %v4546 = vadd.f32 %v4545, %v4307
          %v4547 = vadd.f32 %v4546, %v4311
          %v4548 = vadd.f32 %v4547, %v4315
          %v4549 = vadd.f32 %v4548, %v4319
          %v4550 = vadd.f32 %v4549, %v4323
          %v4551 = vadd.f32 %v4550, %v4327
          %v4552 = vadd.f32 %v4551, %v4331
          %v4553 = vadd.f32 %v4552, %v4335
          %v4554 = vrot.slane %v4553, 4
          %v4555 = vadd.f32 %v4553, %v4554
          %v4556 = vrot.slane %v4555, 2
          %v4557 = vadd.f32 %v4555, %v4556
          %v4558 = vrot.slane %v4557, 1
          %v4559 = vadd.f32 %v4557, %v4558
          %v4560 = vadd.f32 %v4212, %v4216
          %v4561 = vadd.f32 %v4560, %v4220
          %v4562 = vadd.f32 %v4561, %v4224
          %v4563 = vadd.f32 %v4562, %v4228
          %v4564 = vadd.f32 %v4563, %v4232
          %v4565 = vadd.f32 %v4564, %v4236
          %v4566 = vadd.f32 %v4565, %v4240
          %v4567 = vadd.f32 %v4566, %v4244
          %v4568 = vadd.f32 %v4567, %v4248
          %v4569 = vadd.f32 %v4568, %v4252
          %v4570 = vadd.f32 %v4569, %v4256
          %v4571 = vadd.f32 %v4570, %v4260
          %v4572 = vadd.f32 %v4571, %v4264
          %v4573 = vadd.f32 %v4572, %v4268
          %v4574 = vadd.f32 %v4573, %v4272
          %v4575 = vadd.f32 %v4574, %v4276
          %v4576 = vadd.f32 %v4575, %v4280
          %v4577 = vadd.f32 %v4576, %v4284
          %v4578 = vadd.f32 %v4577, %v4288
          %v4579 = vadd.f32 %v4578, %v4292
          %v4580 = vadd.f32 %v4579, %v4296
          %v4581 = vadd.f32 %v4580, %v4300
          %v4582 = vadd.f32 %v4581, %v4304
          %v4583 = vadd.f32 %v4582, %v4308
          %v4584 = vadd.f32 %v4583, %v4312
          %v4585 = vadd.f32 %v4584, %v4316
          %v4586 = vadd.f32 %v4585, %v4320
          %v4587 = vadd.f32 %v4586, %v4324
          %v4588 = vadd.f32 %v4587, %v4328
          %v4589 = vadd.f32 %v4588, %v4332
          %v4590 = vadd.f32 %v4589, %v4336
          %v4591 = vrot.slane %v4590, 4
          %v4592 = vadd.f32 %v4590, %v4591
          %v4593 = vrot.slane %v4592, 2
          %v4594 = vadd.f32 %v4592, %v4593
          %v4595 = vrot.slane %v4594, 1
          %v4596 = vadd.f32 %v4594, %v4595
          %v4597 = vadd.f32 %v4213, %v4217
          %v4598 = vadd.f32 %v4597, %v4221
          %v4599 = vadd.f32 %v4598, %v4225
          %v4600 = vadd.f32 %v4599, %v4229
          %v4601 = vadd.f32 %v4600, %v4233
          %v4602 = vadd.f32 %v4601, %v4237
          %v4603 = vadd.f32 %v4602, %v4241
          %v4604 = vadd.f32 %v4603, %v4245
          %v4605 = vadd.f32 %v4604, %v4249
          %v4606 = vadd.f32 %v4605, %v4253
          %v4607 = vadd.f32 %v4606, %v4257
          %v4608 = vadd.f32 %v4607, %v4261
          %v4609 = vadd.f32 %v4608, %v4265
          %v4610 = vadd.f32 %v4609, %v4269
          %v4611 = vadd.f32 %v4610, %v4273
          %v4612 = vadd.f32 %v4611, %v4277
          %v4613 = vadd.f32 %v4612, %v4281
          %v4614 = vadd.f32 %v4613, %v4285
          %v4615 = vadd.f32 %v4614, %v4289
          %v4616 = vadd.f32 %v4615, %v4293
          %v4617 = vadd.f32 %v4616, %v4297
          %v4618 = vadd.f32 %v4617, %v4301
          %v4619 = vadd.f32 %v4618, %v4305
          %v4620 = vadd.f32 %v4619, %v4309
          %v4621 = vadd.f32 %v4620, %v4313
          %v4622 = vadd.f32 %v4621, %v4317
          %v4623 = vadd.f32 %v4622, %v4321
          %v4624 = vadd.f32 %v4623, %v4325
          %v4625 = vadd.f32 %v4624, %v4329
          %v4626 = vadd.f32 %v4625, %v4333
          %v4627 = vadd.f32 %v4626, %v4337
          %v4628 = vrot.slane %v4627, 4
          %v4629 = vadd.f32 %v4627, %v4628
          %v4630 = vrot.slane %v4629, 2
          %v4631 = vadd.f32 %v4629, %v4630
          %v4632 = vrot.slane %v4631, 1
          %v4633 = vadd.f32 %v4631, %v4632
          %v4634 = vmul.f32 %v4374, 0.00390625
          %v4635 = vmul.f32 %v4411, 0.00390625
          %v4636 = vmul.f32 %v4448, 0.00390625
          %v4637 = vmul.f32 %v4485, 0.00390625
          %v4638 = vmul.f32 %v4522, 0.00390625
          %v4639 = vmul.f32 %v4559, 0.00390625
          %v4640 = vmul.f32 %v4596, 0.00390625
          %v4641 = vmul.f32 %v4633, 0.00390625
          %v4650 = vcombine.low %v4634, %v4635
          %v4651 = vcombine.low %v4636, %v4637
          %v4653 = vunpack.c.l.s4 1983009808
          %v4654 = vunpack.c.0.s8 %v4653
          %v4655 = vlaneseq
          %v4656 = vshrl.u32 %v4655, 7
          %v4657 = vsub.s32 %v4654, %v4656
          %v4658 = vrot.slane %v4650, %v4657
          %v4660 = vunpack.c.l.s4 1983009808
          %v4661 = vunpack.c.0.s8 %v4660
          %v4662 = vlaneseq
          %v4663 = vshrl.u32 %v4662, 7
          %v4664 = vsub.s32 %v4661, %v4663
          %v4665 = vrot.slane %v4651, %v4664
          %v4666 = vcombine.low %v4658, %v4665
          %v4667 = vcombine.low %v4638, %v4639
          %v4668 = vcombine.low %v4640, %v4641
          %v4670 = vunpack.c.l.s4 1983009808
          %v4671 = vunpack.c.0.s8 %v4670
          %v4672 = vlaneseq
          %v4673 = vshrl.u32 %v4672, 7
          %v4674 = vsub.s32 %v4671, %v4673
          %v4675 = vrot.slane %v4667, %v4674
          %v4677 = vunpack.c.l.s4 1983009808
          %v4678 = vunpack.c.0.s8 %v4677
          %v4679 = vlaneseq
          %v4680 = vshrl.u32 %v4679, 7
          %v4681 = vsub.s32 %v4678, %v4680
          %v4682 = vrot.slane %v4668, %v4681
          %v4683 = vcombine.low %v4675, %v4682
          %vm4684 = vcmask 1044484
          %v4685 = vsel %vm4684, %v4666, %v4666
          %vm4686 = vcmask 1046534
          %v4687 = vsel %vm4686, %v4666, %v4685
          %v4688 = vrot.slane %v4683, 7
          %vm4689 = vcmask 1041409
          %v4690 = vsel %vm4689, %v4688, %v4687
          %vm4691 = vcmask 1043459
          %v4692 = vsel %vm4691, %v4688, %v4690
          %vm4693 = vcmask 1045509
          %v4694 = vsel %vm4693, %v4688, %v4692
          %vm4695 = vcmask 1047559
          %v4696 = vsel %vm4695, %v4688, %v4694
          %4698 = vst [vmem:[#allocation2] sm:$0xff] %v4696
          %4699 = vst [vmem:[#allocation3] sm:$0xf] 0.0
        $region72: #{face_verification_forward.1} parent=59 // pred_fallthru
          _
        %v4700 = vld [vmem:[#allocation2] sm:$0xff]
        %v4702 = vcombine.high %v4700, %v4700
        %v4704 = vunpack.c.l.s4 1983009808
        %v4705 = vunpack.c.0.s8 %v4704
        %v4706 = vlaneseq
        %v4707 = vshrl.u32 %v4706, 7
        %v4708 = vsub.s32 %v4705, %v4707
        %v4709 = vrot.slane %v4700, %v4708
        %v4711 = vunpack.c.l.s4 1983009808
        %v4712 = vunpack.c.0.s8 %v4711
        %v4713 = vlaneseq
        %v4714 = vshrl.u32 %v4713, 7
        %v4715 = vsub.s32 %v4712, %v4714
        %v4716 = vrot.slane %v4702, %v4715
        %v4717 = vcombine.high %v4709, %v4709
        %v4718 = vcombine.high %v4716, %v4716
        %v4723 = vpack.c.bf16 %v4709, %v4709
        %v4724 = vpack.c.bf16 %v4717, %v4717
        %v4725 = vpack.c.bf16 %v4716, %v4716
        %v4726 = vpack.c.bf16 %v4718, %v4718
        %v4727 = vld [vmem:[%s382] sm:$0xff]
        %v4728 = vld [vmem:[%s382 + $0x8] sm:$0xff]
        %v4729 = vld [vmem:[%s382 + $0x10] sm:$0xff]
        %v4730 = vld [vmem:[%s382 + $0x18] sm:$0xff]
        %v4731 = vld [vmem:[%s382 + $0x20] sm:$0xff]
        %v4732 = vld [vmem:[%s382 + $0x28] sm:$0xff]
        %v4733 = vld [vmem:[%s382 + $0x30] sm:$0xff]
        %v4734 = vld [vmem:[%s382 + $0x38] sm:$0xff]
        %v4735 = vld [vmem:[%s382 + $0x40] sm:$0xff]
        %v4736 = vld [vmem:[%s382 + $0x48] sm:$0xff]
        %v4737 = vld [vmem:[%s382 + $0x50] sm:$0xff]
        %v4738 = vld [vmem:[%s382 + $0x58] sm:$0xff]
        %v4739 = vld [vmem:[%s382 + $0x60] sm:$0xff]
        %v4740 = vld [vmem:[%s382 + $0x68] sm:$0xff]
        %v4741 = vld [vmem:[%s382 + $0x70] sm:$0xff]
        %v4742 = vld [vmem:[%s382 + $0x78] sm:$0xff]
        %v4743 = vld [vmem:[%s382 + $0x80] sm:$0xff]
        %v4744 = vld [vmem:[%s382 + $0x88] sm:$0xff]
        %v4745 = vld [vmem:[%s382 + $0x90] sm:$0xff]
        %v4746 = vld [vmem:[%s382 + $0x98] sm:$0xff]
        %v4747 = vld [vmem:[%s382 + $0xa0] sm:$0xff]
        %v4748 = vld [vmem:[%s382 + $0xa8] sm:$0xff]
        %v4749 = vld [vmem:[%s382 + $0xb0] sm:$0xff]
        %v4750 = vld [vmem:[%s382 + $0xb8] sm:$0xff]
        %v4751 = vld [vmem:[%s382 + $0xc0] sm:$0xff]
        %v4752 = vld [vmem:[%s382 + $0xc8] sm:$0xff]
        %v4753 = vld [vmem:[%s382 + $0xd0] sm:$0xff]
        %v4754 = vld [vmem:[%s382 + $0xd8] sm:$0xff]
        %v4755 = vld [vmem:[%s382 + $0xe0] sm:$0xff]
        %v4756 = vld [vmem:[%s382 + $0xe8] sm:$0xff]
        %v4757 = vld [vmem:[%s382 + $0xf0] sm:$0xff]
        %v4758 = vld [vmem:[%s382 + $0xf8] sm:$0xff]
        %v4759 = vunpack.c.l.s8.bf16 %v4727
        %v4760 = vunpack.c.l.s8.bf16 %v4728
        %v4761 = vunpack.c.h.s8.bf16 %v4727
        %v4762 = vunpack.c.h.s8.bf16 %v4728
        %v4763 = vunpack.c.l.s8.bf16 %v4729
        %v4764 = vunpack.c.l.s8.bf16 %v4730
        %v4765 = vunpack.c.h.s8.bf16 %v4729
        %v4766 = vunpack.c.h.s8.bf16 %v4730
        %v4767 = vunpack.c.l.s8.bf16 %v4731
        %v4768 = vunpack.c.l.s8.bf16 %v4732
        %v4769 = vunpack.c.h.s8.bf16 %v4731
        %v4770 = vunpack.c.h.s8.bf16 %v4732
        %v4771 = vunpack.c.l.s8.bf16 %v4733
        %v4772 = vunpack.c.l.s8.bf16 %v4734
        %v4773 = vunpack.c.h.s8.bf16 %v4733
        %v4774 = vunpack.c.h.s8.bf16 %v4734
        %v4775 = vunpack.c.l.s8.bf16 %v4735
        %v4776 = vunpack.c.l.s8.bf16 %v4736
        %v4777 = vunpack.c.h.s8.bf16 %v4735
        %v4778 = vunpack.c.h.s8.bf16 %v4736
        %v4779 = vunpack.c.l.s8.bf16 %v4737
        %v4780 = vunpack.c.l.s8.bf16 %v4738
        %v4781 = vunpack.c.h.s8.bf16 %v4737
        %v4782 = vunpack.c.h.s8.bf16 %v4738
        %v4783 = vunpack.c.l.s8.bf16 %v4739
        %v4784 = vunpack.c.l.s8.bf16 %v4740
        %v4785 = vunpack.c.h.s8.bf16 %v4739
        %v4786 = vunpack.c.h.s8.bf16 %v4740
        %v4787 = vunpack.c.l.s8.bf16 %v4741
        %v4788 = vunpack.c.l.s8.bf16 %v4742
        %v4789 = vunpack.c.h.s8.bf16 %v4741
        %v4790 = vunpack.c.h.s8.bf16 %v4742
        %v4791 = vunpack.c.l.s8.bf16 %v4743
        %v4792 = vunpack.c.l.s8.bf16 %v4744
        %v4793 = vunpack.c.h.s8.bf16 %v4743
        %v4794 = vunpack.c.h.s8.bf16 %v4744
        %v4795 = vunpack.c.l.s8.bf16 %v4745
        %v4796 = vunpack.c.l.s8.bf16 %v4746
        %v4797 = vunpack.c.h.s8.bf16 %v4745
        %v4798 = vunpack.c.h.s8.bf16 %v4746
        %v4799 = vunpack.c.l.s8.bf16 %v4747
        %v4800 = vunpack.c.l.s8.bf16 %v4748
        %v4801 = vunpack.c.h.s8.bf16 %v4747
        %v4802 = vunpack.c.h.s8.bf16 %v4748
        %v4803 = vunpack.c.l.s8.bf16 %v4749
        %v4804 = vunpack.c.l.s8.bf16 %v4750
        %v4805 = vunpack.c.h.s8.bf16 %v4749
        %v4806 = vunpack.c.h.s8.bf16 %v4750
        %v4807 = vunpack.c.l.s8.bf16 %v4751
        %v4808 = vunpack.c.l.s8.bf16 %v4752
        %v4809 = vunpack.c.h.s8.bf16 %v4751
        %v4810 = vunpack.c.h.s8.bf16 %v4752
        %v4811 = vunpack.c.l.s8.bf16 %v4753
        %v4812 = vunpack.c.l.s8.bf16 %v4754
        %v4813 = vunpack.c.h.s8.bf16 %v4753
        %v4814 = vunpack.c.h.s8.bf16 %v4754
        %v4815 = vunpack.c.l.s8.bf16 %v4755
        %v4816 = vunpack.c.l.s8.bf16 %v4756
        %v4817 = vunpack.c.h.s8.bf16 %v4755
        %v4818 = vunpack.c.h.s8.bf16 %v4756
        %v4819 = vunpack.c.l.s8.bf16 %v4757
        %v4820 = vunpack.c.l.s8.bf16 %v4758
        %v4821 = vunpack.c.h.s8.bf16 %v4757
        %v4822 = vunpack.c.h.s8.bf16 %v4758
        %4823 = vmatprep.subr.bf16.mxu0 %v4760
        %4824 = vmatpush1.bf16.msra.mxu0 %v4759
        %4825 = vmatprep.subr.bf16.mxu0 %v4762
        %4826 = vmatpush1.bf16.msra.mxu0 %v4761
        %4827 = vmatprep.subr.bf16.mxu0 %v4764
        %4828 = vmatpush1.bf16.msra.mxu0 %v4763
        %4829 = vmatprep.subr.bf16.mxu0 %v4766
        %4830 = vmatpush1.bf16.msra.mxu0 %v4765
        %4831 = vmatprep.subr.bf16.mxu0 %v4768
        %4832 = vmatpush1.bf16.msra.mxu0 %v4767
        %4833 = vmatprep.subr.bf16.mxu0 %v4770
        %4834 = vmatpush1.bf16.msra.mxu0 %v4769
        %4835 = vmatprep.subr.bf16.mxu0 %v4772
        %4836 = vmatpush1.bf16.msra.mxu0 %v4771
        %4837 = vmatprep.subr.bf16.mxu0 %v4774
        %4838 = vmatpush1.bf16.msra.mxu0 %v4773
        %4839 = vmatprep.subr.bf16.mxu0 %v4776
        %4840 = vmatpush1.bf16.msra.mxu0 %v4775
        %4841 = vmatprep.subr.bf16.mxu0 %v4778
        %4842 = vmatpush1.bf16.msra.mxu0 %v4777
        %4843 = vmatprep.subr.bf16.mxu0 %v4780
        %4844 = vmatpush1.bf16.msra.mxu0 %v4779
        %4845 = vmatprep.subr.bf16.mxu0 %v4782
        %4846 = vmatpush1.bf16.msra.mxu0 %v4781
        %4847 = vmatprep.subr.bf16.mxu0 %v4784
        %4848 = vmatpush1.bf16.msra.mxu0 %v4783
        %4849 = vmatprep.subr.bf16.mxu0 %v4786
        %4850 = vmatpush1.bf16.msra.mxu0 %v4785
        %4851 = vmatprep.subr.bf16.mxu0 %v4788
        %4852 = vmatpush1.bf16.msra.mxu0 %v4787
        %4853 = vmatprep.subr.bf16.mxu0 %v4790
        %4854 = vmatpush1.bf16.msra.mxu0 %v4789
        %4855 = vmatprep.mubr.bf16.mxu0 %v4724
        %4856 = vmatmul.mubr.bf16.gmra.mrb[0].mxu0 %v4723
        %v4857 = vpop.f32.mrb[0].mxu0
        %v4858 = vadd.f32 0.0, %v4857
        %v4859 = vpop.f32.mrb[0].mxu0
        %v4860 = vadd.f32 0.0, %v4859
        %v4861 = vpop.f32.mrb[0].mxu0
        %v4862 = vpop.f32.mrb[0].mxu0
        %4863 = vdwg.mxu0
        %4864 = vmatprep.subr.bf16.mxu0 %v4792
        %4865 = vmatpush1.bf16.msra.mxu0 %v4791
        %4866 = vmatprep.subr.bf16.mxu0 %v4794
        %4867 = vmatpush1.bf16.msra.mxu0 %v4793
        %4868 = vmatprep.subr.bf16.mxu0 %v4796
        %4869 = vmatpush1.bf16.msra.mxu0 %v4795
        %4870 = vmatprep.subr.bf16.mxu0 %v4798
        %4871 = vmatpush1.bf16.msra.mxu0 %v4797
        %4872 = vmatprep.subr.bf16.mxu0 %v4800
        %4873 = vmatpush1.bf16.msra.mxu0 %v4799
        %4874 = vmatprep.subr.bf16.mxu0 %v4802
        %4875 = vmatpush1.bf16.msra.mxu0 %v4801
        %4876 = vmatprep.subr.bf16.mxu0 %v4804
        %4877 = vmatpush1.bf16.msra.mxu0 %v4803
        %4878 = vmatprep.subr.bf16.mxu0 %v4806
        %4879 = vmatpush1.bf16.msra.mxu0 %v4805
        %4880 = vmatprep.subr.bf16.mxu0 %v4808
        %4881 = vmatpush1.bf16.msra.mxu0 %v4807
        %4882 = vmatprep.subr.bf16.mxu0 %v4810
        %4883 = vmatpush1.bf16.msra.mxu0 %v4809
        %4884 = vmatprep.subr.bf16.mxu0 %v4812
        %4885 = vmatpush1.bf16.msra.mxu0 %v4811
        %4886 = vmatprep.subr.bf16.mxu0 %v4814
        %4887 = vmatpush1.bf16.msra.mxu0 %v4813
        %4888 = vmatprep.subr.bf16.mxu0 %v4816
        %4889 = vmatpush1.bf16.msra.mxu0 %v4815
        %4890 = vmatprep.subr.bf16.mxu0 %v4818
        %4891 = vmatpush1.bf16.msra.mxu0 %v4817
        %4892 = vmatprep.subr.bf16.mxu0 %v4820
        %4893 = vmatpush1.bf16.msra.mxu0 %v4819
        %4894 = vmatprep.subr.bf16.mxu0 %v4822
        %4895 = vmatpush1.bf16.msra.mxu0 %v4821
        %4896 = vmatprep.mubr.bf16.mxu0 %v4726
        %4897 = vmatmul.mubr.bf16.gmra.mrb[0].mxu0 %v4725
        %v4898 = vpop.f32.mrb[0].mxu0
        %v4899 = vadd.f32 %v4858, %v4898
        %v4900 = vpop.f32.mrb[0].mxu0
        %v4901 = vadd.f32 %v4860, %v4900
        %v4902 = vpop.f32.mrb[0].mxu0
        %v4903 = vpop.f32.mrb[0].mxu0
        %4904 = vdwg.mxu0
        %v4905 = vld [vmem:[%s440] sm:$0x3]
        %v4907 = vlaneseq
        %v4908 = vshrl.u32 %v4907, 7
        %v4909 = vsub.s32 0, %v4908
        %v4910 = vrot.slane %v4905, %v4909
        %v4911 = vlaneseq
        %v4912 = vshrl.u32 %v4911, 7
        %v4913 = vsub.s32 1, %v4912
        %v4914 = vrot.slane %v4905, %v4913
        %v4917 = vmul.f32 %v4899, %v4910
        %v4918 = vmul.f32 %v4901, %v4914
        %v4919 = vld [vmem:[%s445] sm:$0x3]
        %v4921 = vlaneseq
        %v4922 = vshrl.u32 %v4921, 7
        %v4923 = vsub.s32 0, %v4922
        %v4924 = vrot.slane %v4919, %v4923
        %v4925 = vlaneseq
        %v4926 = vshrl.u32 %v4925, 7
        %v4927 = vsub.s32 1, %v4926
        %v4928 = vrot.slane %v4919, %v4927
        %v4931 = vadd.f32 %v4917, %v4924
        %v4932 = vadd.f32 %v4918, %v4928
        %s4933 = sld [smem:[#allocation4]]
        %vm4934 = vcmp.gt.f32.partialorder %v4931, 0.0
        %vm4935 = vcmp.gt.f32.partialorder %v4932, 0.0
        %v4936 = vstv %s4933
        %v4937 = vmul.f32 %v4936, %v4931
        %v4938 = vmul.f32 %v4936, %v4932
        %v4939 = vsel %vm4934, %v4931, %v4937
        %v4940 = vsel %vm4935, %v4932, %v4938
        %v4941 = vld [vmem:[%s391] sm:$0xff]
        %v4942 = vld [vmem:[%s391 + $0x8] sm:$0xff]
        %v4943 = vld [vmem:[%s391 + $0x10] sm:$0xff]
        %v4944 = vld [vmem:[%s391 + $0x18] sm:$0xff]
        %v4945 = vld [vmem:[%s391 + $0x20] sm:$0xff]
        %v4946 = vld [vmem:[%s391 + $0x28] sm:$0xff]
        %v4947 = vld [vmem:[%s391 + $0x30] sm:$0xff]
        %v4948 = vld [vmem:[%s391 + $0x38] sm:$0xff]
        %v4949 = vld [vmem:[%s391 + $0x40] sm:$0xff]
        %v4950 = vld [vmem:[%s391 + $0x48] sm:$0xff]
        %v4951 = vld [vmem:[%s391 + $0x50] sm:$0xff]
        %v4952 = vld [vmem:[%s391 + $0x58] sm:$0xff]
        %v4953 = vld [vmem:[%s391 + $0x60] sm:$0xff]
        %v4954 = vld [vmem:[%s391 + $0x68] sm:$0xff]
        %v4955 = vld [vmem:[%s391 + $0x70] sm:$0xff]
        %v4956 = vld [vmem:[%s391 + $0x78] sm:$0xff]
        %v4957 = vunpack.c.l.s8.bf16 %v4941
        %v4958 = vunpack.c.l.s8.bf16 %v4942
        %v4959 = vunpack.c.h.s8.bf16 %v4941
        %v4960 = vunpack.c.h.s8.bf16 %v4942
        %v4961 = vunpack.c.l.s8.bf16 %v4943
        %v4962 = vunpack.c.l.s8.bf16 %v4944
        %v4963 = vunpack.c.h.s8.bf16 %v4943
        %v4964 = vunpack.c.h.s8.bf16 %v4944
        %v4965 = vunpack.c.l.s8.bf16 %v4945
        %v4966 = vunpack.c.l.s8.bf16 %v4946
        %v4967 = vunpack.c.h.s8.bf16 %v4945
        %v4968 = vunpack.c.h.s8.bf16 %v4946
        %v4969 = vunpack.c.l.s8.bf16 %v4947
        %v4970 = vunpack.c.l.s8.bf16 %v4948
        %v4971 = vunpack.c.h.s8.bf16 %v4947
        %v4972 = vunpack.c.h.s8.bf16 %v4948
        %v4973 = vunpack.c.l.s8.bf16 %v4949
        %v4974 = vunpack.c.l.s8.bf16 %v4950
        %v4975 = vunpack.c.h.s8.bf16 %v4949
        %v4976 = vunpack.c.h.s8.bf16 %v4950
        %v4977 = vunpack.c.l.s8.bf16 %v4951
        %v4978 = vunpack.c.l.s8.bf16 %v4952
        %v4979 = vunpack.c.h.s8.bf16 %v4951
        %v4980 = vunpack.c.h.s8.bf16 %v4952
        %v4981 = vunpack.c.l.s8.bf16 %v4953
        %v4982 = vunpack.c.l.s8.bf16 %v4954
        %v4983 = vunpack.c.h.s8.bf16 %v4953
        %v4984 = vunpack.c.h.s8.bf16 %v4954
        %v4985 = vunpack.c.l.s8.bf16 %v4955
        %v4986 = vunpack.c.l.s8.bf16 %v4956
        %v4987 = vunpack.c.h.s8.bf16 %v4955
        %v4988 = vunpack.c.h.s8.bf16 %v4956
        %v4989 = vld [vmem:[#allocation3] sm:$0xf]
        %v4990 = vpack.c.bf16 %v4939, %v4939
        %v4991 = vpack.c.bf16 %v4940, %v4940
        %4992 = vmatprep.subr.bf16.mxu0 %v4958
        %4993 = vmatpush1.bf16.msra.mxu0 %v4957
        %4994 = vmatprep.subr.bf16.mxu0 %v4960
        %4995 = vmatpush1.bf16.msra.mxu0 %v4959
        %4996 = vmatprep.subr.bf16.mxu0 %v4962
        %4997 = vmatpush1.bf16.msra.mxu0 %v4961
        %4998 = vmatprep.subr.bf16.mxu0 %v4964
        %4999 = vmatpush1.bf16.msra.mxu0 %v4963
        %5000 = vmatprep.subr.bf16.mxu0 %v4966
        %5001 = vmatpush1.bf16.msra.mxu0 %v4965
        %5002 = vmatprep.subr.bf16.mxu0 %v4968
        %5003 = vmatpush1.bf16.msra.mxu0 %v4967
        %5004 = vmatprep.subr.bf16.mxu0 %v4970
        %5005 = vmatpush1.bf16.msra.mxu0 %v4969
        %5006 = vmatprep.subr.bf16.mxu0 %v4972
        %5007 = vmatpush1.bf16.msra.mxu0 %v4971
        %5008 = vmatprep.subr.bf16.mxu0 %v4974
        %5009 = vmatpush1.bf16.msra.mxu0 %v4973
        %5010 = vmatprep.subr.bf16.mxu0 %v4976
        %5011 = vmatpush1.bf16.msra.mxu0 %v4975
        %5012 = vmatprep.subr.bf16.mxu0 %v4978
        %5013 = vmatpush1.bf16.msra.mxu0 %v4977
        %5014 = vmatprep.subr.bf16.mxu0 %v4980
        %5015 = vmatpush1.bf16.msra.mxu0 %v4979
        %5016 = vmatprep.subr.bf16.mxu0 %v4982
        %5017 = vmatpush1.bf16.msra.mxu0 %v4981
        %5018 = vmatprep.subr.bf16.mxu0 %v4984
        %5019 = vmatpush1.bf16.msra.mxu0 %v4983
        %5020 = vmatprep.subr.bf16.mxu0 %v4986
        %5021 = vmatpush1.bf16.msra.mxu0 %v4985
        %5022 = vmatprep.subr.bf16.mxu0 %v4988
        %5023 = vmatpush1.bf16.msra.mxu0 %v4987
        %5024 = vmatprep.mubr.bf16.mxu0 %v4991
        %5025 = vmatmul.mubr.bf16.gmra.mrb[0].mxu0 %v4990
        %v5026 = vpop.f32.mrb[0].mxu0
        %v5027 = vadd.f32 0.0, %v5026
        %v5028 = vpop.f32.mrb[0].mxu0
        %v5029 = vadd.f32 0.0, %v5028
        %v5030 = vpop.f32.mrb[0].mxu0
        %v5031 = vpop.f32.mrb[0].mxu0
        %5032 = vdwg.mxu0
        %v5035 = vcombine.low %v5027, %v5029
        %v5037 = vunpack.c.l.s4 1983009808
        %v5038 = vunpack.c.0.s8 %v5037
        %v5039 = vlaneseq
        %v5040 = vshrl.u32 %v5039, 7
        %v5041 = vsub.s32 %v5038, %v5040
        %v5042 = vrot.slane %v5035, %v5041
        %v5044 = vadd.f32 %v4989, %v5042
        %5045 = vst [vmem:[#allocation3] sm:$0xf] %v5044
        %p5046 = scmp.eq.s32.totalorder %s29, 3
        // Predicated region
        $region73: #{face_verification_forward.1} parent=59 // pred_check
          %p5047 = pneg %p5046
        $region74: #{face_verification_forward.1} parent=59 // pred_check_branch
          %5049 = sbr.rel (%p5047) target = $region76
        $region75: #{face_verification_forward.1} parent=59 // pred_region
          %v5050 = vld [vmem:[#allocation3] sm:$0xf]
          %v5051 = vld [vmem:[%s8] sm:$0x3]
          %v5053 = vlaneseq
          %v5054 = vshrl.u32 %v5053, 7
          %v5055 = vsub.s32 0, %v5054
          %v5056 = vrot.slane %v5051, %v5055
          %v5057 = vlaneseq
          %v5058 = vshrl.u32 %v5057, 7
          %v5059 = vsub.s32 1, %v5058
          %v5060 = vrot.slane %v5051, %v5059
          %v5061 = vcombine.low %v5056, %v5060
          %v5063 = vunpack.c.l.s4 1983009808
          %v5064 = vunpack.c.0.s8 %v5063
          %v5065 = vlaneseq
          %v5066 = vshrl.u32 %v5065, 7
          %v5067 = vsub.s32 %v5064, %v5066
          %v5068 = vrot.slane %v5061, %v5067
          %v5070 = vmul.f32 %v5050, %v5068
          %v5071 = vld [vmem:[%s9] sm:$0x3]
          %v5073 = vlaneseq
          %v5074 = vshrl.u32 %v5073, 7
          %v5075 = vsub.s32 0, %v5074
          %v5076 = vrot.slane %v5071, %v5075
          %v5077 = vlaneseq
          %v5078 = vshrl.u32 %v5077, 7
          %v5079 = vsub.s32 1, %v5078
          %v5080 = vrot.slane %v5071, %v5079
          %v5081 = vcombine.low %v5076, %v5080
          %v5083 = vunpack.c.l.s4 1983009808
          %v5084 = vunpack.c.0.s8 %v5083
          %v5085 = vlaneseq
          %v5086 = vshrl.u32 %v5085, 7
          %v5087 = vsub.s32 %v5084, %v5086
          %v5088 = vrot.slane %v5081, %v5087
          %v5090 = vadd.f32 %v5070, %v5088
          %v5091 = vmul.f32 %v5090, %v5090
          %v5094 = vunpack.c.l.s4 1983009808
          %v5095 = vunpack.c.0.s8 %v5094
          %v5096 = vlaneseq
          %v5097 = vshrl.u32 %v5096, 7
          %v5098 = vsub.s32 %v5095, %v5097
          %v5099 = vrot.slane %v5091, %v5098
          %v5100 = vcombine.high %v5099, %v5099
          %vm5103 = vcmask 1041408
          %v5104 = vsel %vm5103, %v5099, 0.0
          %v5105 = vsel %vm5103, %v5100, 0.0
          %v5106 = vadd.f32 %v5104, %v5105
          %5107 = vadd.xlane.f32.xlu0 %v5106
          %v5108 = vpop.xlane.xlu0 %5107
          %v5109 = vmax.f32 %v5108, 1e-24
          %v5110 = vrsqrt.pop %v5109
          %v5113 = vunpack.c.l.s4 269488144
          %v5114 = vunpack.c.0.s8 %v5113
          %v5115 = vlaneseq
          %v5116 = vshrl.u32 %v5115, 7
          %v5117 = vsub.s32 %v5114, %v5116
          %v5118 = vrot.slane %v5110, %v5117
          %v5120 = vmul.f32 %v5090, %v5118
          %5121 = vst [vmem:[#allocation10] sm:$0xf] %v5120
        $region76: #{face_verification_forward.1} parent=59 // pred_fallthru
          _
        // Predicated region
        $region77: #{face_verification_forward.1} parent=59 // pred_check
          %p5122 = pneg %p272
        $region78: #{face_verification_forward.1} parent=59 // pred_check_branch
          %5124 = sbr.rel (%p5122) target = $region80
        $region79: #{face_verification_forward.1} parent=59 // pred_region
          %s5126 = ssub.s32 64, 64
          %5127 = vsyncadd [#allocation7], %s5126
          %s5129 = sshll.u32 [#allocation10], 4
          %s5130 = int_to_ptr.vmem [resolvable:$true] %s5129
          %5132 = dma.vmem_to_hbm [thread:$0]  %s5130, 64, %s10, [#allocation7]
        $region80: #{face_verification_forward.1} parent=59 // pred_fallthru
          _
        // Predicated region
        $region81: #{face_verification_forward.1} parent=59 // pred_check
          %p5133 = pneg %p272
        $region82: #{face_verification_forward.1} parent=59 // pred_check_branch
          %5135 = sbr.rel (%p5133) target = $region84
        $region83: #{face_verification_forward.1} parent=59 // pred_region
          %5136 = dma.done [#allocation7], 64
        $region84: #{face_verification_forward.1} parent=59 // pred_fallthru
          _
      $region60: #{face_verification_forward.1} parent=5 // pred_fallthru
        _
      %p5137 = scmp.le.s32.totalorder 2, %s24
      // Predicated region
      $region85: #{face_verification_forward.1} parent=5 // pred_check
        %p5138 = pneg %p5137
      $region86: #{face_verification_forward.1} parent=5 // pred_check_branch
        %5140 = sbr.rel (%p5138) target = $region88
      $region87: #{face_verification_forward.1} parent=5 // pred_region
        %s5141 = ssub.s32 %s24, 2
      $region88: #{face_verification_forward.1} parent=5 // pred_fallthru
        _
    $region6: #{face_verification_forward.1} parent=1 // loop_footer
      %s28 = sadd.s32 1, %s24
    $region7: #{face_verification_forward.1} parent=1 // loop_footer_branch
      %23 = sbr.rel target = $region3
    $region8: #{face_verification_forward.1} parent=1 // loop_exit
      _
    %5142 = vsyncpa [#allocation6], 1
    %s5143 = scalar_lea.sflag [#allocation6], 1
    %5144 = vsyncpa %s5143, 1
    %5145 = vsyncpa [#allocation9], 1
    %s5146 = scalar_lea.sflag [#allocation9], 1
    %5147 = vsyncpa %s5146, 1
    %5148 = vsyncpa [#allocation7], 1
    %s5149 = scalar_lea.sflag [#allocation7], 1
    %5150 = vsyncpa %s5149, 1

</llo_original>
